<compile_context>
chip_gen: v5e
topology: v5e:2x2
jax: 0.10.0
libtpu: 0.0.40
codegen_flags: <defaults>
</compile_context>

<pallas_src>
import math

import jax
import jax.numpy as jnp
from jax.experimental import pallas as pl
from jax.experimental.pallas import tpu as pltpu

DECOMP = 24   # series-decomposition moving-average window
WIN = 3       # trend Conv1D kernel size


# ---------------------------------------------------------------------------
# host-side (trace-time) constants / parameter packing
# ---------------------------------------------------------------------------
def _avg_matrix(L, K):
    """(L, L) operator A s.t. A @ x == avg_pool1d(x, K, stride=1, SAME,
    zero pad, exclusive=False) along the sequence axis."""
    pad_left = (K - 1) // 2
    i_idx = jnp.arange(L, dtype=jnp.int32)[:, None]   # output position
    t_idx = jnp.arange(L, dtype=jnp.int32)[None, :]   # input position
    lo = i_idx - pad_left
    hi = lo + (K - 1)
    mask = (t_idx >= lo) & (t_idx <= hi)
    return jnp.where(mask, 1.0 / K, 0.0).astype(jnp.float32)


def _gelu_tanh(x):
    # TODO(synk): Paddle F.gelu defaults to the exact erf form; the tanh
    # approximation is used so the transcendental maps onto the TPU EUP.
    c = math.sqrt(2.0 / math.pi)
    return 0.5 * x * (1.0 + jnp.tanh(c * (x + 0.044715 * x * x * x)))


def _stack_layer_params(layer_params, d_model, nhead, capacity):
    """Stack per-layer weights along a leading layer axis and re-arrange the
    attention projections into head-major (nhead, D, hd) slabs (host side)."""
    hd = d_model // nhead
    nl = len(layer_params)
    stk = lambda name: jnp.stack([p[name] for p in layer_params], axis=0)

    def head_major_in(w):    # (NL, D, D) -> (NL, nhead, D, hd)
        return w.reshape(nl, d_model, nhead, hd).transpose(0, 2, 1, 3)

    wq = head_major_in(stk("wq"))
    wk = head_major_in(stk("wk"))
    wv = head_major_in(stk("wv"))
    bq = stk("bq").reshape(nl, nhead, 1, hd)
    bk = stk("bk").reshape(nl, nhead, 1, hd)
    bv = stk("bv").reshape(nl, nhead, 1, hd)
    wo = stk("wo").reshape(nl, nhead, hd, d_model)     # per-head output proj
    bo = stk("bo").reshape(nl, 1, d_model)
    w1 = stk("w1")
    b1 = stk("b1").reshape(nl, 1, -1)
    w2 = stk("w2")
    b2 = stk("b2").reshape(nl, 1, d_model)
    wt = stk("wt").reshape(nl, WIN * d_model, capacity)   # conv as one matmul
    bt = stk("bt").reshape(nl, 1, capacity)
    return (wq, bq, wk, bk, wv, bv, wo, bo, w1, b1, w2, b2, wt, bt)


# ---------------------------------------------------------------------------
# fused decoder kernel (all layers, one batch element per grid step)
# ---------------------------------------------------------------------------
def _decoder_kernel(
    season_ref, trend_ref, enc_ref, avg_ref,
    wq_ref, bq_ref, wk_ref, bk_ref, wv_ref, bv_ref, wo_ref, bo_ref,
    w1_ref, b1_ref, w2_ref, b2_ref, wt_ref, bt_ref,
    season_out_ref, trend_out_ref,
):
    n_layers, nhead, d_model, hd = wq_ref.shape
    scale = 1.0 / math.sqrt(hd)

    x = season_ref[0].astype(jnp.float32)        # (L, D)  season, updated per layer
    trend = trend_ref[0].astype(jnp.float32)     # (L, C)  accumulated in-kernel
    mem = enc_ref[0].astype(jnp.float32)         # (Lm, D) encoder memory
    A = avg_ref[...]                             # (L, L)  moving-average operator
    L = x.shape[0]
    Lm = mem.shape[0]

    # hoisted broadcasts / constants (JAX does not CSE broadcast_in_dim)
    mem_h = jnp.broadcast_to(mem[None], (nhead, Lm, d_model))
    zero_row = jnp.zeros((1, d_model), jnp.float32)

    def mha(q_h_in, kv_h_in, wq, bq, wk, bk, wv, bv, wo, bo):
        """paddle.nn.MultiHeadAttention (no mask); heads batched on axis 0."""
        qh = jnp.einsum("hld,hde->hle", q_h_in, wq,
                        preferred_element_type=jnp.float32) + bq
        kh = jnp.einsum("hld,hde->hle", kv_h_in, wk,
                        preferred_element_type=jnp.float32) + bk
        vh = jnp.einsum("hld,hde->hle", kv_h_in, wv,
                        preferred_element_type=jnp.float32) + bv
        s = jnp.einsum("hqe,hke->hqk", qh * scale, kh,
                       preferred_element_type=jnp.float32)
        s = s - jnp.max(s, axis=-1, keepdims=True)
        p = jnp.exp(s)
        p = p * pl.reciprocal(jnp.sum(p, axis=-1, keepdims=True), approx=True)
        oh = jnp.einsum("hqk,hke->hqe", p, vh,
                        preferred_element_type=jnp.float32)
        # concat(heads) @ Wo  ==  sum_h  oh[h] @ Wo[h]
        o = jnp.einsum("hqe,hed->hqd", oh, wo,
                       preferred_element_type=jnp.float32)
        return jnp.sum(o, axis=0) + bo

    def decomp(z):
        mean = jnp.dot(A, z, preferred_element_type=jnp.float32)
        return z - mean, mean

    for l in range(n_layers):          # small static trip-count -> unrolled
        wq = wq_ref[l]; bq = bq_ref[l]
        wk = wk_ref[l]; bk = bk_ref[l]
        wv = wv_ref[l]; bv = bv_ref[l]
        wo = wo_ref[l]; bo = bo_ref[l]
        w1 = w1_ref[l]; b1 = b1_ref[l]
        w2 = w2_ref[l]; b2 = b2_ref[l]
        wt = wt_ref[l]; bt = bt_ref[l]

        # --- self attention (dropout == identity in eval) -------------------
        x_h = jnp.broadcast_to(x[None], (nhead, L, d_model))
        s1 = x + mha(x_h, x_h, wq, bq, wk, bk, wv, bv, wo, bo)
        s1, trend1 = decomp(s1)

        # --- "cross" attention: reference forward re-uses self_attn weights -
        s1_h = jnp.broadcast_to(s1[None], (nhead, L, d_model))
        s2 = s1 + mha(s1_h, mem_h, wq, bq, wk, bk, wv, bv, wo, bo)
        s2, trend2 = decomp(s2)

        # --- feed-forward ----------------------------------------------------
        h = _gelu_tanh(jnp.dot(s2, w1, preferred_element_type=jnp.float32) + b1)
        s3 = s2 + jnp.dot(h, w2, preferred_element_type=jnp.float32) + b2
        s3, trend3 = decomp(s3)

        # --- trend projection: Conv1D(D -> capacity, k=3, SAME, NLC) ---------
        rt = trend1 + trend2 + trend3                             # (L, D)
        r_m1 = jnp.concatenate([zero_row, rt[:-1, :]], axis=0)    # x[i-1]
        r_p1 = jnp.concatenate([rt[1:, :], zero_row], axis=0)     # x[i+1]
        cat = jnp.concatenate([r_m1, rt, r_p1], axis=1)           # (L, WIN*D)
        trend = trend + jnp.dot(cat, wt,
                                preferred_element_type=jnp.float32) + bt

        x = s3

    season_out_ref[0] = x.astype(season_out_ref.dtype)
    trend_out_ref[0] = trend.astype(trend_out_ref.dtype)


# ---------------------------------------------------------------------------
# wrapper: one pallas_call for the whole decoder stack
# ---------------------------------------------------------------------------
def decoder_forward(season, trend, enc_output, layer_params, *, nhead, capacity):
    B, L, D = season.shape
    Lm = enc_output.shape[1]
    C = trend.shape[2]

    packed = _stack_layer_params(layer_params, D, nhead, C)
    avg = _avg_matrix(L, DECOMP)

    def batch_spec(shape):
        return pl.BlockSpec(shape, lambda b: (b, 0, 0))

    def const_spec(shape):
        r = len(shape)
        return pl.BlockSpec(shape, lambda b, _r=r: (0,) * _r)

    in_specs = [
        batch_spec((1, L, D)),        # season
        batch_spec((1, L, C)),        # trend
        batch_spec((1, Lm, D)),       # enc_output
        const_spec((L, L)),           # moving-average operator
    ] + [const_spec(w.shape) for w in packed]

    out_specs = (batch_spec((1, L, D)), batch_spec((1, L, C)))
    out_shape = (jax.ShapeDtypeStruct((B, L, D), jnp.float32),
                 jax.ShapeDtypeStruct((B, L, C), jnp.float32))

    return pl.pallas_call(
        _decoder_kernel,
        out_shape=out_shape,
        grid=(B,),
        in_specs=in_specs,
        out_specs=out_specs,
        compiler_params=pltpu.CompilerParams(
            dimension_semantics=("parallel",)),
    )(season, trend, enc_output, avg, *packed)


def make_layer_params(key, d_model, dff, capacity):
    ks = jax.random.split(key, 8)
    w = lambda k, shape: (0.05 * jax.random.normal(k, shape, jnp.float32))
    return dict(
        wq=w(ks[0], (d_model, d_model)), bq=jnp.zeros((1, d_model), jnp.float32),
        wk=w(ks[1], (d_model, d_model)), bk=jnp.zeros((1, d_model), jnp.float32),
        wv=w(ks[2], (d_model, d_model)), bv=jnp.zeros((1, d_model), jnp.float32),
        wo=w(ks[3], (d_model, d_model)), bo=jnp.zeros((1, d_model), jnp.float32),
        w1=w(ks[4], (d_model, dff)),     b1=jnp.zeros((1, dff), jnp.float32),
        w2=w(ks[5], (dff, d_model)),     b2=jnp.zeros((1, d_model), jnp.float32),
        wt=w(ks[6], (WIN, d_model, capacity)),
        bt=0.05 * jax.random.normal(ks[7], (1, capacity), jnp.float32),
    )


if __name__ == "__main__":
    # Small config consistent with the module: hidden_dims=32, nhead=4,
    # decoder_layers=2, capacity (trends_out)=16, output_len=8, input_len=8.
    B, L, Lenc = 2, 8, 8
    d_model, nhead, capacity, n_layers = 32, 4, 16, 2

    key = jax.random.PRNGKey(0)
    k_s, k_t, k_e, k_p = jax.random.split(key, 4)
    season = jax.random.normal(k_s, (B, L, d_model), jnp.float32)
    trend = jax.random.normal(k_t, (B, L, capacity), jnp.float32)
    enc_output = jax.random.normal(k_e, (B, Lenc, d_model), jnp.float32)

    layer_params = [
        make_layer_params(k, d_model, 2 * d_model, capacity)
        for k in jax.random.split(k_p, n_layers)
    ]

    season_out, trend_out = decoder_forward(
        season, trend, enc_output, layer_params, nhead=nhead, capacity=capacity)
    jax.block_until_ready((season_out, trend_out))
    assert season_out.shape == (B, L, d_model)
    assert trend_out.shape == (B, L, capacity)
    print("KERNEL_OK")
</pallas_src>

<mosaic_0001>
module attributes {stable_mosaic.version = 11 : i64} {
  func.func @_decoder_kernel(%arg0: i32, %arg1: memref<1x8x32xf32, #tpu.memory_space<vmem>>, %arg2: memref<1x8x16xf32, #tpu.memory_space<vmem>>, %arg3: memref<1x8x32xf32, #tpu.memory_space<vmem>>, %arg4: memref<8x8xf32, #tpu.memory_space<vmem>>, %arg5: memref<2x4x32x8xf32, #tpu.memory_space<vmem>>, %arg6: memref<2x4x1x8xf32, #tpu.memory_space<vmem>>, %arg7: memref<2x4x32x8xf32, #tpu.memory_space<vmem>>, %arg8: memref<2x4x1x8xf32, #tpu.memory_space<vmem>>, %arg9: memref<2x4x32x8xf32, #tpu.memory_space<vmem>>, %arg10: memref<2x4x1x8xf32, #tpu.memory_space<vmem>>, %arg11: memref<2x4x8x32xf32, #tpu.memory_space<vmem>>, %arg12: memref<2x1x32xf32, #tpu.memory_space<vmem>>, %arg13: memref<2x32x64xf32, #tpu.memory_space<vmem>>, %arg14: memref<2x1x64xf32, #tpu.memory_space<vmem>>, %arg15: memref<2x64x32xf32, #tpu.memory_space<vmem>>, %arg16: memref<2x1x32xf32, #tpu.memory_space<vmem>>, %arg17: memref<2x96x16xf32, #tpu.memory_space<vmem>>, %arg18: memref<2x1x16xf32, #tpu.memory_space<vmem>>, %arg19: memref<1x8x32xf32, #tpu.memory_space<vmem>>, %arg20: memref<1x8x16xf32, #tpu.memory_space<vmem>>) attributes {dimension_semantics = [#tpu.dimension_semantics<parallel>], iteration_bounds = array<i64: 2>, scalar_prefetch = 0 : i64, scratch_operands = 0 : i64, tpu.core_type = #tpu.core_type<tc>, window_params = [{transform_indices = @transform_0, window_bounds = array<i64: 1, 8, 32>}, {transform_indices = @transform_1, window_bounds = array<i64: 1, 8, 16>}, {transform_indices = @transform_2, window_bounds = array<i64: 1, 8, 32>}, {pipeline_mode = #tpu.pipeline_mode<synchronous>, transform_indices = @transform_3, window_bounds = array<i64: 8, 8>}, {pipeline_mode = #tpu.pipeline_mode<synchronous>, transform_indices = @transform_4, window_bounds = array<i64: 2, 4, 32, 8>}, {pipeline_mode = #tpu.pipeline_mode<synchronous>, transform_indices = @transform_5, window_bounds = array<i64: 2, 4, 1, 8>}, {pipeline_mode = #tpu.pipeline_mode<synchronous>, transform_indices = @transform_6, window_bounds = array<i64: 2, 4, 32, 8>}, {pipeline_mode = #tpu.pipeline_mode<synchronous>, transform_indices = @transform_7, window_bounds = array<i64: 2, 4, 1, 8>}, {pipeline_mode = #tpu.pipeline_mode<synchronous>, transform_indices = @transform_8, window_bounds = array<i64: 2, 4, 32, 8>}, {pipeline_mode = #tpu.pipeline_mode<synchronous>, transform_indices = @transform_9, window_bounds = array<i64: 2, 4, 1, 8>}, {pipeline_mode = #tpu.pipeline_mode<synchronous>, transform_indices = @transform_10, window_bounds = array<i64: 2, 4, 8, 32>}, {pipeline_mode = #tpu.pipeline_mode<synchronous>, transform_indices = @transform_11, window_bounds = array<i64: 2, 1, 32>}, {pipeline_mode = #tpu.pipeline_mode<synchronous>, transform_indices = @transform_12, window_bounds = array<i64: 2, 32, 64>}, {pipeline_mode = #tpu.pipeline_mode<synchronous>, transform_indices = @transform_13, window_bounds = array<i64: 2, 1, 64>}, {pipeline_mode = #tpu.pipeline_mode<synchronous>, transform_indices = @transform_14, window_bounds = array<i64: 2, 64, 32>}, {pipeline_mode = #tpu.pipeline_mode<synchronous>, transform_indices = @transform_15, window_bounds = array<i64: 2, 1, 32>}, {pipeline_mode = #tpu.pipeline_mode<synchronous>, transform_indices = @transform_16, window_bounds = array<i64: 2, 96, 16>}, {pipeline_mode = #tpu.pipeline_mode<synchronous>, transform_indices = @transform_17, window_bounds = array<i64: 2, 1, 16>}, {transform_indices = @transform_18, window_bounds = array<i64: 1, 8, 32>}, {transform_indices = @transform_19, window_bounds = array<i64: 1, 8, 16>}]} {
    %c0 = arith.constant 0 : index
    %c0_0 = arith.constant 0 : index
    %c0_1 = arith.constant 0 : index
    %0 = vector.load %arg1[%c0, %c0_0, %c0_1] : memref<1x8x32xf32, #tpu.memory_space<vmem>>, vector<1x8x32xf32>
    %1 = vector.shape_cast %0 : vector<1x8x32xf32> to vector<8x32xf32>
    %c0_2 = arith.constant 0 : index
    %c0_3 = arith.constant 0 : index
    %c0_4 = arith.constant 0 : index
    %2 = vector.load %arg2[%c0_2, %c0_3, %c0_4] : memref<1x8x16xf32, #tpu.memory_space<vmem>>, vector<1x8x16xf32>
    %3 = vector.shape_cast %2 : vector<1x8x16xf32> to vector<8x16xf32>
    %c0_5 = arith.constant 0 : index
    %c0_6 = arith.constant 0 : index
    %c0_7 = arith.constant 0 : index
    %4 = vector.load %arg3[%c0_5, %c0_6, %c0_7] : memref<1x8x32xf32, #tpu.memory_space<vmem>>, vector<1x8x32xf32>
    %5 = vector.shape_cast %4 : vector<1x8x32xf32> to vector<8x32xf32>
    %c0_8 = arith.constant 0 : index
    %c0_9 = arith.constant 0 : index
    %6 = vector.load %arg4[%c0_8, %c0_9] : memref<8x8xf32, #tpu.memory_space<vmem>>, vector<8x8xf32>
    %7 = vector.shape_cast %5 : vector<8x32xf32> to vector<1x8x32xf32>
    %8 = vector.shape_cast %7 : vector<1x8x32xf32> to vector<1x8x32xf32>
    %9 = vector.broadcast %8 : vector<1x8x32xf32> to vector<4x8x32xf32>
    %cst = arith.constant 0.000000e+00 : f32
    %10 = vector.broadcast %cst : f32 to vector<1x32xf32>
    %c0_10 = arith.constant 0 : index
    %c0_11 = arith.constant 0 : index
    %c0_12 = arith.constant 0 : index
    %c0_13 = arith.constant 0 : index
    %11 = vector.load %arg5[%c0_10, %c0_11, %c0_12, %c0_13] : memref<2x4x32x8xf32, #tpu.memory_space<vmem>>, vector<1x4x32x8xf32>
    %12 = vector.shape_cast %11 : vector<1x4x32x8xf32> to vector<4x32x8xf32>
    %c0_14 = arith.constant 0 : index
    %c0_15 = arith.constant 0 : index
    %c0_16 = arith.constant 0 : index
    %c0_17 = arith.constant 0 : index
    %13 = vector.load %arg6[%c0_14, %c0_15, %c0_16, %c0_17] : memref<2x4x1x8xf32, #tpu.memory_space<vmem>>, vector<1x4x1x8xf32>
    %14 = vector.shape_cast %13 : vector<1x4x1x8xf32> to vector<4x1x8xf32>
    %c0_18 = arith.constant 0 : index
    %c0_19 = arith.constant 0 : index
    %c0_20 = arith.constant 0 : index
    %c0_21 = arith.constant 0 : index
    %15 = vector.load %arg7[%c0_18, %c0_19, %c0_20, %c0_21] : memref<2x4x32x8xf32, #tpu.memory_space<vmem>>, vector<1x4x32x8xf32>
    %16 = vector.shape_cast %15 : vector<1x4x32x8xf32> to vector<4x32x8xf32>
    %c0_22 = arith.constant 0 : index
    %c0_23 = arith.constant 0 : index
    %c0_24 = arith.constant 0 : index
    %c0_25 = arith.constant 0 : index
    %17 = vector.load %arg8[%c0_22, %c0_23, %c0_24, %c0_25] : memref<2x4x1x8xf32, #tpu.memory_space<vmem>>, vector<1x4x1x8xf32>
    %18 = vector.shape_cast %17 : vector<1x4x1x8xf32> to vector<4x1x8xf32>
    %c0_26 = arith.constant 0 : index
    %c0_27 = arith.constant 0 : index
    %c0_28 = arith.constant 0 : index
    %c0_29 = arith.constant 0 : index
    %19 = vector.load %arg9[%c0_26, %c0_27, %c0_28, %c0_29] : memref<2x4x32x8xf32, #tpu.memory_space<vmem>>, vector<1x4x32x8xf32>
    %20 = vector.shape_cast %19 : vector<1x4x32x8xf32> to vector<4x32x8xf32>
    %c0_30 = arith.constant 0 : index
    %c0_31 = arith.constant 0 : index
    %c0_32 = arith.constant 0 : index
    %c0_33 = arith.constant 0 : index
    %21 = vector.load %arg10[%c0_30, %c0_31, %c0_32, %c0_33] : memref<2x4x1x8xf32, #tpu.memory_space<vmem>>, vector<1x4x1x8xf32>
    %22 = vector.shape_cast %21 : vector<1x4x1x8xf32> to vector<4x1x8xf32>
    %c0_34 = arith.constant 0 : index
    %c0_35 = arith.constant 0 : index
    %c0_36 = arith.constant 0 : index
    %c0_37 = arith.constant 0 : index
    %23 = vector.load %arg11[%c0_34, %c0_35, %c0_36, %c0_37] : memref<2x4x8x32xf32, #tpu.memory_space<vmem>>, vector<1x4x8x32xf32>
    %24 = vector.shape_cast %23 : vector<1x4x8x32xf32> to vector<4x8x32xf32>
    %c0_38 = arith.constant 0 : index
    %c0_39 = arith.constant 0 : index
    %c0_40 = arith.constant 0 : index
    %25 = vector.load %arg12[%c0_38, %c0_39, %c0_40] : memref<2x1x32xf32, #tpu.memory_space<vmem>>, vector<1x1x32xf32>
    %26 = vector.shape_cast %25 : vector<1x1x32xf32> to vector<1x32xf32>
    %c0_41 = arith.constant 0 : index
    %c0_42 = arith.constant 0 : index
    %c0_43 = arith.constant 0 : index
    %27 = vector.load %arg13[%c0_41, %c0_42, %c0_43] : memref<2x32x64xf32, #tpu.memory_space<vmem>>, vector<1x32x64xf32>
    %28 = vector.shape_cast %27 : vector<1x32x64xf32> to vector<32x64xf32>
    %c0_44 = arith.constant 0 : index
    %c0_45 = arith.constant 0 : index
    %c0_46 = arith.constant 0 : index
    %29 = vector.load %arg14[%c0_44, %c0_45, %c0_46] : memref<2x1x64xf32, #tpu.memory_space<vmem>>, vector<1x1x64xf32>
    %30 = vector.shape_cast %29 : vector<1x1x64xf32> to vector<1x64xf32>
    %c0_47 = arith.constant 0 : index
    %c0_48 = arith.constant 0 : index
    %c0_49 = arith.constant 0 : index
    %31 = vector.load %arg15[%c0_47, %c0_48, %c0_49] : memref<2x64x32xf32, #tpu.memory_space<vmem>>, vector<1x64x32xf32>
    %32 = vector.shape_cast %31 : vector<1x64x32xf32> to vector<64x32xf32>
    %c0_50 = arith.constant 0 : index
    %c0_51 = arith.constant 0 : index
    %c0_52 = arith.constant 0 : index
    %33 = vector.load %arg16[%c0_50, %c0_51, %c0_52] : memref<2x1x32xf32, #tpu.memory_space<vmem>>, vector<1x1x32xf32>
    %34 = vector.shape_cast %33 : vector<1x1x32xf32> to vector<1x32xf32>
    %c0_53 = arith.constant 0 : index
    %c0_54 = arith.constant 0 : index
    %c0_55 = arith.constant 0 : index
    %35 = vector.load %arg17[%c0_53, %c0_54, %c0_55] : memref<2x96x16xf32, #tpu.memory_space<vmem>>, vector<1x96x16xf32>
    %36 = vector.shape_cast %35 : vector<1x96x16xf32> to vector<96x16xf32>
    %c0_56 = arith.constant 0 : index
    %c0_57 = arith.constant 0 : index
    %c0_58 = arith.constant 0 : index
    %37 = vector.load %arg18[%c0_56, %c0_57, %c0_58] : memref<2x1x16xf32, #tpu.memory_space<vmem>>, vector<1x1x16xf32>
    %38 = vector.shape_cast %37 : vector<1x1x16xf32> to vector<1x16xf32>
    %39 = vector.shape_cast %1 : vector<8x32xf32> to vector<1x8x32xf32>
    %40 = vector.shape_cast %39 : vector<1x8x32xf32> to vector<1x8x32xf32>
    %41 = vector.broadcast %40 : vector<1x8x32xf32> to vector<4x8x32xf32>
    "tpu.trace_start"() <{level = 10 : i32, message = "hld,hde->hle"}> : () -> ()
    %cst_59 = arith.constant dense<0.000000e+00> : vector<4x8x8xf32>
    %42 = tpu.matmul %41, %12, %cst_59 {dimension_numbers = #tpu.dot_dimension_numbers<[2], [1], [1], [2], [0, 0, 0, 1, 1, 2], [0], [0]>} : vector<4x8x32xf32>, vector<4x32x8xf32>, vector<4x8x8xf32> -> vector<4x8x8xf32>
    "tpu.trace_stop"() : () -> ()
    %43 = vector.broadcast %14 : vector<4x1x8xf32> to vector<4x8x8xf32>
    %44 = arith.addf %42, %43 : vector<4x8x8xf32>
    "tpu.trace_start"() <{level = 10 : i32, message = "hld,hde->hle"}> : () -> ()
    %cst_60 = arith.constant dense<0.000000e+00> : vector<4x8x8xf32>
    %45 = tpu.matmul %41, %16, %cst_60 {dimension_numbers = #tpu.dot_dimension_numbers<[2], [1], [1], [2], [0, 0, 0, 1, 1, 2], [0], [0]>} : vector<4x8x32xf32>, vector<4x32x8xf32>, vector<4x8x8xf32> -> vector<4x8x8xf32>
    "tpu.trace_stop"() : () -> ()
    %46 = vector.broadcast %18 : vector<4x1x8xf32> to vector<4x8x8xf32>
    %47 = arith.addf %45, %46 : vector<4x8x8xf32>
    "tpu.trace_start"() <{level = 10 : i32, message = "hld,hde->hle"}> : () -> ()
    %cst_61 = arith.constant dense<0.000000e+00> : vector<4x8x8xf32>
    %48 = tpu.matmul %41, %20, %cst_61 {dimension_numbers = #tpu.dot_dimension_numbers<[2], [1], [1], [2], [0, 0, 0, 1, 1, 2], [0], [0]>} : vector<4x8x32xf32>, vector<4x32x8xf32>, vector<4x8x8xf32> -> vector<4x8x8xf32>
    "tpu.trace_stop"() : () -> ()
    %49 = vector.broadcast %22 : vector<4x1x8xf32> to vector<4x8x8xf32>
    %50 = arith.addf %48, %49 : vector<4x8x8xf32>
    %cst_62 = arith.constant 0.353553385 : f32
    %51 = vector.broadcast %cst_62 : f32 to vector<4x8x8xf32>
    %52 = arith.mulf %44, %51 : vector<4x8x8xf32>
    "tpu.trace_start"() <{level = 10 : i32, message = "hqe,hke->hqk"}> : () -> ()
    %cst_63 = arith.constant dense<0.000000e+00> : vector<4x8x8xf32>
    %53 = tpu.matmul %52, %47, %cst_63 {dimension_numbers = #tpu.dot_dimension_numbers<[2], [2], [1], [1], [0, 0, 0, 1, 1, 1], [0], [0]>} : vector<4x8x8xf32>, vector<4x8x8xf32>, vector<4x8x8xf32> -> vector<4x8x8xf32>
    "tpu.trace_stop"() : () -> ()
    %cst_64 = arith.constant dense<0xFF800000> : vector<4x8xf32>
    %54 = vector.multi_reduction <maximumf>, %53, %cst_64 [2] : vector<4x8x8xf32> to vector<4x8xf32>
    %55 = vector.shape_cast %54 : vector<4x8xf32> to vector<4x8x1xf32>
    %56 = vector.broadcast %55 : vector<4x8x1xf32> to vector<4x8x8xf32>
    %57 = arith.subf %53, %56 : vector<4x8x8xf32>
    %58 = math.exp %57 : vector<4x8x8xf32>
    %cst_65 = arith.constant dense<0.000000e+00> : vector<4x8xf32>
    %59 = vector.multi_reduction <add>, %58, %cst_65 [2] : vector<4x8x8xf32> to vector<4x8xf32>
    %60 = vector.shape_cast %59 : vector<4x8xf32> to vector<4x8x1xf32>
    %61 = tpu.reciprocal %60 {approx = true} : vector<4x8x1xf32> -> vector<4x8x1xf32>
    %62 = vector.broadcast %61 : vector<4x8x1xf32> to vector<4x8x8xf32>
    %63 = arith.mulf %58, %62 : vector<4x8x8xf32>
    "tpu.trace_start"() <{level = 10 : i32, message = "hqk,hke->hqe"}> : () -> ()
    %cst_66 = arith.constant dense<0.000000e+00> : vector<4x8x8xf32>
    %64 = tpu.matmul %63, %50, %cst_66 {dimension_numbers = #tpu.dot_dimension_numbers<[2], [1], [1], [2], [0, 0, 0, 1, 1, 2], [0], [0]>} : vector<4x8x8xf32>, vector<4x8x8xf32>, vector<4x8x8xf32> -> vector<4x8x8xf32>
    "tpu.trace_stop"() : () -> ()
    "tpu.trace_start"() <{level = 10 : i32, message = "hqe,hed->hqd"}> : () -> ()
    %cst_67 = arith.constant dense<0.000000e+00> : vector<4x8x32xf32>
    %65 = tpu.matmul %64, %24, %cst_67 {dimension_numbers = #tpu.dot_dimension_numbers<[2], [1], [1], [2], [0, 0, 0, 1, 1, 2], [0], [0]>} : vector<4x8x8xf32>, vector<4x8x32xf32>, vector<4x8x32xf32> -> vector<4x8x32xf32>
    "tpu.trace_stop"() : () -> ()
    %cst_68 = arith.constant dense<0.000000e+00> : vector<8x32xf32>
    %66 = vector.multi_reduction <add>, %65, %cst_68 [0] : vector<4x8x32xf32> to vector<8x32xf32>
    %67 = vector.broadcast %26 : vector<1x32xf32> to vector<8x32xf32>
    %68 = arith.addf %66, %67 : vector<8x32xf32>
    %69 = arith.addf %1, %68 : vector<8x32xf32>
    %cst_69 = arith.constant dense<0.000000e+00> : vector<8x32xf32>
    %70 = tpu.matmul %6, %69, %cst_69 {dimension_numbers = #tpu.dot_dimension_numbers<[1], [0], [0], [1], [0, 0, 1, 1], [], []>} : vector<8x8xf32>, vector<8x32xf32>, vector<8x32xf32> -> vector<8x32xf32>
    %71 = arith.subf %69, %70 : vector<8x32xf32>
    %72 = vector.shape_cast %71 : vector<8x32xf32> to vector<1x8x32xf32>
    %73 = vector.shape_cast %72 : vector<1x8x32xf32> to vector<1x8x32xf32>
    %74 = vector.broadcast %73 : vector<1x8x32xf32> to vector<4x8x32xf32>
    "tpu.trace_start"() <{level = 10 : i32, message = "hld,hde->hle"}> : () -> ()
    %cst_70 = arith.constant dense<0.000000e+00> : vector<4x8x8xf32>
    %75 = tpu.matmul %74, %12, %cst_70 {dimension_numbers = #tpu.dot_dimension_numbers<[2], [1], [1], [2], [0, 0, 0, 1, 1, 2], [0], [0]>} : vector<4x8x32xf32>, vector<4x32x8xf32>, vector<4x8x8xf32> -> vector<4x8x8xf32>
    "tpu.trace_stop"() : () -> ()
    %76 = vector.broadcast %14 : vector<4x1x8xf32> to vector<4x8x8xf32>
    %77 = arith.addf %75, %76 : vector<4x8x8xf32>
    "tpu.trace_start"() <{level = 10 : i32, message = "hld,hde->hle"}> : () -> ()
    %cst_71 = arith.constant dense<0.000000e+00> : vector<4x8x8xf32>
    %78 = tpu.matmul %9, %16, %cst_71 {dimension_numbers = #tpu.dot_dimension_numbers<[2], [1], [1], [2], [0, 0, 0, 1, 1, 2], [0], [0]>} : vector<4x8x32xf32>, vector<4x32x8xf32>, vector<4x8x8xf32> -> vector<4x8x8xf32>
    "tpu.trace_stop"() : () -> ()
    %79 = vector.broadcast %18 : vector<4x1x8xf32> to vector<4x8x8xf32>
    %80 = arith.addf %78, %79 : vector<4x8x8xf32>
    "tpu.trace_start"() <{level = 10 : i32, message = "hld,hde->hle"}> : () -> ()
    %cst_72 = arith.constant dense<0.000000e+00> : vector<4x8x8xf32>
    %81 = tpu.matmul %9, %20, %cst_72 {dimension_numbers = #tpu.dot_dimension_numbers<[2], [1], [1], [2], [0, 0, 0, 1, 1, 2], [0], [0]>} : vector<4x8x32xf32>, vector<4x32x8xf32>, vector<4x8x8xf32> -> vector<4x8x8xf32>
    "tpu.trace_stop"() : () -> ()
    %82 = vector.broadcast %22 : vector<4x1x8xf32> to vector<4x8x8xf32>
    %83 = arith.addf %81, %82 : vector<4x8x8xf32>
    %cst_73 = arith.constant 0.353553385 : f32
    %84 = vector.broadcast %cst_73 : f32 to vector<4x8x8xf32>
    %85 = arith.mulf %77, %84 : vector<4x8x8xf32>
    "tpu.trace_start"() <{level = 10 : i32, message = "hqe,hke->hqk"}> : () -> ()
    %cst_74 = arith.constant dense<0.000000e+00> : vector<4x8x8xf32>
    %86 = tpu.matmul %85, %80, %cst_74 {dimension_numbers = #tpu.dot_dimension_numbers<[2], [2], [1], [1], [0, 0, 0, 1, 1, 1], [0], [0]>} : vector<4x8x8xf32>, vector<4x8x8xf32>, vector<4x8x8xf32> -> vector<4x8x8xf32>
    "tpu.trace_stop"() : () -> ()
    %cst_75 = arith.constant dense<0xFF800000> : vector<4x8xf32>
    %87 = vector.multi_reduction <maximumf>, %86, %cst_75 [2] : vector<4x8x8xf32> to vector<4x8xf32>
    %88 = vector.shape_cast %87 : vector<4x8xf32> to vector<4x8x1xf32>
    %89 = vector.broadcast %88 : vector<4x8x1xf32> to vector<4x8x8xf32>
    %90 = arith.subf %86, %89 : vector<4x8x8xf32>
    %91 = math.exp %90 : vector<4x8x8xf32>
    %cst_76 = arith.constant dense<0.000000e+00> : vector<4x8xf32>
    %92 = vector.multi_reduction <add>, %91, %cst_76 [2] : vector<4x8x8xf32> to vector<4x8xf32>
    %93 = vector.shape_cast %92 : vector<4x8xf32> to vector<4x8x1xf32>
    %94 = tpu.reciprocal %93 {approx = true} : vector<4x8x1xf32> -> vector<4x8x1xf32>
    %95 = vector.broadcast %94 : vector<4x8x1xf32> to vector<4x8x8xf32>
    %96 = arith.mulf %91, %95 : vector<4x8x8xf32>
    "tpu.trace_start"() <{level = 10 : i32, message = "hqk,hke->hqe"}> : () -> ()
    %cst_77 = arith.constant dense<0.000000e+00> : vector<4x8x8xf32>
    %97 = tpu.matmul %96, %83, %cst_77 {dimension_numbers = #tpu.dot_dimension_numbers<[2], [1], [1], [2], [0, 0, 0, 1, 1, 2], [0], [0]>} : vector<4x8x8xf32>, vector<4x8x8xf32>, vector<4x8x8xf32> -> vector<4x8x8xf32>
    "tpu.trace_stop"() : () -> ()
    "tpu.trace_start"() <{level = 10 : i32, message = "hqe,hed->hqd"}> : () -> ()
    %cst_78 = arith.constant dense<0.000000e+00> : vector<4x8x32xf32>
    %98 = tpu.matmul %97, %24, %cst_78 {dimension_numbers = #tpu.dot_dimension_numbers<[2], [1], [1], [2], [0, 0, 0, 1, 1, 2], [0], [0]>} : vector<4x8x8xf32>, vector<4x8x32xf32>, vector<4x8x32xf32> -> vector<4x8x32xf32>
    "tpu.trace_stop"() : () -> ()
    %cst_79 = arith.constant dense<0.000000e+00> : vector<8x32xf32>
    %99 = vector.multi_reduction <add>, %98, %cst_79 [0] : vector<4x8x32xf32> to vector<8x32xf32>
    %100 = vector.broadcast %26 : vector<1x32xf32> to vector<8x32xf32>
    %101 = arith.addf %99, %100 : vector<8x32xf32>
    %102 = arith.addf %71, %101 : vector<8x32xf32>
    %cst_80 = arith.constant dense<0.000000e+00> : vector<8x32xf32>
    %103 = tpu.matmul %6, %102, %cst_80 {dimension_numbers = #tpu.dot_dimension_numbers<[1], [0], [0], [1], [0, 0, 1, 1], [], []>} : vector<8x8xf32>, vector<8x32xf32>, vector<8x32xf32> -> vector<8x32xf32>
    %104 = arith.subf %102, %103 : vector<8x32xf32>
    %cst_81 = arith.constant dense<0.000000e+00> : vector<8x64xf32>
    %105 = tpu.matmul %104, %28, %cst_81 {dimension_numbers = #tpu.dot_dimension_numbers<[1], [0], [0], [1], [0, 0, 1, 1], [], []>} : vector<8x32xf32>, vector<32x64xf32>, vector<8x64xf32> -> vector<8x64xf32>
    %106 = vector.broadcast %30 : vector<1x64xf32> to vector<8x64xf32>
    %107 = arith.addf %105, %106 : vector<8x64xf32>
    %cst_82 = arith.constant 5.000000e-01 : f32
    %108 = vector.broadcast %cst_82 : f32 to vector<8x64xf32>
    %109 = arith.mulf %108, %107 : vector<8x64xf32>
    %cst_83 = arith.constant 4.471500e-02 : f32
    %110 = vector.broadcast %cst_83 : f32 to vector<8x64xf32>
    %111 = arith.mulf %110, %107 : vector<8x64xf32>
    %112 = arith.mulf %111, %107 : vector<8x64xf32>
    %113 = arith.mulf %112, %107 : vector<8x64xf32>
    %114 = arith.addf %107, %113 : vector<8x64xf32>
    %cst_84 = arith.constant 0.797884583 : f32
    %115 = vector.broadcast %cst_84 : f32 to vector<8x64xf32>
    %116 = arith.mulf %115, %114 : vector<8x64xf32>
    %117 = math.tanh %116 : vector<8x64xf32>
    %cst_85 = arith.constant 1.000000e+00 : f32
    %118 = vector.broadcast %cst_85 : f32 to vector<8x64xf32>
    %119 = arith.addf %118, %117 : vector<8x64xf32>
    %120 = arith.mulf %109, %119 : vector<8x64xf32>
    %cst_86 = arith.constant dense<0.000000e+00> : vector<8x32xf32>
    %121 = tpu.matmul %120, %32, %cst_86 {dimension_numbers = #tpu.dot_dimension_numbers<[1], [0], [0], [1], [0, 0, 1, 1], [], []>} : vector<8x64xf32>, vector<64x32xf32>, vector<8x32xf32> -> vector<8x32xf32>
    %122 = arith.addf %104, %121 : vector<8x32xf32>
    %123 = vector.broadcast %34 : vector<1x32xf32> to vector<8x32xf32>
    %124 = arith.addf %122, %123 : vector<8x32xf32>
    %cst_87 = arith.constant dense<0.000000e+00> : vector<8x32xf32>
    %125 = tpu.matmul %6, %124, %cst_87 {dimension_numbers = #tpu.dot_dimension_numbers<[1], [0], [0], [1], [0, 0, 1, 1], [], []>} : vector<8x8xf32>, vector<8x32xf32>, vector<8x32xf32> -> vector<8x32xf32>
    %126 = arith.subf %124, %125 : vector<8x32xf32>
    %127 = arith.addf %70, %103 : vector<8x32xf32>
    %128 = arith.addf %127, %125 : vector<8x32xf32>
    %129 = vector.extract_strided_slice %128 {offsets = [0, 0], sizes = [7, 32], strides = [1, 1]} : vector<8x32xf32> to vector<7x32xf32>
    %130 = tpu.concatenate %10, %129 in 0 : vector<1x32xf32>, vector<7x32xf32> -> vector<8x32xf32>
    %131 = vector.extract_strided_slice %128 {offsets = [1, 0], sizes = [7, 32], strides = [1, 1]} : vector<8x32xf32> to vector<7x32xf32>
    %132 = tpu.concatenate %131, %10 in 0 : vector<7x32xf32>, vector<1x32xf32> -> vector<8x32xf32>
    %133 = tpu.concatenate %130, %128, %132 in 1 : vector<8x32xf32>, vector<8x32xf32>, vector<8x32xf32> -> vector<8x96xf32>
    %cst_88 = arith.constant dense<0.000000e+00> : vector<8x16xf32>
    %134 = tpu.matmul %133, %36, %cst_88 {dimension_numbers = #tpu.dot_dimension_numbers<[1], [0], [0], [1], [0, 0, 1, 1], [], []>} : vector<8x96xf32>, vector<96x16xf32>, vector<8x16xf32> -> vector<8x16xf32>
    %135 = arith.addf %3, %134 : vector<8x16xf32>
    %136 = vector.broadcast %38 : vector<1x16xf32> to vector<8x16xf32>
    %137 = arith.addf %135, %136 : vector<8x16xf32>
    %c1 = arith.constant 1 : index
    %c0_89 = arith.constant 0 : index
    %c0_90 = arith.constant 0 : index
    %c0_91 = arith.constant 0 : index
    %138 = vector.load %arg5[%c1, %c0_89, %c0_90, %c0_91] : memref<2x4x32x8xf32, #tpu.memory_space<vmem>>, vector<1x4x32x8xf32>
    %139 = vector.shape_cast %138 : vector<1x4x32x8xf32> to vector<4x32x8xf32>
    %c1_92 = arith.constant 1 : index
    %c0_93 = arith.constant 0 : index
    %c0_94 = arith.constant 0 : index
    %c0_95 = arith.constant 0 : index
    %140 = vector.load %arg6[%c1_92, %c0_93, %c0_94, %c0_95] : memref<2x4x1x8xf32, #tpu.memory_space<vmem>>, vector<1x4x1x8xf32>
    %141 = vector.shape_cast %140 : vector<1x4x1x8xf32> to vector<4x1x8xf32>
    %c1_96 = arith.constant 1 : index
    %c0_97 = arith.constant 0 : index
    %c0_98 = arith.constant 0 : index
    %c0_99 = arith.constant 0 : index
    %142 = vector.load %arg7[%c1_96, %c0_97, %c0_98, %c0_99] : memref<2x4x32x8xf32, #tpu.memory_space<vmem>>, vector<1x4x32x8xf32>
    %143 = vector.shape_cast %142 : vector<1x4x32x8xf32> to vector<4x32x8xf32>
    %c1_100 = arith.constant 1 : index
    %c0_101 = arith.constant 0 : index
    %c0_102 = arith.constant 0 : index
    %c0_103 = arith.constant 0 : index
    %144 = vector.load %arg8[%c1_100, %c0_101, %c0_102, %c0_103] : memref<2x4x1x8xf32, #tpu.memory_space<vmem>>, vector<1x4x1x8xf32>
    %145 = vector.shape_cast %144 : vector<1x4x1x8xf32> to vector<4x1x8xf32>
    %c1_104 = arith.constant 1 : index
    %c0_105 = arith.constant 0 : index
    %c0_106 = arith.constant 0 : index
    %c0_107 = arith.constant 0 : index
    %146 = vector.load %arg9[%c1_104, %c0_105, %c0_106, %c0_107] : memref<2x4x32x8xf32, #tpu.memory_space<vmem>>, vector<1x4x32x8xf32>
    %147 = vector.shape_cast %146 : vector<1x4x32x8xf32> to vector<4x32x8xf32>
    %c1_108 = arith.constant 1 : index
    %c0_109 = arith.constant 0 : index
    %c0_110 = arith.constant 0 : index
    %c0_111 = arith.constant 0 : index
    %148 = vector.load %arg10[%c1_108, %c0_109, %c0_110, %c0_111] : memref<2x4x1x8xf32, #tpu.memory_space<vmem>>, vector<1x4x1x8xf32>
    %149 = vector.shape_cast %148 : vector<1x4x1x8xf32> to vector<4x1x8xf32>
    %c1_112 = arith.constant 1 : index
    %c0_113 = arith.constant 0 : index
    %c0_114 = arith.constant 0 : index
    %c0_115 = arith.constant 0 : index
    %150 = vector.load %arg11[%c1_112, %c0_113, %c0_114, %c0_115] : memref<2x4x8x32xf32, #tpu.memory_space<vmem>>, vector<1x4x8x32xf32>
    %151 = vector.shape_cast %150 : vector<1x4x8x32xf32> to vector<4x8x32xf32>
    %c1_116 = arith.constant 1 : index
    %c0_117 = arith.constant 0 : index
    %c0_118 = arith.constant 0 : index
    %152 = vector.load %arg12[%c1_116, %c0_117, %c0_118] : memref<2x1x32xf32, #tpu.memory_space<vmem>>, vector<1x1x32xf32>
    %153 = vector.shape_cast %152 : vector<1x1x32xf32> to vector<1x32xf32>
    %c1_119 = arith.constant 1 : index
    %c0_120 = arith.constant 0 : index
    %c0_121 = arith.constant 0 : index
    %154 = vector.load %arg13[%c1_119, %c0_120, %c0_121] : memref<2x32x64xf32, #tpu.memory_space<vmem>>, vector<1x32x64xf32>
    %155 = vector.shape_cast %154 : vector<1x32x64xf32> to vector<32x64xf32>
    %c1_122 = arith.constant 1 : index
    %c0_123 = arith.constant 0 : index
    %c0_124 = arith.constant 0 : index
    %156 = vector.load %arg14[%c1_122, %c0_123, %c0_124] : memref<2x1x64xf32, #tpu.memory_space<vmem>>, vector<1x1x64xf32>
    %157 = vector.shape_cast %156 : vector<1x1x64xf32> to vector<1x64xf32>
    %c1_125 = arith.constant 1 : index
    %c0_126 = arith.constant 0 : index
    %c0_127 = arith.constant 0 : index
    %158 = vector.load %arg15[%c1_125, %c0_126, %c0_127] : memref<2x64x32xf32, #tpu.memory_space<vmem>>, vector<1x64x32xf32>
    %159 = vector.shape_cast %158 : vector<1x64x32xf32> to vector<64x32xf32>
    %c1_128 = arith.constant 1 : index
    %c0_129 = arith.constant 0 : index
    %c0_130 = arith.constant 0 : index
    %160 = vector.load %arg16[%c1_128, %c0_129, %c0_130] : memref<2x1x32xf32, #tpu.memory_space<vmem>>, vector<1x1x32xf32>
    %161 = vector.shape_cast %160 : vector<1x1x32xf32> to vector<1x32xf32>
    %c1_131 = arith.constant 1 : index
    %c0_132 = arith.constant 0 : index
    %c0_133 = arith.constant 0 : index
    %162 = vector.load %arg17[%c1_131, %c0_132, %c0_133] : memref<2x96x16xf32, #tpu.memory_space<vmem>>, vector<1x96x16xf32>
    %163 = vector.shape_cast %162 : vector<1x96x16xf32> to vector<96x16xf32>
    %c1_134 = arith.constant 1 : index
    %c0_135 = arith.constant 0 : index
    %c0_136 = arith.constant 0 : index
    %164 = vector.load %arg18[%c1_134, %c0_135, %c0_136] : memref<2x1x16xf32, #tpu.memory_space<vmem>>, vector<1x1x16xf32>
    %165 = vector.shape_cast %164 : vector<1x1x16xf32> to vector<1x16xf32>
    %166 = vector.shape_cast %126 : vector<8x32xf32> to vector<1x8x32xf32>
    %167 = vector.shape_cast %166 : vector<1x8x32xf32> to vector<1x8x32xf32>
    %168 = vector.broadcast %167 : vector<1x8x32xf32> to vector<4x8x32xf32>
    "tpu.trace_start"() <{level = 10 : i32, message = "hld,hde->hle"}> : () -> ()
    %cst_137 = arith.constant dense<0.000000e+00> : vector<4x8x8xf32>
    %169 = tpu.matmul %168, %139, %cst_137 {dimension_numbers = #tpu.dot_dimension_numbers<[2], [1], [1], [2], [0, 0, 0, 1, 1, 2], [0], [0]>} : vector<4x8x32xf32>, vector<4x32x8xf32>, vector<4x8x8xf32> -> vector<4x8x8xf32>
    "tpu.trace_stop"() : () -> ()
    %170 = vector.broadcast %141 : vector<4x1x8xf32> to vector<4x8x8xf32>
    %171 = arith.addf %169, %170 : vector<4x8x8xf32>
    "tpu.trace_start"() <{level = 10 : i32, message = "hld,hde->hle"}> : () -> ()
    %cst_138 = arith.constant dense<0.000000e+00> : vector<4x8x8xf32>
    %172 = tpu.matmul %168, %143, %cst_138 {dimension_numbers = #tpu.dot_dimension_numbers<[2], [1], [1], [2], [0, 0, 0, 1, 1, 2], [0], [0]>} : vector<4x8x32xf32>, vector<4x32x8xf32>, vector<4x8x8xf32> -> vector<4x8x8xf32>
    "tpu.trace_stop"() : () -> ()
    %173 = vector.broadcast %145 : vector<4x1x8xf32> to vector<4x8x8xf32>
    %174 = arith.addf %172, %173 : vector<4x8x8xf32>
    "tpu.trace_start"() <{level = 10 : i32, message = "hld,hde->hle"}> : () -> ()
    %cst_139 = arith.constant dense<0.000000e+00> : vector<4x8x8xf32>
    %175 = tpu.matmul %168, %147, %cst_139 {dimension_numbers = #tpu.dot_dimension_numbers<[2], [1], [1], [2], [0, 0, 0, 1, 1, 2], [0], [0]>} : vector<4x8x32xf32>, vector<4x32x8xf32>, vector<4x8x8xf32> -> vector<4x8x8xf32>
    "tpu.trace_stop"() : () -> ()
    %176 = vector.broadcast %149 : vector<4x1x8xf32> to vector<4x8x8xf32>
    %177 = arith.addf %175, %176 : vector<4x8x8xf32>
    %cst_140 = arith.constant 0.353553385 : f32
    %178 = vector.broadcast %cst_140 : f32 to vector<4x8x8xf32>
    %179 = arith.mulf %171, %178 : vector<4x8x8xf32>
    "tpu.trace_start"() <{level = 10 : i32, message = "hqe,hke->hqk"}> : () -> ()
    %cst_141 = arith.constant dense<0.000000e+00> : vector<4x8x8xf32>
    %180 = tpu.matmul %179, %174, %cst_141 {dimension_numbers = #tpu.dot_dimension_numbers<[2], [2], [1], [1], [0, 0, 0, 1, 1, 1], [0], [0]>} : vector<4x8x8xf32>, vector<4x8x8xf32>, vector<4x8x8xf32> -> vector<4x8x8xf32>
    "tpu.trace_stop"() : () -> ()
    %cst_142 = arith.constant dense<0xFF800000> : vector<4x8xf32>
    %181 = vector.multi_reduction <maximumf>, %180, %cst_142 [2] : vector<4x8x8xf32> to vector<4x8xf32>
    %182 = vector.shape_cast %181 : vector<4x8xf32> to vector<4x8x1xf32>
    %183 = vector.broadcast %182 : vector<4x8x1xf32> to vector<4x8x8xf32>
    %184 = arith.subf %180, %183 : vector<4x8x8xf32>
    %185 = math.exp %184 : vector<4x8x8xf32>
    %cst_143 = arith.constant dense<0.000000e+00> : vector<4x8xf32>
    %186 = vector.multi_reduction <add>, %185, %cst_143 [2] : vector<4x8x8xf32> to vector<4x8xf32>
    %187 = vector.shape_cast %186 : vector<4x8xf32> to vector<4x8x1xf32>
    %188 = tpu.reciprocal %187 {approx = true} : vector<4x8x1xf32> -> vector<4x8x1xf32>
    %189 = vector.broadcast %188 : vector<4x8x1xf32> to vector<4x8x8xf32>
    %190 = arith.mulf %185, %189 : vector<4x8x8xf32>
    "tpu.trace_start"() <{level = 10 : i32, message = "hqk,hke->hqe"}> : () -> ()
    %cst_144 = arith.constant dense<0.000000e+00> : vector<4x8x8xf32>
    %191 = tpu.matmul %190, %177, %cst_144 {dimension_numbers = #tpu.dot_dimension_numbers<[2], [1], [1], [2], [0, 0, 0, 1, 1, 2], [0], [0]>} : vector<4x8x8xf32>, vector<4x8x8xf32>, vector<4x8x8xf32> -> vector<4x8x8xf32>
    "tpu.trace_stop"() : () -> ()
    "tpu.trace_start"() <{level = 10 : i32, message = "hqe,hed->hqd"}> : () -> ()
    %cst_145 = arith.constant dense<0.000000e+00> : vector<4x8x32xf32>
    %192 = tpu.matmul %191, %151, %cst_145 {dimension_numbers = #tpu.dot_dimension_numbers<[2], [1], [1], [2], [0, 0, 0, 1, 1, 2], [0], [0]>} : vector<4x8x8xf32>, vector<4x8x32xf32>, vector<4x8x32xf32> -> vector<4x8x32xf32>
    "tpu.trace_stop"() : () -> ()
    %cst_146 = arith.constant dense<0.000000e+00> : vector<8x32xf32>
    %193 = vector.multi_reduction <add>, %192, %cst_146 [0] : vector<4x8x32xf32> to vector<8x32xf32>
    %194 = vector.broadcast %153 : vector<1x32xf32> to vector<8x32xf32>
    %195 = arith.addf %193, %194 : vector<8x32xf32>
    %196 = arith.addf %126, %195 : vector<8x32xf32>
    %cst_147 = arith.constant dense<0.000000e+00> : vector<8x32xf32>
    %197 = tpu.matmul %6, %196, %cst_147 {dimension_numbers = #tpu.dot_dimension_numbers<[1], [0], [0], [1], [0, 0, 1, 1], [], []>} : vector<8x8xf32>, vector<8x32xf32>, vector<8x32xf32> -> vector<8x32xf32>
    %198 = arith.subf %196, %197 : vector<8x32xf32>
    %199 = vector.shape_cast %198 : vector<8x32xf32> to vector<1x8x32xf32>
    %200 = vector.shape_cast %199 : vector<1x8x32xf32> to vector<1x8x32xf32>
    %201 = vector.broadcast %200 : vector<1x8x32xf32> to vector<4x8x32xf32>
    "tpu.trace_start"() <{level = 10 : i32, message = "hld,hde->hle"}> : () -> ()
    %cst_148 = arith.constant dense<0.000000e+00> : vector<4x8x8xf32>
    %202 = tpu.matmul %201, %139, %cst_148 {dimension_numbers = #tpu.dot_dimension_numbers<[2], [1], [1], [2], [0, 0, 0, 1, 1, 2], [0], [0]>} : vector<4x8x32xf32>, vector<4x32x8xf32>, vector<4x8x8xf32> -> vector<4x8x8xf32>
    "tpu.trace_stop"() : () -> ()
    %203 = vector.broadcast %141 : vector<4x1x8xf32> to vector<4x8x8xf32>
    %204 = arith.addf %202, %203 : vector<4x8x8xf32>
    "tpu.trace_start"() <{level = 10 : i32, message = "hld,hde->hle"}> : () -> ()
    %cst_149 = arith.constant dense<0.000000e+00> : vector<4x8x8xf32>
    %205 = tpu.matmul %9, %143, %cst_149 {dimension_numbers = #tpu.dot_dimension_numbers<[2], [1], [1], [2], [0, 0, 0, 1, 1, 2], [0], [0]>} : vector<4x8x32xf32>, vector<4x32x8xf32>, vector<4x8x8xf32> -> vector<4x8x8xf32>
    "tpu.trace_stop"() : () -> ()
    %206 = vector.broadcast %145 : vector<4x1x8xf32> to vector<4x8x8xf32>
    %207 = arith.addf %205, %206 : vector<4x8x8xf32>
    "tpu.trace_start"() <{level = 10 : i32, message = "hld,hde->hle"}> : () -> ()
    %cst_150 = arith.constant dense<0.000000e+00> : vector<4x8x8xf32>
    %208 = tpu.matmul %9, %147, %cst_150 {dimension_numbers = #tpu.dot_dimension_numbers<[2], [1], [1], [2], [0, 0, 0, 1, 1, 2], [0], [0]>} : vector<4x8x32xf32>, vector<4x32x8xf32>, vector<4x8x8xf32> -> vector<4x8x8xf32>
    "tpu.trace_stop"() : () -> ()
    %209 = vector.broadcast %149 : vector<4x1x8xf32> to vector<4x8x8xf32>
    %210 = arith.addf %208, %209 : vector<4x8x8xf32>
    %cst_151 = arith.constant 0.353553385 : f32
    %211 = vector.broadcast %cst_151 : f32 to vector<4x8x8xf32>
    %212 = arith.mulf %204, %211 : vector<4x8x8xf32>
    "tpu.trace_start"() <{level = 10 : i32, message = "hqe,hke->hqk"}> : () -> ()
    %cst_152 = arith.constant dense<0.000000e+00> : vector<4x8x8xf32>
    %213 = tpu.matmul %212, %207, %cst_152 {dimension_numbers = #tpu.dot_dimension_numbers<[2], [2], [1], [1], [0, 0, 0, 1, 1, 1], [0], [0]>} : vector<4x8x8xf32>, vector<4x8x8xf32>, vector<4x8x8xf32> -> vector<4x8x8xf32>
    "tpu.trace_stop"() : () -> ()
    %cst_153 = arith.constant dense<0xFF800000> : vector<4x8xf32>
    %214 = vector.multi_reduction <maximumf>, %213, %cst_153 [2] : vector<4x8x8xf32> to vector<4x8xf32>
    %215 = vector.shape_cast %214 : vector<4x8xf32> to vector<4x8x1xf32>
    %216 = vector.broadcast %215 : vector<4x8x1xf32> to vector<4x8x8xf32>
    %217 = arith.subf %213, %216 : vector<4x8x8xf32>
    %218 = math.exp %217 : vector<4x8x8xf32>
    %cst_154 = arith.constant dense<0.000000e+00> : vector<4x8xf32>
    %219 = vector.multi_reduction <add>, %218, %cst_154 [2] : vector<4x8x8xf32> to vector<4x8xf32>
    %220 = vector.shape_cast %219 : vector<4x8xf32> to vector<4x8x1xf32>
    %221 = tpu.reciprocal %220 {approx = true} : vector<4x8x1xf32> -> vector<4x8x1xf32>
    %222 = vector.broadcast %221 : vector<4x8x1xf32> to vector<4x8x8xf32>
    %223 = arith.mulf %218, %222 : vector<4x8x8xf32>
    "tpu.trace_start"() <{level = 10 : i32, message = "hqk,hke->hqe"}> : () -> ()
    %cst_155 = arith.constant dense<0.000000e+00> : vector<4x8x8xf32>
    %224 = tpu.matmul %223, %210, %cst_155 {dimension_numbers = #tpu.dot_dimension_numbers<[2], [1], [1], [2], [0, 0, 0, 1, 1, 2], [0], [0]>} : vector<4x8x8xf32>, vector<4x8x8xf32>, vector<4x8x8xf32> -> vector<4x8x8xf32>
    "tpu.trace_stop"() : () -> ()
    "tpu.trace_start"() <{level = 10 : i32, message = "hqe,hed->hqd"}> : () -> ()
    %cst_156 = arith.constant dense<0.000000e+00> : vector<4x8x32xf32>
    %225 = tpu.matmul %224, %151, %cst_156 {dimension_numbers = #tpu.dot_dimension_numbers<[2], [1], [1], [2], [0, 0, 0, 1, 1, 2], [0], [0]>} : vector<4x8x8xf32>, vector<4x8x32xf32>, vector<4x8x32xf32> -> vector<4x8x32xf32>
    "tpu.trace_stop"() : () -> ()
    %cst_157 = arith.constant dense<0.000000e+00> : vector<8x32xf32>
    %226 = vector.multi_reduction <add>, %225, %cst_157 [0] : vector<4x8x32xf32> to vector<8x32xf32>
    %227 = vector.broadcast %153 : vector<1x32xf32> to vector<8x32xf32>
    %228 = arith.addf %226, %227 : vector<8x32xf32>
    %229 = arith.addf %198, %228 : vector<8x32xf32>
    %cst_158 = arith.constant dense<0.000000e+00> : vector<8x32xf32>
    %230 = tpu.matmul %6, %229, %cst_158 {dimension_numbers = #tpu.dot_dimension_numbers<[1], [0], [0], [1], [0, 0, 1, 1], [], []>} : vector<8x8xf32>, vector<8x32xf32>, vector<8x32xf32> -> vector<8x32xf32>
    %231 = arith.subf %229, %230 : vector<8x32xf32>
    %cst_159 = arith.constant dense<0.000000e+00> : vector<8x64xf32>
    %232 = tpu.matmul %231, %155, %cst_159 {dimension_numbers = #tpu.dot_dimension_numbers<[1], [0], [0], [1], [0, 0, 1, 1], [], []>} : vector<8x32xf32>, vector<32x64xf32>, vector<8x64xf32> -> vector<8x64xf32>
    %233 = vector.broadcast %157 : vector<1x64xf32> to vector<8x64xf32>
    %234 = arith.addf %232, %233 : vector<8x64xf32>
    %cst_160 = arith.constant 5.000000e-01 : f32
    %235 = vector.broadcast %cst_160 : f32 to vector<8x64xf32>
    %236 = arith.mulf %235, %234 : vector<8x64xf32>
    %cst_161 = arith.constant 4.471500e-02 : f32
    %237 = vector.broadcast %cst_161 : f32 to vector<8x64xf32>
    %238 = arith.mulf %237, %234 : vector<8x64xf32>
    %239 = arith.mulf %238, %234 : vector<8x64xf32>
    %240 = arith.mulf %239, %234 : vector<8x64xf32>
    %241 = arith.addf %234, %240 : vector<8x64xf32>
    %cst_162 = arith.constant 0.797884583 : f32
    %242 = vector.broadcast %cst_162 : f32 to vector<8x64xf32>
    %243 = arith.mulf %242, %241 : vector<8x64xf32>
    %244 = math.tanh %243 : vector<8x64xf32>
    %cst_163 = arith.constant 1.000000e+00 : f32
    %245 = vector.broadcast %cst_163 : f32 to vector<8x64xf32>
    %246 = arith.addf %245, %244 : vector<8x64xf32>
    %247 = arith.mulf %236, %246 : vector<8x64xf32>
    %cst_164 = arith.constant dense<0.000000e+00> : vector<8x32xf32>
    %248 = tpu.matmul %247, %159, %cst_164 {dimension_numbers = #tpu.dot_dimension_numbers<[1], [0], [0], [1], [0, 0, 1, 1], [], []>} : vector<8x64xf32>, vector<64x32xf32>, vector<8x32xf32> -> vector<8x32xf32>
    %249 = arith.addf %231, %248 : vector<8x32xf32>
    %250 = vector.broadcast %161 : vector<1x32xf32> to vector<8x32xf32>
    %251 = arith.addf %249, %250 : vector<8x32xf32>
    %cst_165 = arith.constant dense<0.000000e+00> : vector<8x32xf32>
    %252 = tpu.matmul %6, %251, %cst_165 {dimension_numbers = #tpu.dot_dimension_numbers<[1], [0], [0], [1], [0, 0, 1, 1], [], []>} : vector<8x8xf32>, vector<8x32xf32>, vector<8x32xf32> -> vector<8x32xf32>
    %253 = arith.subf %251, %252 : vector<8x32xf32>
    %254 = arith.addf %197, %230 : vector<8x32xf32>
    %255 = arith.addf %254, %252 : vector<8x32xf32>
    %256 = vector.extract_strided_slice %255 {offsets = [0, 0], sizes = [7, 32], strides = [1, 1]} : vector<8x32xf32> to vector<7x32xf32>
    %257 = tpu.concatenate %10, %256 in 0 : vector<1x32xf32>, vector<7x32xf32> -> vector<8x32xf32>
    %258 = vector.extract_strided_slice %255 {offsets = [1, 0], sizes = [7, 32], strides = [1, 1]} : vector<8x32xf32> to vector<7x32xf32>
    %259 = tpu.concatenate %258, %10 in 0 : vector<7x32xf32>, vector<1x32xf32> -> vector<8x32xf32>
    %260 = tpu.concatenate %257, %255, %259 in 1 : vector<8x32xf32>, vector<8x32xf32>, vector<8x32xf32> -> vector<8x96xf32>
    %cst_166 = arith.constant dense<0.000000e+00> : vector<8x16xf32>
    %261 = tpu.matmul %260, %163, %cst_166 {dimension_numbers = #tpu.dot_dimension_numbers<[1], [0], [0], [1], [0, 0, 1, 1], [], []>} : vector<8x96xf32>, vector<96x16xf32>, vector<8x16xf32> -> vector<8x16xf32>
    %262 = arith.addf %137, %261 : vector<8x16xf32>
    %263 = vector.broadcast %165 : vector<1x16xf32> to vector<8x16xf32>
    %264 = arith.addf %262, %263 : vector<8x16xf32>
    %c0_167 = arith.constant 0 : index
    %c0_168 = arith.constant 0 : index
    %c0_169 = arith.constant 0 : index
    %265 = vector.load %arg19[%c0_167, %c0_168, %c0_169] : memref<1x8x32xf32, #tpu.memory_space<vmem>>, vector<1x8x32xf32>
    %266 = vector.shape_cast %265 : vector<1x8x32xf32> to vector<8x32xf32>
    %267 = vector.shape_cast %253 : vector<8x32xf32> to vector<1x8x32xf32>
    tpu.vector_store %arg19[%c0_167, %c0_168, %c0_169], %267 {strides = array<i32>} : memref<1x8x32xf32, #tpu.memory_space<vmem>>, vector<1x8x32xf32>,
    %c0_170 = arith.constant 0 : index
    %c0_171 = arith.constant 0 : index
    %c0_172 = arith.constant 0 : index
    %268 = vector.load %arg20[%c0_170, %c0_171, %c0_172] : memref<1x8x16xf32, #tpu.memory_space<vmem>>, vector<1x8x16xf32>
    %269 = vector.shape_cast %268 : vector<1x8x16xf32> to vector<8x16xf32>
    %270 = vector.shape_cast %264 : vector<8x16xf32> to vector<1x8x16xf32>
    tpu.vector_store %arg20[%c0_170, %c0_171, %c0_172], %270 {strides = array<i32>} : memref<1x8x16xf32, #tpu.memory_space<vmem>>, vector<1x8x16xf32>,
    return
  }
  func.func @transform_0(%arg0: i32) -> (i32, i32, i32) {
    %c0_i32 = arith.constant 0 : i32
    %c0_i32_0 = arith.constant 0 : i32
    %c0_i32_1 = arith.constant 0 : i32
    return %arg0, %c0_i32, %c0_i32_0 : i32, i32, i32
  }
  func.func @transform_1(%arg0: i32) -> (i32, i32, i32) {
    %c0_i32 = arith.constant 0 : i32
    %c0_i32_0 = arith.constant 0 : i32
    %c0_i32_1 = arith.constant 0 : i32
    return %arg0, %c0_i32, %c0_i32_0 : i32, i32, i32
  }
  func.func @transform_2(%arg0: i32) -> (i32, i32, i32) {
    %c0_i32 = arith.constant 0 : i32
    %c0_i32_0 = arith.constant 0 : i32
    %c0_i32_1 = arith.constant 0 : i32
    return %arg0, %c0_i32, %c0_i32_0 : i32, i32, i32
  }
  func.func @transform_3(%arg0: i32) -> (i32, i32) {
    %c0_i32 = arith.constant 0 : i32
    %c0_i32_0 = arith.constant 0 : i32
    %c0_i32_1 = arith.constant 0 : i32
    return %c0_i32, %c0_i32_0 : i32, i32
  }
  func.func @transform_4(%arg0: i32) -> (i32, i32, i32, i32) {
    %c0_i32 = arith.constant 0 : i32
    %c0_i32_0 = arith.constant 0 : i32
    %c0_i32_1 = arith.constant 0 : i32
    %c0_i32_2 = arith.constant 0 : i32
    %c0_i32_3 = arith.constant 0 : i32
    return %c0_i32, %c0_i32_0, %c0_i32_1, %c0_i32_2 : i32, i32, i32, i32
  }
  func.func @transform_5(%arg0: i32) -> (i32, i32, i32, i32) {
    %c0_i32 = arith.constant 0 : i32
    %c0_i32_0 = arith.constant 0 : i32
    %c0_i32_1 = arith.constant 0 : i32
    %c0_i32_2 = arith.constant 0 : i32
    %c0_i32_3 = arith.constant 0 : i32
    return %c0_i32, %c0_i32_0, %c0_i32_1, %c0_i32_2 : i32, i32, i32, i32
  }
  func.func @transform_6(%arg0: i32) -> (i32, i32, i32, i32) {
    %c0_i32 = arith.constant 0 : i32
    %c0_i32_0 = arith.constant 0 : i32
    %c0_i32_1 = arith.constant 0 : i32
    %c0_i32_2 = arith.constant 0 : i32
    %c0_i32_3 = arith.constant 0 : i32
    return %c0_i32, %c0_i32_0, %c0_i32_1, %c0_i32_2 : i32, i32, i32, i32
  }
  func.func @transform_7(%arg0: i32) -> (i32, i32, i32, i32) {
    %c0_i32 = arith.constant 0 : i32
    %c0_i32_0 = arith.constant 0 : i32
    %c0_i32_1 = arith.constant 0 : i32
    %c0_i32_2 = arith.constant 0 : i32
    %c0_i32_3 = arith.constant 0 : i32
    return %c0_i32, %c0_i32_0, %c0_i32_1, %c0_i32_2 : i32, i32, i32, i32
  }
  func.func @transform_8(%arg0: i32) -> (i32, i32, i32, i32) {
    %c0_i32 = arith.constant 0 : i32
    %c0_i32_0 = arith.constant 0 : i32
    %c0_i32_1 = arith.constant 0 : i32
    %c0_i32_2 = arith.constant 0 : i32
    %c0_i32_3 = arith.constant 0 : i32
    return %c0_i32, %c0_i32_0, %c0_i32_1, %c0_i32_2 : i32, i32, i32, i32
  }
  func.func @transform_9(%arg0: i32) -> (i32, i32, i32, i32) {
    %c0_i32 = arith.constant 0 : i32
    %c0_i32_0 = arith.constant 0 : i32
    %c0_i32_1 = arith.constant 0 : i32
    %c0_i32_2 = arith.constant 0 : i32
    %c0_i32_3 = arith.constant 0 : i32
    return %c0_i32, %c0_i32_0, %c0_i32_1, %c0_i32_2 : i32, i32, i32, i32
  }
  func.func @transform_10(%arg0: i32) -> (i32, i32, i32, i32) {
    %c0_i32 = arith.constant 0 : i32
    %c0_i32_0 = arith.constant 0 : i32
    %c0_i32_1 = arith.constant 0 : i32
    %c0_i32_2 = arith.constant 0 : i32
    %c0_i32_3 = arith.constant 0 : i32
    return %c0_i32, %c0_i32_0, %c0_i32_1, %c0_i32_2 : i32, i32, i32, i32
  }
  func.func @transform_11(%arg0: i32) -> (i32, i32, i32) {
    %c0_i32 = arith.constant 0 : i32
    %c0_i32_0 = arith.constant 0 : i32
    %c0_i32_1 = arith.constant 0 : i32
    %c0_i32_2 = arith.constant 0 : i32
    return %c0_i32, %c0_i32_0, %c0_i32_1 : i32, i32, i32
  }
  func.func @transform_12(%arg0: i32) -> (i32, i32, i32) {
    %c0_i32 = arith.constant 0 : i32
    %c0_i32_0 = arith.constant 0 : i32
    %c0_i32_1 = arith.constant 0 : i32
    %c0_i32_2 = arith.constant 0 : i32
    return %c0_i32, %c0_i32_0, %c0_i32_1 : i32, i32, i32
  }
  func.func @transform_13(%arg0: i32) -> (i32, i32, i32) {
    %c0_i32 = arith.constant 0 : i32
    %c0_i32_0 = arith.constant 0 : i32
    %c0_i32_1 = arith.constant 0 : i32
    %c0_i32_2 = arith.constant 0 : i32
    return %c0_i32, %c0_i32_0, %c0_i32_1 : i32, i32, i32
  }
  func.func @transform_14(%arg0: i32) -> (i32, i32, i32) {
    %c0_i32 = arith.constant 0 : i32
    %c0_i32_0 = arith.constant 0 : i32
    %c0_i32_1 = arith.constant 0 : i32
    %c0_i32_2 = arith.constant 0 : i32
    return %c0_i32, %c0_i32_0, %c0_i32_1 : i32, i32, i32
  }
  func.func @transform_15(%arg0: i32) -> (i32, i32, i32) {
    %c0_i32 = arith.constant 0 : i32
    %c0_i32_0 = arith.constant 0 : i32
    %c0_i32_1 = arith.constant 0 : i32
    %c0_i32_2 = arith.constant 0 : i32
    return %c0_i32, %c0_i32_0, %c0_i32_1 : i32, i32, i32
  }
  func.func @transform_16(%arg0: i32) -> (i32, i32, i32) {
    %c0_i32 = arith.constant 0 : i32
    %c0_i32_0 = arith.constant 0 : i32
    %c0_i32_1 = arith.constant 0 : i32
    %c0_i32_2 = arith.constant 0 : i32
    return %c0_i32, %c0_i32_0, %c0_i32_1 : i32, i32, i32
  }
  func.func @transform_17(%arg0: i32) -> (i32, i32, i32) {
    %c0_i32 = arith.constant 0 : i32
    %c0_i32_0 = arith.constant 0 : i32
    %c0_i32_1 = arith.constant 0 : i32
    %c0_i32_2 = arith.constant 0 : i32
    return %c0_i32, %c0_i32_0, %c0_i32_1 : i32, i32, i32
  }
  func.func @transform_18(%arg0: i32) -> (i32, i32, i32) {
    %c0_i32 = arith.constant 0 : i32
    %c0_i32_0 = arith.constant 0 : i32
    %c0_i32_1 = arith.constant 0 : i32
    return %arg0, %c0_i32, %c0_i32_0 : i32, i32, i32
  }
  func.func @transform_19(%arg0: i32) -> (i32, i32, i32) {
    %c0_i32 = arith.constant 0 : i32
    %c0_i32_0 = arith.constant 0 : i32
    %c0_i32_1 = arith.constant 0 : i32
    return %arg0, %c0_i32, %c0_i32_0 : i32, i32, i32
  }
}

</mosaic_0001>

<llo_original>
// kernel: tpu_custom_call.1
$region0: #{tpu_custom_call.1}
  #allocation0 [shape = 'u32[]', space=smem, size = 0x4, offset = 0x4, fixed_abs, tag = 'smem constant byte address 0x4 - core index']
  #allocation1 [shape = 'u32[72,128]{1,0:T(1,128)}', space=vmem, size = 0x9000, scoped, tag = 'internal scratch']
  %s0 = inlined_call_operand.vmem [shape: f32[2,8,32], index: 0, kind: input, shape index: {}]
  %s1 = inlined_call_operand.vmem [shape: f32[2,8,16], index: 1, kind: input, shape index: {}]
  %s2 = inlined_call_operand.vmem [shape: f32[2,8,32], index: 2, kind: input, shape index: {}]
  %s3 = inlined_call_operand.vmem [shape: f32[8,8], index: 3, kind: input, shape index: {}]
  %s4 = inlined_call_operand.vmem [shape: f32[2,4,32,8], index: 4, kind: input, shape index: {}]
  %s5 = inlined_call_operand.vmem [shape: f32[2,4,1,8], index: 5, kind: input, shape index: {}]
  %s6 = inlined_call_operand.vmem [shape: f32[2,4,32,8], index: 6, kind: input, shape index: {}]
  %s7 = inlined_call_operand.vmem [shape: f32[2,4,1,8], index: 7, kind: input, shape index: {}]
  %s8 = inlined_call_operand.vmem [shape: f32[2,4,32,8], index: 8, kind: input, shape index: {}]
  %s9 = inlined_call_operand.vmem [shape: f32[2,4,1,8], index: 9, kind: input, shape index: {}]
  %s10 = inlined_call_operand.vmem [shape: f32[2,4,8,32], index: 10, kind: input, shape index: {}]
  %s11 = inlined_call_operand.vmem [shape: f32[2,1,32], index: 11, kind: input, shape index: {}]
  %s12 = inlined_call_operand.vmem [shape: f32[2,32,64], index: 12, kind: input, shape index: {}]
  %s13 = inlined_call_operand.vmem [shape: f32[2,1,64], index: 13, kind: input, shape index: {}]
  %s14 = inlined_call_operand.vmem [shape: f32[2,64,32], index: 14, kind: input, shape index: {}]
  %s15 = inlined_call_operand.vmem [shape: f32[2,1,32], index: 15, kind: input, shape index: {}]
  %s16 = inlined_call_operand.vmem [shape: f32[2,96,16], index: 16, kind: input, shape index: {}]
  %s17 = inlined_call_operand.vmem [shape: f32[2,1,16], index: 17, kind: input, shape index: {}]
  %s18 = inlined_call_operand.hbm [shape: f32[2,8,32], index: 18, kind: output, shape index: {0}]
  %s19 = inlined_call_operand.hbm [shape: f32[2,8,16], index: 19, kind: output, shape index: {1}]
  %20 = xla_tuple %s18, %s19
  %s21 = sld [smem:[#allocation0]]
  $region113: #{tpu_custom_call.1} parent=0
    _
  %s23 = ssub.s32 1, %s21
  %s24 = scalar_select 0, %s23, %s21
  $region1: #{tpu_custom_call.1} parent=0
    #allocation2 [shape = 'u8[8192]{0}', space=vmem, size = 0x2000, scoped, tag = 'output window, operand 0']
    #allocation3 [shape = 's32[2]{0}', space=sflag, size = 0x8, scoped, tag = 'scoped memory for tpu_custom_call.1']
    #allocation4 [shape = 'u8[8192]{0}', space=vmem, size = 0x2000, scoped, tag = 'output window, operand 1']
    #allocation5 [shape = 's32[2]{0}', space=sflag, size = 0x8, scoped, tag = 'scoped memory for tpu_custom_call.1']
    %25 = vsyncpa [#allocation3], 0
    %s26 = scalar_lea.sflag [#allocation3], 1
    %27 = vsyncpa %s26, 0
    %28 = vsyncpa [#allocation5], 0
    %s29 = scalar_lea.sflag [#allocation5], 1
    %30 = vsyncpa %s29, 0
    loop: start=0, step=1, limit=4
    $region2: #{tpu_custom_call.1} parent=1 // loop_pre_header
      _
    $region3: #{tpu_custom_call.1} parent=1 // loop_header
      %s32 = sphi 0, %s36
      %p33 = scmp.ge.s32.totalorder %s32, 4
      %s42 = sphi 0, %s44
      %s45 = sphi 0, %s42
      %s46 = sphi 0, %s45
      %s62 = sphi 0, %s46
      %s68 = sphi 0, %s70
      %s71 = sphi 0, %s68
      %s72 = sphi 0, %s71
      %s88 = sphi 0, %s72
      %s94 = sphi 0, %s96
      %s97 = sphi 0, %s94
      %s98 = sphi 0, %s97
      %s114 = sphi 0, %s98
      %s118 = sphi 0, %s118
      %s120 = sphi 0, %s118
      %s121 = sphi 0, %s120
      %s135 = sphi 0, %s121
      %s139 = sphi 0, %s139
      %s141 = sphi 0, %s139
      %s142 = sphi 0, %s141
      %s156 = sphi 0, %s142
      %s160 = sphi 0, %s160
      %s162 = sphi 0, %s160
      %s163 = sphi 0, %s162
      %s177 = sphi 0, %s163
      %s181 = sphi 0, %s181
      %s183 = sphi 0, %s181
      %s184 = sphi 0, %s183
      %s198 = sphi 0, %s184
      %s202 = sphi 0, %s202
      %s204 = sphi 0, %s202
      %s205 = sphi 0, %s204
      %s219 = sphi 0, %s205
      %s223 = sphi 0, %s223
      %s225 = sphi 0, %s223
      %s226 = sphi 0, %s225
      %s240 = sphi 0, %s226
      %s244 = sphi 0, %s244
      %s246 = sphi 0, %s244
      %s247 = sphi 0, %s246
      %s261 = sphi 0, %s247
      %s265 = sphi 0, %s265
      %s267 = sphi 0, %s265
      %s268 = sphi 0, %s267
      %s282 = sphi 0, %s268
      %s286 = sphi 0, %s286
      %s288 = sphi 0, %s286
      %s289 = sphi 0, %s288
      %s303 = sphi 0, %s289
      %s307 = sphi 0, %s307
      %s309 = sphi 0, %s307
      %s310 = sphi 0, %s309
      %s324 = sphi 0, %s310
      %s328 = sphi 0, %s328
      %s330 = sphi 0, %s328
      %s331 = sphi 0, %s330
      %s345 = sphi 0, %s331
      %s349 = sphi 0, %s349
      %s351 = sphi 0, %s349
      %s352 = sphi 0, %s351
      %s366 = sphi 0, %s352
      %s370 = sphi 0, %s370
      %s372 = sphi 0, %s370
      %s373 = sphi 0, %s372
      %s387 = sphi 0, %s373
      %s391 = sphi 0, %s391
      %s393 = sphi 0, %s391
      %s394 = sphi 0, %s393
      %s408 = sphi 0, %s394
      %s412 = sphi 0, %s412
      %s414 = sphi 0, %s412
      %s415 = sphi 0, %s414
      %s429 = sphi 0, %s415
      %s435 = sphi 0, %s437
      %s438 = sphi 0, %s435
      %s439 = sphi 0, %s438
      %s455 = sphi 0, %s439
      %s461 = sphi 0, %s463
      %s464 = sphi 0, %s461
      %s465 = sphi 0, %s464
      %s481 = sphi 0, %s465
    $region4: #{tpu_custom_call.1} parent=1 // loop_header_branch
      %35 = sbr.rel (%p33) target = $region8
    $region5: #{tpu_custom_call.1} parent=1 // loop_body
      %s37 = ssub.s32 %s32, 1
      %s38 = ssub.s32 %s32, 2
      %s39 = sadd.s32 %s32, 1
      %s40 = ssub.s32 %s32, %s39
      %p41 = scmp.eq.s32.totalorder %s40, 0
      %s43 = sadd.s32 %s42, 1
      %s44 = scalar_select %p41, %s42, %s43
      %p47 = pneg %p41
      %p48 = scmp.eq.s32.totalorder %s32, 1
      %p49 = por %p47, %p48
      %p50 = scmp.ne.s32.totalorder %s42, %s45
      %p51 = scmp.eq.s32.totalorder %s32, 0
      %p52 = por %p50, %p51
      %p53 = scmp.ne.s32.totalorder %s42, %s45
      %p54 = scmp.eq.s32.totalorder %s37, 1
      %p55 = por %p53, %p54
      %p56 = scmp.ne.s32.totalorder %s45, %s46
      %p57 = scmp.eq.s32.totalorder %s37, 0
      %p58 = por %p56, %p57
      %p59 = scmp.ne.s32.totalorder %s45, %s46
      %p60 = scmp.eq.s32.totalorder %s38, 1
      %p61 = por %p59, %p60
      %p63 = scmp.ne.s32.totalorder %s46, %s62
      %p64 = scmp.eq.s32.totalorder %s38, 0
      %p65 = por %p63, %p64
      %s66 = ssub.s32 %s32, %s39
      %p67 = scmp.eq.s32.totalorder %s66, 0
      %s69 = sadd.s32 %s68, 1
      %s70 = scalar_select %p67, %s68, %s69
      %p73 = pneg %p67
      %p74 = scmp.eq.s32.totalorder %s32, 1
      %p75 = por %p73, %p74
      %p76 = scmp.ne.s32.totalorder %s68, %s71
      %p77 = scmp.eq.s32.totalorder %s32, 0
      %p78 = por %p76, %p77
      %p79 = scmp.ne.s32.totalorder %s68, %s71
      %p80 = scmp.eq.s32.totalorder %s37, 1
      %p81 = por %p79, %p80
      %p82 = scmp.ne.s32.totalorder %s71, %s72
      %p83 = scmp.eq.s32.totalorder %s37, 0
      %p84 = por %p82, %p83
      %p85 = scmp.ne.s32.totalorder %s71, %s72
      %p86 = scmp.eq.s32.totalorder %s38, 1
      %p87 = por %p85, %p86
      %p89 = scmp.ne.s32.totalorder %s72, %s88
      %p90 = scmp.eq.s32.totalorder %s38, 0
      %p91 = por %p89, %p90
      %s92 = ssub.s32 %s32, %s39
      %p93 = scmp.eq.s32.totalorder %s92, 0
      %s95 = sadd.s32 %s94, 1
      %s96 = scalar_select %p93, %s94, %s95
      %p99 = pneg %p93
      %p100 = scmp.eq.s32.totalorder %s32, 1
      %p101 = por %p99, %p100
      %p102 = scmp.ne.s32.totalorder %s94, %s97
      %p103 = scmp.eq.s32.totalorder %s32, 0
      %p104 = por %p102, %p103
      %p105 = scmp.ne.s32.totalorder %s94, %s97
      %p106 = scmp.eq.s32.totalorder %s37, 1
      %p107 = por %p105, %p106
      %p108 = scmp.ne.s32.totalorder %s97, %s98
      %p109 = scmp.eq.s32.totalorder %s37, 0
      %p110 = por %p108, %p109
      %p111 = scmp.ne.s32.totalorder %s97, %s98
      %p112 = scmp.eq.s32.totalorder %s38, 1
      %p113 = por %p111, %p112
      %p115 = scmp.ne.s32.totalorder %s98, %s114
      %p116 = scmp.eq.s32.totalorder %s38, 0
      %p117 = por %p115, %p116
      %s119 = sadd.s32 %s118, 1
      %p122 = scmp.eq.s32.totalorder %s32, 1
      %p123 = scmp.ne.s32.totalorder %s118, %s120
      %p124 = scmp.eq.s32.totalorder %s32, 0
      %p125 = por %p123, %p124
      %p126 = scmp.ne.s32.totalorder %s118, %s120
      %p127 = scmp.eq.s32.totalorder %s37, 1
      %p128 = por %p126, %p127
      %p129 = scmp.ne.s32.totalorder %s120, %s121
      %p130 = scmp.eq.s32.totalorder %s37, 0
      %p131 = por %p129, %p130
      %p132 = scmp.ne.s32.totalorder %s120, %s121
      %p133 = scmp.eq.s32.totalorder %s38, 1
      %p134 = por %p132, %p133
      %p136 = scmp.ne.s32.totalorder %s121, %s135
      %p137 = scmp.eq.s32.totalorder %s38, 0
      %p138 = por %p136, %p137
      %s140 = sadd.s32 %s139, 1
      %p143 = scmp.eq.s32.totalorder %s32, 1
      %p144 = scmp.ne.s32.totalorder %s139, %s141
      %p145 = scmp.eq.s32.totalorder %s32, 0
      %p146 = por %p144, %p145
      %p147 = scmp.ne.s32.totalorder %s139, %s141
      %p148 = scmp.eq.s32.totalorder %s37, 1
      %p149 = por %p147, %p148
      %p150 = scmp.ne.s32.totalorder %s141, %s142
      %p151 = scmp.eq.s32.totalorder %s37, 0
      %p152 = por %p150, %p151
      %p153 = scmp.ne.s32.totalorder %s141, %s142
      %p154 = scmp.eq.s32.totalorder %s38, 1
      %p155 = por %p153, %p154
      %p157 = scmp.ne.s32.totalorder %s142, %s156
      %p158 = scmp.eq.s32.totalorder %s38, 0
      %p159 = por %p157, %p158
      %s161 = sadd.s32 %s160, 1
      %p164 = scmp.eq.s32.totalorder %s32, 1
      %p165 = scmp.ne.s32.totalorder %s160, %s162
      %p166 = scmp.eq.s32.totalorder %s32, 0
      %p167 = por %p165, %p166
      %p168 = scmp.ne.s32.totalorder %s160, %s162
      %p169 = scmp.eq.s32.totalorder %s37, 1
      %p170 = por %p168, %p169
      %p171 = scmp.ne.s32.totalorder %s162, %s163
      %p172 = scmp.eq.s32.totalorder %s37, 0
      %p173 = por %p171, %p172
      %p174 = scmp.ne.s32.totalorder %s162, %s163
      %p175 = scmp.eq.s32.totalorder %s38, 1
      %p176 = por %p174, %p175
      %p178 = scmp.ne.s32.totalorder %s163, %s177
      %p179 = scmp.eq.s32.totalorder %s38, 0
      %p180 = por %p178, %p179
      %s182 = sadd.s32 %s181, 1
      %p185 = scmp.eq.s32.totalorder %s32, 1
      %p186 = scmp.ne.s32.totalorder %s181, %s183
      %p187 = scmp.eq.s32.totalorder %s32, 0
      %p188 = por %p186, %p187
      %p189 = scmp.ne.s32.totalorder %s181, %s183
      %p190 = scmp.eq.s32.totalorder %s37, 1
      %p191 = por %p189, %p190
      %p192 = scmp.ne.s32.totalorder %s183, %s184
      %p193 = scmp.eq.s32.totalorder %s37, 0
      %p194 = por %p192, %p193
      %p195 = scmp.ne.s32.totalorder %s183, %s184
      %p196 = scmp.eq.s32.totalorder %s38, 1
      %p197 = por %p195, %p196
      %p199 = scmp.ne.s32.totalorder %s184, %s198
      %p200 = scmp.eq.s32.totalorder %s38, 0
      %p201 = por %p199, %p200
      %s203 = sadd.s32 %s202, 1
      %p206 = scmp.eq.s32.totalorder %s32, 1
      %p207 = scmp.ne.s32.totalorder %s202, %s204
      %p208 = scmp.eq.s32.totalorder %s32, 0
      %p209 = por %p207, %p208
      %p210 = scmp.ne.s32.totalorder %s202, %s204
      %p211 = scmp.eq.s32.totalorder %s37, 1
      %p212 = por %p210, %p211
      %p213 = scmp.ne.s32.totalorder %s204, %s205
      %p214 = scmp.eq.s32.totalorder %s37, 0
      %p215 = por %p213, %p214
      %p216 = scmp.ne.s32.totalorder %s204, %s205
      %p217 = scmp.eq.s32.totalorder %s38, 1
      %p218 = por %p216, %p217
      %p220 = scmp.ne.s32.totalorder %s205, %s219
      %p221 = scmp.eq.s32.totalorder %s38, 0
      %p222 = por %p220, %p221
      %s224 = sadd.s32 %s223, 1
      %p227 = scmp.eq.s32.totalorder %s32, 1
      %p228 = scmp.ne.s32.totalorder %s223, %s225
      %p229 = scmp.eq.s32.totalorder %s32, 0
      %p230 = por %p228, %p229
      %p231 = scmp.ne.s32.totalorder %s223, %s225
      %p232 = scmp.eq.s32.totalorder %s37, 1
      %p233 = por %p231, %p232
      %p234 = scmp.ne.s32.totalorder %s225, %s226
      %p235 = scmp.eq.s32.totalorder %s37, 0
      %p236 = por %p234, %p235
      %p237 = scmp.ne.s32.totalorder %s225, %s226
      %p238 = scmp.eq.s32.totalorder %s38, 1
      %p239 = por %p237, %p238
      %p241 = scmp.ne.s32.totalorder %s226, %s240
      %p242 = scmp.eq.s32.totalorder %s38, 0
      %p243 = por %p241, %p242
      %s245 = sadd.s32 %s244, 1
      %p248 = scmp.eq.s32.totalorder %s32, 1
      %p249 = scmp.ne.s32.totalorder %s244, %s246
      %p250 = scmp.eq.s32.totalorder %s32, 0
      %p251 = por %p249, %p250
      %p252 = scmp.ne.s32.totalorder %s244, %s246
      %p253 = scmp.eq.s32.totalorder %s37, 1
      %p254 = por %p252, %p253
      %p255 = scmp.ne.s32.totalorder %s246, %s247
      %p256 = scmp.eq.s32.totalorder %s37, 0
      %p257 = por %p255, %p256
      %p258 = scmp.ne.s32.totalorder %s246, %s247
      %p259 = scmp.eq.s32.totalorder %s38, 1
      %p260 = por %p258, %p259
      %p262 = scmp.ne.s32.totalorder %s247, %s261
      %p263 = scmp.eq.s32.totalorder %s38, 0
      %p264 = por %p262, %p263
      %s266 = sadd.s32 %s265, 1
      %p269 = scmp.eq.s32.totalorder %s32, 1
      %p270 = scmp.ne.s32.totalorder %s265, %s267
      %p271 = scmp.eq.s32.totalorder %s32, 0
      %p272 = por %p270, %p271
      %p273 = scmp.ne.s32.totalorder %s265, %s267
      %p274 = scmp.eq.s32.totalorder %s37, 1
      %p275 = por %p273, %p274
      %p276 = scmp.ne.s32.totalorder %s267, %s268
      %p277 = scmp.eq.s32.totalorder %s37, 0
      %p278 = por %p276, %p277
      %p279 = scmp.ne.s32.totalorder %s267, %s268
      %p280 = scmp.eq.s32.totalorder %s38, 1
      %p281 = por %p279, %p280
      %p283 = scmp.ne.s32.totalorder %s268, %s282
      %p284 = scmp.eq.s32.totalorder %s38, 0
      %p285 = por %p283, %p284
      %s287 = sadd.s32 %s286, 1
      %p290 = scmp.eq.s32.totalorder %s32, 1
      %p291 = scmp.ne.s32.totalorder %s286, %s288
      %p292 = scmp.eq.s32.totalorder %s32, 0
      %p293 = por %p291, %p292
      %p294 = scmp.ne.s32.totalorder %s286, %s288
      %p295 = scmp.eq.s32.totalorder %s37, 1
      %p296 = por %p294, %p295
      %p297 = scmp.ne.s32.totalorder %s288, %s289
      %p298 = scmp.eq.s32.totalorder %s37, 0
      %p299 = por %p297, %p298
      %p300 = scmp.ne.s32.totalorder %s288, %s289
      %p301 = scmp.eq.s32.totalorder %s38, 1
      %p302 = por %p300, %p301
      %p304 = scmp.ne.s32.totalorder %s289, %s303
      %p305 = scmp.eq.s32.totalorder %s38, 0
      %p306 = por %p304, %p305
      %s308 = sadd.s32 %s307, 1
      %p311 = scmp.eq.s32.totalorder %s32, 1
      %p312 = scmp.ne.s32.totalorder %s307, %s309
      %p313 = scmp.eq.s32.totalorder %s32, 0
      %p314 = por %p312, %p313
      %p315 = scmp.ne.s32.totalorder %s307, %s309
      %p316 = scmp.eq.s32.totalorder %s37, 1
      %p317 = por %p315, %p316
      %p318 = scmp.ne.s32.totalorder %s309, %s310
      %p319 = scmp.eq.s32.totalorder %s37, 0
      %p320 = por %p318, %p319
      %p321 = scmp.ne.s32.totalorder %s309, %s310
      %p322 = scmp.eq.s32.totalorder %s38, 1
      %p323 = por %p321, %p322
      %p325 = scmp.ne.s32.totalorder %s310, %s324
      %p326 = scmp.eq.s32.totalorder %s38, 0
      %p327 = por %p325, %p326
      %s329 = sadd.s32 %s328, 1
      %p332 = scmp.eq.s32.totalorder %s32, 1
      %p333 = scmp.ne.s32.totalorder %s328, %s330
      %p334 = scmp.eq.s32.totalorder %s32, 0
      %p335 = por %p333, %p334
      %p336 = scmp.ne.s32.totalorder %s328, %s330
      %p337 = scmp.eq.s32.totalorder %s37, 1
      %p338 = por %p336, %p337
      %p339 = scmp.ne.s32.totalorder %s330, %s331
      %p340 = scmp.eq.s32.totalorder %s37, 0
      %p341 = por %p339, %p340
      %p342 = scmp.ne.s32.totalorder %s330, %s331
      %p343 = scmp.eq.s32.totalorder %s38, 1
      %p344 = por %p342, %p343
      %p346 = scmp.ne.s32.totalorder %s331, %s345
      %p347 = scmp.eq.s32.totalorder %s38, 0
      %p348 = por %p346, %p347
      %s350 = sadd.s32 %s349, 1
      %p353 = scmp.eq.s32.totalorder %s32, 1
      %p354 = scmp.ne.s32.totalorder %s349, %s351
      %p355 = scmp.eq.s32.totalorder %s32, 0
      %p356 = por %p354, %p355
      %p357 = scmp.ne.s32.totalorder %s349, %s351
      %p358 = scmp.eq.s32.totalorder %s37, 1
      %p359 = por %p357, %p358
      %p360 = scmp.ne.s32.totalorder %s351, %s352
      %p361 = scmp.eq.s32.totalorder %s37, 0
      %p362 = por %p360, %p361
      %p363 = scmp.ne.s32.totalorder %s351, %s352
      %p364 = scmp.eq.s32.totalorder %s38, 1
      %p365 = por %p363, %p364
      %p367 = scmp.ne.s32.totalorder %s352, %s366
      %p368 = scmp.eq.s32.totalorder %s38, 0
      %p369 = por %p367, %p368
      %s371 = sadd.s32 %s370, 1
      %p374 = scmp.eq.s32.totalorder %s32, 1
      %p375 = scmp.ne.s32.totalorder %s370, %s372
      %p376 = scmp.eq.s32.totalorder %s32, 0
      %p377 = por %p375, %p376
      %p378 = scmp.ne.s32.totalorder %s370, %s372
      %p379 = scmp.eq.s32.totalorder %s37, 1
      %p380 = por %p378, %p379
      %p381 = scmp.ne.s32.totalorder %s372, %s373
      %p382 = scmp.eq.s32.totalorder %s37, 0
      %p383 = por %p381, %p382
      %p384 = scmp.ne.s32.totalorder %s372, %s373
      %p385 = scmp.eq.s32.totalorder %s38, 1
      %p386 = por %p384, %p385
      %p388 = scmp.ne.s32.totalorder %s373, %s387
      %p389 = scmp.eq.s32.totalorder %s38, 0
      %p390 = por %p388, %p389
      %s392 = sadd.s32 %s391, 1
      %p395 = scmp.eq.s32.totalorder %s32, 1
      %p396 = scmp.ne.s32.totalorder %s391, %s393
      %p397 = scmp.eq.s32.totalorder %s32, 0
      %p398 = por %p396, %p397
      %p399 = scmp.ne.s32.totalorder %s391, %s393
      %p400 = scmp.eq.s32.totalorder %s37, 1
      %p401 = por %p399, %p400
      %p402 = scmp.ne.s32.totalorder %s393, %s394
      %p403 = scmp.eq.s32.totalorder %s37, 0
      %p404 = por %p402, %p403
      %p405 = scmp.ne.s32.totalorder %s393, %s394
      %p406 = scmp.eq.s32.totalorder %s38, 1
      %p407 = por %p405, %p406
      %p409 = scmp.ne.s32.totalorder %s394, %s408
      %p410 = scmp.eq.s32.totalorder %s38, 0
      %p411 = por %p409, %p410
      %s413 = sadd.s32 %s412, 1
      %p416 = scmp.eq.s32.totalorder %s32, 1
      %p417 = scmp.ne.s32.totalorder %s412, %s414
      %p418 = scmp.eq.s32.totalorder %s32, 0
      %p419 = por %p417, %p418
      %p420 = scmp.ne.s32.totalorder %s412, %s414
      %p421 = scmp.eq.s32.totalorder %s37, 1
      %p422 = por %p420, %p421
      %p423 = scmp.ne.s32.totalorder %s414, %s415
      %p424 = scmp.eq.s32.totalorder %s37, 0
      %p425 = por %p423, %p424
      %p426 = scmp.ne.s32.totalorder %s414, %s415
      %p427 = scmp.eq.s32.totalorder %s38, 1
      %p428 = por %p426, %p427
      %p430 = scmp.ne.s32.totalorder %s415, %s429
      %p431 = scmp.eq.s32.totalorder %s38, 0
      %p432 = por %p430, %p431
      %s433 = ssub.s32 %s32, %s39
      %p434 = scmp.eq.s32.totalorder %s433, 0
      %s436 = sadd.s32 %s435, 1
      %s437 = scalar_select %p434, %s435, %s436
      %p440 = pneg %p434
      %p441 = scmp.eq.s32.totalorder %s32, 1
      %p442 = por %p440, %p441
      %p443 = scmp.ne.s32.totalorder %s435, %s438
      %p444 = scmp.eq.s32.totalorder %s32, 0
      %p445 = por %p443, %p444
      %p446 = scmp.ne.s32.totalorder %s435, %s438
      %p447 = scmp.eq.s32.totalorder %s37, 1
      %p448 = por %p446, %p447
      %p449 = scmp.ne.s32.totalorder %s438, %s439
      %p450 = scmp.eq.s32.totalorder %s37, 0
      %p451 = por %p449, %p450
      %p452 = scmp.ne.s32.totalorder %s438, %s439
      %p453 = scmp.eq.s32.totalorder %s38, 1
      %p454 = por %p452, %p453
      %p456 = scmp.ne.s32.totalorder %s439, %s455
      %p457 = scmp.eq.s32.totalorder %s38, 0
      %p458 = por %p456, %p457
      %s459 = ssub.s32 %s32, %s39
      %p460 = scmp.eq.s32.totalorder %s459, 0
      %s462 = sadd.s32 %s461, 1
      %s463 = scalar_select %p460, %s461, %s462
      %p466 = pneg %p460
      %p467 = scmp.eq.s32.totalorder %s32, 1
      %p468 = por %p466, %p467
      %p469 = scmp.ne.s32.totalorder %s461, %s464
      %p470 = scmp.eq.s32.totalorder %s32, 0
      %p471 = por %p469, %p470
      %p472 = scmp.ne.s32.totalorder %s461, %s464
      %p473 = scmp.eq.s32.totalorder %s37, 1
      %p474 = por %p472, %p473
      %p475 = scmp.ne.s32.totalorder %s464, %s465
      %p476 = scmp.eq.s32.totalorder %s37, 0
      %p477 = por %p475, %p476
      %p478 = scmp.ne.s32.totalorder %s464, %s465
      %p479 = scmp.eq.s32.totalorder %s38, 1
      %p480 = por %p478, %p479
      %p482 = scmp.ne.s32.totalorder %s465, %s481
      %p483 = scmp.eq.s32.totalorder %s38, 0
      %p484 = por %p482, %p483
      %p485 = scmp.le.s32.totalorder 1, %s32
      %p486 = scmp.lt.s32.totalorder %s32, 3
      %p487 = pnand %p485, %p486
      %p488 = pneg %p487
      // Predicated region
      $region9: #{tpu_custom_call.1} parent=5 // pred_check
        _
      $region10: #{tpu_custom_call.1} parent=5 // pred_check_branch
        %490 = sbr.rel (%p487) target = $region12
      $region11: #{tpu_custom_call.1} parent=5 // pred_region
        %s491 = ssub.s32 %s32, 1
        // Predicated region
        $region13: #{tpu_custom_call.1} parent=11 // pred_check
          %p492 = pneg %p131
        $region14: #{tpu_custom_call.1} parent=11 // pred_check_branch
          %494 = sbr.rel (%p492) target = $region16
        $region15: #{tpu_custom_call.1} parent=11 // pred_region
          _
        $region16: #{tpu_custom_call.1} parent=11 // pred_fallthru
          _
        // Predicated region
        $region17: #{tpu_custom_call.1} parent=11 // pred_check
          %p495 = pneg %p152
        $region18: #{tpu_custom_call.1} parent=11 // pred_check_branch
          %497 = sbr.rel (%p495) target = $region20
        $region19: #{tpu_custom_call.1} parent=11 // pred_region
          _
        $region20: #{tpu_custom_call.1} parent=11 // pred_fallthru
          _
        // Predicated region
        $region21: #{tpu_custom_call.1} parent=11 // pred_check
          %p498 = pneg %p173
        $region22: #{tpu_custom_call.1} parent=11 // pred_check_branch
          %500 = sbr.rel (%p498) target = $region24
        $region23: #{tpu_custom_call.1} parent=11 // pred_region
          _
        $region24: #{tpu_custom_call.1} parent=11 // pred_fallthru
          _
        // Predicated region
        $region25: #{tpu_custom_call.1} parent=11 // pred_check
          %p501 = pneg %p194
        $region26: #{tpu_custom_call.1} parent=11 // pred_check_branch
          %503 = sbr.rel (%p501) target = $region28
        $region27: #{tpu_custom_call.1} parent=11 // pred_region
          _
        $region28: #{tpu_custom_call.1} parent=11 // pred_fallthru
          _
        // Predicated region
        $region29: #{tpu_custom_call.1} parent=11 // pred_check
          %p504 = pneg %p215
        $region30: #{tpu_custom_call.1} parent=11 // pred_check_branch
          %506 = sbr.rel (%p504) target = $region32
        $region31: #{tpu_custom_call.1} parent=11 // pred_region
          _
        $region32: #{tpu_custom_call.1} parent=11 // pred_fallthru
          _
        // Predicated region
        $region33: #{tpu_custom_call.1} parent=11 // pred_check
          %p507 = pneg %p236
        $region34: #{tpu_custom_call.1} parent=11 // pred_check_branch
          %509 = sbr.rel (%p507) target = $region36
        $region35: #{tpu_custom_call.1} parent=11 // pred_region
          _
        $region36: #{tpu_custom_call.1} parent=11 // pred_fallthru
          _
        // Predicated region
        $region37: #{tpu_custom_call.1} parent=11 // pred_check
          %p510 = pneg %p257
        $region38: #{tpu_custom_call.1} parent=11 // pred_check_branch
          %512 = sbr.rel (%p510) target = $region40
        $region39: #{tpu_custom_call.1} parent=11 // pred_region
          _
        $region40: #{tpu_custom_call.1} parent=11 // pred_fallthru
          _
        // Predicated region
        $region41: #{tpu_custom_call.1} parent=11 // pred_check
          %p513 = pneg %p278
        $region42: #{tpu_custom_call.1} parent=11 // pred_check_branch
          %515 = sbr.rel (%p513) target = $region44
        $region43: #{tpu_custom_call.1} parent=11 // pred_region
          _
        $region44: #{tpu_custom_call.1} parent=11 // pred_fallthru
          _
        // Predicated region
        $region45: #{tpu_custom_call.1} parent=11 // pred_check
          %p516 = pneg %p299
        $region46: #{tpu_custom_call.1} parent=11 // pred_check_branch
          %518 = sbr.rel (%p516) target = $region48
        $region47: #{tpu_custom_call.1} parent=11 // pred_region
          _
        $region48: #{tpu_custom_call.1} parent=11 // pred_fallthru
          _
        // Predicated region
        $region49: #{tpu_custom_call.1} parent=11 // pred_check
          %p519 = pneg %p320
        $region50: #{tpu_custom_call.1} parent=11 // pred_check_branch
          %521 = sbr.rel (%p519) target = $region52
        $region51: #{tpu_custom_call.1} parent=11 // pred_region
          _
        $region52: #{tpu_custom_call.1} parent=11 // pred_fallthru
          _
        // Predicated region
        $region53: #{tpu_custom_call.1} parent=11 // pred_check
          %p522 = pneg %p341
        $region54: #{tpu_custom_call.1} parent=11 // pred_check_branch
          %524 = sbr.rel (%p522) target = $region56
        $region55: #{tpu_custom_call.1} parent=11 // pred_region
          _
        $region56: #{tpu_custom_call.1} parent=11 // pred_fallthru
          _
        // Predicated region
        $region57: #{tpu_custom_call.1} parent=11 // pred_check
          %p525 = pneg %p362
        $region58: #{tpu_custom_call.1} parent=11 // pred_check_branch
          %527 = sbr.rel (%p525) target = $region60
        $region59: #{tpu_custom_call.1} parent=11 // pred_region
          _
        $region60: #{tpu_custom_call.1} parent=11 // pred_fallthru
          _
        // Predicated region
        $region61: #{tpu_custom_call.1} parent=11 // pred_check
          %p528 = pneg %p383
        $region62: #{tpu_custom_call.1} parent=11 // pred_check_branch
          %530 = sbr.rel (%p528) target = $region64
        $region63: #{tpu_custom_call.1} parent=11 // pred_region
          _
        $region64: #{tpu_custom_call.1} parent=11 // pred_fallthru
          _
        // Predicated region
        $region65: #{tpu_custom_call.1} parent=11 // pred_check
          %p531 = pneg %p404
        $region66: #{tpu_custom_call.1} parent=11 // pred_check_branch
          %533 = sbr.rel (%p531) target = $region68
        $region67: #{tpu_custom_call.1} parent=11 // pred_region
          _
        $region68: #{tpu_custom_call.1} parent=11 // pred_fallthru
          _
        // Predicated region
        $region69: #{tpu_custom_call.1} parent=11 // pred_check
          %p534 = pneg %p425
        $region70: #{tpu_custom_call.1} parent=11 // pred_check_branch
          %536 = sbr.rel (%p534) target = $region72
        $region71: #{tpu_custom_call.1} parent=11 // pred_region
          _
        $region72: #{tpu_custom_call.1} parent=11 // pred_fallthru
          _
      $region12: #{tpu_custom_call.1} parent=5 // pred_fallthru
        _
      %p537 = scmp.lt.s32.totalorder %s32, 2
      // Predicated region
      $region73: #{tpu_custom_call.1} parent=5 // pred_check
        %p538 = pneg %p537
      $region74: #{tpu_custom_call.1} parent=5 // pred_check_branch
        %540 = sbr.rel (%p538) target = $region76
      $region75: #{tpu_custom_call.1} parent=5 // pred_region
        // Predicated region
        $region77: #{tpu_custom_call.1} parent=75 // pred_check
          %p541 = pneg %p52
        $region78: #{tpu_custom_call.1} parent=75 // pred_check_branch
          %543 = sbr.rel (%p541) target = $region80
        $region79: #{tpu_custom_call.1} parent=75 // pred_region
          %p544 = scmp.lt.s32.totalorder %s32, 1
          %s545 = scalar_select %p544, %s32, 1
          %s546 = smul.addr %s545, 8
          %s547 = scalar_lea.vmem %s0, %s546
        $region80: #{tpu_custom_call.1} parent=75 // pred_fallthru
          _
        // Predicated region
        $region81: #{tpu_custom_call.1} parent=75 // pred_check
          %p548 = pneg %p78
        $region82: #{tpu_custom_call.1} parent=75 // pred_check_branch
          %550 = sbr.rel (%p548) target = $region84
        $region83: #{tpu_custom_call.1} parent=75 // pred_region
          %p551 = scmp.lt.s32.totalorder %s32, 1
          %s552 = scalar_select %p551, %s32, 1
          %s553 = smul.addr %s552, 8
          %s554 = scalar_lea.vmem %s1, %s553
        $region84: #{tpu_custom_call.1} parent=75 // pred_fallthru
          _
        // Predicated region
        $region85: #{tpu_custom_call.1} parent=75 // pred_check
          %p555 = pneg %p104
        $region86: #{tpu_custom_call.1} parent=75 // pred_check_branch
          %557 = sbr.rel (%p555) target = $region88
        $region87: #{tpu_custom_call.1} parent=75 // pred_region
          %p558 = scmp.lt.s32.totalorder %s32, 1
          %s559 = scalar_select %p558, %s32, 1
          %s560 = smul.addr %s559, 8
          %s561 = scalar_lea.vmem %s2, %s560
        $region88: #{tpu_custom_call.1} parent=75 // pred_fallthru
          _
      $region76: #{tpu_custom_call.1} parent=5 // pred_fallthru
        _
      %p562 = scmp.le.s32.totalorder 1, %s32
      %p563 = scmp.lt.s32.totalorder %s32, 3
      %p564 = pnand %p562, %p563
      %p565 = pneg %p564
      // Predicated region
      $region89: #{tpu_custom_call.1} parent=5 // pred_check
        _
      $region90: #{tpu_custom_call.1} parent=5 // pred_check_branch
        %567 = sbr.rel (%p564) target = $region92
      $region91: #{tpu_custom_call.1} parent=5 // pred_region
        %s568 = ssub.s32 %s32, 1
        %p569 = scmp.lt.s32.totalorder %s37, 1
        %s570 = scalar_select %p569, %s37, 1
        %s571 = smul.addr %s570, 8
        %s572 = scalar_lea.vmem %s0, %s571
        %p573 = pneg %p58
        %p574 = pneg %p55
        %p575 = scmp.lt.s32.totalorder %s37, 1
        %s576 = scalar_select %p575, %s37, 1
        %s577 = smul.addr %s576, 8
        %s578 = scalar_lea.vmem %s1, %s577
        %p579 = pneg %p84
        %p580 = pneg %p81
        %p581 = scmp.lt.s32.totalorder %s37, 1
        %s582 = scalar_select %p581, %s37, 1
        %s583 = smul.addr %s582, 8
        %s584 = scalar_lea.vmem %s2, %s583
        %p585 = pneg %p110
        %p586 = pneg %p107
        %p587 = pneg %p131
        %p588 = pneg %p128
        %p589 = pneg %p152
        %p590 = pneg %p149
        %p591 = pneg %p173
        %p592 = pneg %p170
        %p593 = pneg %p194
        %p594 = pneg %p191
        %p595 = pneg %p215
        %p596 = pneg %p212
        %p597 = pneg %p236
        %p598 = pneg %p233
        %p599 = pneg %p257
        %p600 = pneg %p254
        %p601 = pneg %p278
        %p602 = pneg %p275
        %p603 = pneg %p299
        %p604 = pneg %p296
        %p605 = pneg %p320
        %p606 = pneg %p317
        %p607 = pneg %p341
        %p608 = pneg %p338
        %p609 = pneg %p362
        %p610 = pneg %p359
        %p611 = pneg %p383
        %p612 = pneg %p380
        %p613 = pneg %p404
        %p614 = pneg %p401
        %p615 = pneg %p425
        %p616 = pneg %p422
        %p617 = pneg %p451
        %p618 = pneg %p448
        %s619 = sand.u32 %s438, 1
        %s620 = scalar_lea.sflag [#allocation3], %s619
        %s621 = sand.u32 %s438, 1
        %s622 = smul.addr %s621, 8
        %s623 = scalar_lea.vmem [#allocation2], %s622
        %p624 = pneg %p477
        %p625 = pneg %p474
        %s626 = sand.u32 %s464, 1
        %s627 = scalar_lea.sflag [#allocation5], %s626
        %s628 = sand.u32 %s464, 1
        %s629 = smul.addr %s628, 8
        %s630 = scalar_lea.vmem [#allocation4], %s629
        %p631 = scmp.lt.s32.totalorder %s37, 1
        %s632 = scalar_select %p631, %s37, 1
        %s633 = smul.addr %s632, 8
        %s634 = scalar_lea.vmem %s0, %s633
        %p635 = scmp.lt.s32.totalorder %s37, 1
        %s636 = scalar_select %p635, %s37, 1
        %s637 = smul.addr %s636, 8
        %s638 = scalar_lea.vmem %s1, %s637
        %p639 = scmp.lt.s32.totalorder %s37, 1
        %s640 = scalar_select %p639, %s37, 1
        %s641 = smul.addr %s640, 8
        %s642 = scalar_lea.vmem %s2, %s641
        %v643 = vld [vmem:[%s634] sm:$0xff]
        %v644 = vld [vmem:[%s638] sm:$0xff]
        %v645 = vld [vmem:[%s642] sm:$0xff]
        %v646 = vld [vmem:[%s3] sm:$0xff]
        %v647 = vld [vmem:[%s4] sm:$0xff]
        %v648 = vld [vmem:[%s4 + $0x8] sm:$0xff]
        %v649 = vld [vmem:[%s4 + $0x10] sm:$0xff]
        %v650 = vld [vmem:[%s4 + $0x18] sm:$0xff]
        %v651 = vld [vmem:[%s4 + $0x20] sm:$0xff]
        %v652 = vld [vmem:[%s4 + $0x28] sm:$0xff]
        %v653 = vld [vmem:[%s4 + $0x30] sm:$0xff]
        %v654 = vld [vmem:[%s4 + $0x38] sm:$0xff]
        %v655 = vld [vmem:[%s4 + $0x40] sm:$0xff]
        %v656 = vld [vmem:[%s4 + $0x48] sm:$0xff]
        %v657 = vld [vmem:[%s4 + $0x50] sm:$0xff]
        %v658 = vld [vmem:[%s4 + $0x58] sm:$0xff]
        %v659 = vld [vmem:[%s4 + $0x60] sm:$0xff]
        %v660 = vld [vmem:[%s4 + $0x68] sm:$0xff]
        %v661 = vld [vmem:[%s4 + $0x70] sm:$0xff]
        %v662 = vld [vmem:[%s4 + $0x78] sm:$0xff]
        %v663 = vld [vmem:[%s5] sm:$0x1]
        %v664 = vld [vmem:[%s5 + $0x1] sm:$0x1]
        %v665 = vld [vmem:[%s5 + $0x2] sm:$0x1]
        %v666 = vld [vmem:[%s5 + $0x3] sm:$0x1]
        %v667 = vld [vmem:[%s6] sm:$0xff]
        %v668 = vld [vmem:[%s6 + $0x8] sm:$0xff]
        %v669 = vld [vmem:[%s6 + $0x10] sm:$0xff]
        %v670 = vld [vmem:[%s6 + $0x18] sm:$0xff]
        %v671 = vld [vmem:[%s6 + $0x20] sm:$0xff]
        %v672 = vld [vmem:[%s6 + $0x28] sm:$0xff]
        %v673 = vld [vmem:[%s6 + $0x30] sm:$0xff]
        %v674 = vld [vmem:[%s6 + $0x38] sm:$0xff]
        %v675 = vld [vmem:[%s6 + $0x40] sm:$0xff]
        %v676 = vld [vmem:[%s6 + $0x48] sm:$0xff]
        %v677 = vld [vmem:[%s6 + $0x50] sm:$0xff]
        %v678 = vld [vmem:[%s6 + $0x58] sm:$0xff]
        %v679 = vld [vmem:[%s6 + $0x60] sm:$0xff]
        %v680 = vld [vmem:[%s6 + $0x68] sm:$0xff]
        %v681 = vld [vmem:[%s6 + $0x70] sm:$0xff]
        %v682 = vld [vmem:[%s6 + $0x78] sm:$0xff]
        %v683 = vld [vmem:[%s7] sm:$0x1]
        %v684 = vld [vmem:[%s7 + $0x1] sm:$0x1]
        %v685 = vld [vmem:[%s7 + $0x2] sm:$0x1]
        %v686 = vld [vmem:[%s7 + $0x3] sm:$0x1]
        %v687 = vld [vmem:[%s8] sm:$0xff]
        %v688 = vld [vmem:[%s8 + $0x8] sm:$0xff]
        %v689 = vld [vmem:[%s8 + $0x10] sm:$0xff]
        %v690 = vld [vmem:[%s8 + $0x18] sm:$0xff]
        %v691 = vld [vmem:[%s8 + $0x20] sm:$0xff]
        %v692 = vld [vmem:[%s8 + $0x28] sm:$0xff]
        %v693 = vld [vmem:[%s8 + $0x30] sm:$0xff]
        %v694 = vld [vmem:[%s8 + $0x38] sm:$0xff]
        %v695 = vld [vmem:[%s8 + $0x40] sm:$0xff]
        %v696 = vld [vmem:[%s8 + $0x48] sm:$0xff]
        %v697 = vld [vmem:[%s8 + $0x50] sm:$0xff]
        %v698 = vld [vmem:[%s8 + $0x58] sm:$0xff]
        %v699 = vld [vmem:[%s8 + $0x60] sm:$0xff]
        %v700 = vld [vmem:[%s8 + $0x68] sm:$0xff]
        %v701 = vld [vmem:[%s8 + $0x70] sm:$0xff]
        %v702 = vld [vmem:[%s8 + $0x78] sm:$0xff]
        %v703 = vld [vmem:[%s9] sm:$0x1]
        %v704 = vld [vmem:[%s9 + $0x1] sm:$0x1]
        %v705 = vld [vmem:[%s9 + $0x2] sm:$0x1]
        %v706 = vld [vmem:[%s9 + $0x3] sm:$0x1]
        %v707 = vld [vmem:[%s10] sm:$0xff]
        %v708 = vld [vmem:[%s10 + $0x8] sm:$0xff]
        %v709 = vld [vmem:[%s10 + $0x10] sm:$0xff]
        %v710 = vld [vmem:[%s10 + $0x18] sm:$0xff]
        %v711 = vld [vmem:[%s11] sm:$0x1]
        %v712 = vld [vmem:[%s12] sm:$0xff]
        %v713 = vld [vmem:[%s12 + $0x8] sm:$0xff]
        %v714 = vld [vmem:[%s12 + $0x10] sm:$0xff]
        %v715 = vld [vmem:[%s12 + $0x18] sm:$0xff]
        %v716 = vld [vmem:[%s13] sm:$0x1]
        %v717 = vld [vmem:[%s14] sm:$0xff]
        %v718 = vld [vmem:[%s14 + $0x8] sm:$0xff]
        %v719 = vld [vmem:[%s14 + $0x10] sm:$0xff]
        %v720 = vld [vmem:[%s14 + $0x18] sm:$0xff]
        %v721 = vld [vmem:[%s14 + $0x20] sm:$0xff]
        %v722 = vld [vmem:[%s14 + $0x28] sm:$0xff]
        %v723 = vld [vmem:[%s14 + $0x30] sm:$0xff]
        %v724 = vld [vmem:[%s14 + $0x38] sm:$0xff]
        %v725 = vld [vmem:[%s15] sm:$0x1]
        %v726 = vld [vmem:[%s16] sm:$0xff]
        %v727 = vld [vmem:[%s16 + $0x8] sm:$0xff]
        %v728 = vld [vmem:[%s16 + $0x10] sm:$0xff]
        %v729 = vld [vmem:[%s16 + $0x18] sm:$0xff]
        %v730 = vld [vmem:[%s16 + $0x20] sm:$0xff]
        %v731 = vld [vmem:[%s16 + $0x28] sm:$0xff]
        %v732 = vld [vmem:[%s16 + $0x30] sm:$0xff]
        %v733 = vld [vmem:[%s16 + $0x38] sm:$0xff]
        %v734 = vld [vmem:[%s16 + $0x40] sm:$0xff]
        %v735 = vld [vmem:[%s16 + $0x48] sm:$0xff]
        %v736 = vld [vmem:[%s16 + $0x50] sm:$0xff]
        %v737 = vld [vmem:[%s16 + $0x58] sm:$0xff]
        %v738 = vld [vmem:[%s17] sm:$0x1]
        %v743 = vperm.slane %v663, 0
        %v744 = vperm.slane %v664, 0
        %v745 = vperm.slane %v665, 0
        %v746 = vperm.slane %v666, 0
        %vm751 = vcmask 261120
        %v753 = vsel %vm751, %v643, 0
        %755 = vmatpush.msra.mxu0 0.0
        %756 = vmatpush.msra.mxu0 0.0
        %757 = vmatpush.msra.mxu0 0.0
        %758 = vmatpush.msra.mxu0 0.0
        %759 = vmatpush.msra.mxu0 0.0
        %760 = vmatpush.msra.mxu0 0.0
        %761 = vmatpush.msra.mxu0 0.0
        %762 = vmatpush.msra.mxu0 0.0
        %763 = vmatpush.msra.mxu0 0.0
        %764 = vmatpush.msra.mxu0 0.0
        %765 = vmatpush.msra.mxu0 0.0
        %766 = vmatpush.msra.mxu0 0.0
        %767 = vmatpush.msra.mxu0 %v650
        %768 = vmatpush.msra.mxu0 %v649
        %769 = vmatpush.msra.mxu0 %v648
        %770 = vmatpush.msra.mxu0 %v647
        %771 = vmatmul.f32.gmra.mxu0 %v753
        %v772 = vpop.f32.mrf.mxu0
        %v773 = vadd.f32 %v743, %v772
        %774 = vdwg.mxu0
        %775 = vmatpush.msra.mxu0 0.0
        %776 = vmatpush.msra.mxu0 0.0
        %777 = vmatpush.msra.mxu0 0.0
        %778 = vmatpush.msra.mxu0 0.0
        %779 = vmatpush.msra.mxu0 0.0
        %780 = vmatpush.msra.mxu0 0.0
        %781 = vmatpush.msra.mxu0 0.0
        %782 = vmatpush.msra.mxu0 0.0
        %783 = vmatpush.msra.mxu0 0.0
        %784 = vmatpush.msra.mxu0 0.0
        %785 = vmatpush.msra.mxu0 0.0
        %786 = vmatpush.msra.mxu0 0.0
        %787 = vmatpush.msra.mxu0 %v654
        %788 = vmatpush.msra.mxu0 %v653
        %789 = vmatpush.msra.mxu0 %v652
        %790 = vmatpush.msra.mxu0 %v651
        %791 = vmatmul.f32.gmra.mxu0 %v753
        %v792 = vpop.f32.mrf.mxu0
        %v793 = vadd.f32 %v744, %v792
        %794 = vdwg.mxu0
        %795 = vmatpush.msra.mxu0 0.0
        %796 = vmatpush.msra.mxu0 0.0
        %797 = vmatpush.msra.mxu0 0.0
        %798 = vmatpush.msra.mxu0 0.0
        %799 = vmatpush.msra.mxu0 0.0
        %800 = vmatpush.msra.mxu0 0.0
        %801 = vmatpush.msra.mxu0 0.0
        %802 = vmatpush.msra.mxu0 0.0
        %803 = vmatpush.msra.mxu0 0.0
        %804 = vmatpush.msra.mxu0 0.0
        %805 = vmatpush.msra.mxu0 0.0
        %806 = vmatpush.msra.mxu0 0.0
        %807 = vmatpush.msra.mxu0 %v658
        %808 = vmatpush.msra.mxu0 %v657
        %809 = vmatpush.msra.mxu0 %v656
        %810 = vmatpush.msra.mxu0 %v655
        %811 = vmatmul.f32.gmra.mxu0 %v753
        %v812 = vpop.f32.mrf.mxu0
        %v813 = vadd.f32 %v745, %v812
        %814 = vdwg.mxu0
        %815 = vmatpush.msra.mxu0 0.0
        %816 = vmatpush.msra.mxu0 0.0
        %817 = vmatpush.msra.mxu0 0.0
        %818 = vmatpush.msra.mxu0 0.0
        %819 = vmatpush.msra.mxu0 0.0
        %820 = vmatpush.msra.mxu0 0.0
        %821 = vmatpush.msra.mxu0 0.0
        %822 = vmatpush.msra.mxu0 0.0
        %823 = vmatpush.msra.mxu0 0.0
        %824 = vmatpush.msra.mxu0 0.0
        %825 = vmatpush.msra.mxu0 0.0
        %826 = vmatpush.msra.mxu0 0.0
        %827 = vmatpush.msra.mxu0 %v662
        %828 = vmatpush.msra.mxu0 %v661
        %829 = vmatpush.msra.mxu0 %v660
        %830 = vmatpush.msra.mxu0 %v659
        %831 = vmatmul.f32.gmra.mxu0 %v753
        %v832 = vpop.f32.mrf.mxu0
        %v833 = vadd.f32 %v746, %v832
        %834 = vdwg.mxu0
        %v839 = vperm.slane %v683, 0
        %v840 = vperm.slane %v684, 0
        %v841 = vperm.slane %v685, 0
        %v842 = vperm.slane %v686, 0
        %847 = vmatpush.msra.mxu0 0.0
        %848 = vmatpush.msra.mxu0 0.0
        %849 = vmatpush.msra.mxu0 0.0
        %850 = vmatpush.msra.mxu0 0.0
        %851 = vmatpush.msra.mxu0 0.0
        %852 = vmatpush.msra.mxu0 0.0
        %853 = vmatpush.msra.mxu0 0.0
        %854 = vmatpush.msra.mxu0 0.0
        %855 = vmatpush.msra.mxu0 0.0
        %856 = vmatpush.msra.mxu0 0.0
        %857 = vmatpush.msra.mxu0 0.0
        %858 = vmatpush.msra.mxu0 0.0
        %859 = vmatpush.msra.mxu0 %v670
        %860 = vmatpush.msra.mxu0 %v669
        %861 = vmatpush.msra.mxu0 %v668
        %862 = vmatpush.msra.mxu0 %v667
        %863 = vmatmul.f32.gmra.mxu0 %v753
        %v864 = vpop.f32.mrf.mxu0
        %v865 = vadd.f32 %v839, %v864
        %866 = vdwg.mxu0
        %867 = vmatpush.msra.mxu0 0.0
        %868 = vmatpush.msra.mxu0 0.0
        %869 = vmatpush.msra.mxu0 0.0
        %870 = vmatpush.msra.mxu0 0.0
        %871 = vmatpush.msra.mxu0 0.0
        %872 = vmatpush.msra.mxu0 0.0
        %873 = vmatpush.msra.mxu0 0.0
        %874 = vmatpush.msra.mxu0 0.0
        %875 = vmatpush.msra.mxu0 0.0
        %876 = vmatpush.msra.mxu0 0.0
        %877 = vmatpush.msra.mxu0 0.0
        %878 = vmatpush.msra.mxu0 0.0
        %879 = vmatpush.msra.mxu0 %v674
        %880 = vmatpush.msra.mxu0 %v673
        %881 = vmatpush.msra.mxu0 %v672
        %882 = vmatpush.msra.mxu0 %v671
        %883 = vmatmul.f32.gmra.mxu0 %v753
        %v884 = vpop.f32.mrf.mxu0
        %v885 = vadd.f32 %v840, %v884
        %886 = vdwg.mxu0
        %887 = vmatpush.msra.mxu0 0.0
        %888 = vmatpush.msra.mxu0 0.0
        %889 = vmatpush.msra.mxu0 0.0
        %890 = vmatpush.msra.mxu0 0.0
        %891 = vmatpush.msra.mxu0 0.0
        %892 = vmatpush.msra.mxu0 0.0
        %893 = vmatpush.msra.mxu0 0.0
        %894 = vmatpush.msra.mxu0 0.0
        %895 = vmatpush.msra.mxu0 0.0
        %896 = vmatpush.msra.mxu0 0.0
        %897 = vmatpush.msra.mxu0 0.0
        %898 = vmatpush.msra.mxu0 0.0
        %899 = vmatpush.msra.mxu0 %v678
        %900 = vmatpush.msra.mxu0 %v677
        %901 = vmatpush.msra.mxu0 %v676
        %902 = vmatpush.msra.mxu0 %v675
        %903 = vmatmul.f32.gmra.mxu0 %v753
        %v904 = vpop.f32.mrf.mxu0
        %v905 = vadd.f32 %v841, %v904
        %906 = vdwg.mxu0
        %907 = vmatpush.msra.mxu0 0.0
        %908 = vmatpush.msra.mxu0 0.0
        %909 = vmatpush.msra.mxu0 0.0
        %910 = vmatpush.msra.mxu0 0.0
        %911 = vmatpush.msra.mxu0 0.0
        %912 = vmatpush.msra.mxu0 0.0
        %913 = vmatpush.msra.mxu0 0.0
        %914 = vmatpush.msra.mxu0 0.0
        %915 = vmatpush.msra.mxu0 0.0
        %916 = vmatpush.msra.mxu0 0.0
        %917 = vmatpush.msra.mxu0 0.0
        %918 = vmatpush.msra.mxu0 0.0
        %919 = vmatpush.msra.mxu0 %v682
        %920 = vmatpush.msra.mxu0 %v681
        %921 = vmatpush.msra.mxu0 %v680
        %922 = vmatpush.msra.mxu0 %v679
        %923 = vmatmul.f32.gmra.mxu0 %v753
        %v924 = vpop.f32.mrf.mxu0
        %v925 = vadd.f32 %v842, %v924
        %926 = vdwg.mxu0
        %v931 = vperm.slane %v703, 0
        %v932 = vperm.slane %v704, 0
        %v933 = vperm.slane %v705, 0
        %v934 = vperm.slane %v706, 0
        %939 = vmatpush.msra.mxu0 0.0
        %940 = vmatpush.msra.mxu0 0.0
        %941 = vmatpush.msra.mxu0 0.0
        %942 = vmatpush.msra.mxu0 0.0
        %943 = vmatpush.msra.mxu0 0.0
        %944 = vmatpush.msra.mxu0 0.0
        %945 = vmatpush.msra.mxu0 0.0
        %946 = vmatpush.msra.mxu0 0.0
        %947 = vmatpush.msra.mxu0 0.0
        %948 = vmatpush.msra.mxu0 0.0
        %949 = vmatpush.msra.mxu0 0.0
        %950 = vmatpush.msra.mxu0 0.0
        %951 = vmatpush.msra.mxu0 %v690
        %952 = vmatpush.msra.mxu0 %v689
        %953 = vmatpush.msra.mxu0 %v688
        %954 = vmatpush.msra.mxu0 %v687
        %955 = vmatmul.f32.gmra.mxu0 %v753
        %v956 = vpop.f32.mrf.mxu0
        %v957 = vadd.f32 %v931, %v956
        %958 = vdwg.mxu0
        %959 = vmatpush.msra.mxu0 0.0
        %960 = vmatpush.msra.mxu0 0.0
        %961 = vmatpush.msra.mxu0 0.0
        %962 = vmatpush.msra.mxu0 0.0
        %963 = vmatpush.msra.mxu0 0.0
        %964 = vmatpush.msra.mxu0 0.0
        %965 = vmatpush.msra.mxu0 0.0
        %966 = vmatpush.msra.mxu0 0.0
        %967 = vmatpush.msra.mxu0 0.0
        %968 = vmatpush.msra.mxu0 0.0
        %969 = vmatpush.msra.mxu0 0.0
        %970 = vmatpush.msra.mxu0 0.0
        %971 = vmatpush.msra.mxu0 %v694
        %972 = vmatpush.msra.mxu0 %v693
        %973 = vmatpush.msra.mxu0 %v692
        %974 = vmatpush.msra.mxu0 %v691
        %975 = vmatmul.f32.gmra.mxu0 %v753
        %v976 = vpop.f32.mrf.mxu0
        %v977 = vadd.f32 %v932, %v976
        %978 = vdwg.mxu0
        %979 = vmatpush.msra.mxu0 0.0
        %980 = vmatpush.msra.mxu0 0.0
        %981 = vmatpush.msra.mxu0 0.0
        %982 = vmatpush.msra.mxu0 0.0
        %983 = vmatpush.msra.mxu0 0.0
        %984 = vmatpush.msra.mxu0 0.0
        %985 = vmatpush.msra.mxu0 0.0
        %986 = vmatpush.msra.mxu0 0.0
        %987 = vmatpush.msra.mxu0 0.0
        %988 = vmatpush.msra.mxu0 0.0
        %989 = vmatpush.msra.mxu0 0.0
        %990 = vmatpush.msra.mxu0 0.0
        %991 = vmatpush.msra.mxu0 %v698
        %992 = vmatpush.msra.mxu0 %v697
        %993 = vmatpush.msra.mxu0 %v696
        %994 = vmatpush.msra.mxu0 %v695
        %995 = vmatmul.f32.gmra.mxu0 %v753
        %v996 = vpop.f32.mrf.mxu0
        %v997 = vadd.f32 %v933, %v996
        %998 = vdwg.mxu0
        %999 = vmatpush.msra.mxu0 0.0
        %1000 = vmatpush.msra.mxu0 0.0
        %1001 = vmatpush.msra.mxu0 0.0
        %1002 = vmatpush.msra.mxu0 0.0
        %1003 = vmatpush.msra.mxu0 0.0
        %1004 = vmatpush.msra.mxu0 0.0
        %1005 = vmatpush.msra.mxu0 0.0
        %1006 = vmatpush.msra.mxu0 0.0
        %1007 = vmatpush.msra.mxu0 0.0
        %1008 = vmatpush.msra.mxu0 0.0
        %1009 = vmatpush.msra.mxu0 0.0
        %1010 = vmatpush.msra.mxu0 0.0
        %1011 = vmatpush.msra.mxu0 %v702
        %1012 = vmatpush.msra.mxu0 %v701
        %1013 = vmatpush.msra.mxu0 %v700
        %1014 = vmatpush.msra.mxu0 %v699
        %1015 = vmatmul.f32.gmra.mxu0 %v753
        %v1016 = vpop.f32.mrf.mxu0
        %v1017 = vadd.f32 %v934, %v1016
        %1018 = vdwg.mxu0
        %v1019 = vmul.f32 %v773, 0.35355338
        %v1020 = vmul.f32 %v793, 0.35355338
        %v1021 = vmul.f32 %v813, 0.35355338
        %v1022 = vmul.f32 %v833, 0.35355338
        %vm1023 = vcmask 64512
        %v1025 = vsel %vm1023, %v1019, 0
        %v1028 = vsel %vm1023, %v865, 0
        %1030 = vmatpush.xpose.msra.mxu0 0.0
        %1031 = vmatpush.xpose.msra.mxu0 0.0
        %1032 = vmatpush.xpose.msra.mxu0 0.0
        %1033 = vmatpush.xpose.msra.mxu0 0.0
        %1034 = vmatpush.xpose.msra.mxu0 0.0
        %1035 = vmatpush.xpose.msra.mxu0 0.0
        %1036 = vmatpush.xpose.msra.mxu0 0.0
        %1037 = vmatpush.xpose.msra.mxu0 0.0
        %1038 = vmatpush.xpose.msra.mxu0 0.0
        %1039 = vmatpush.xpose.msra.mxu0 0.0
        %1040 = vmatpush.xpose.msra.mxu0 0.0
        %1041 = vmatpush.xpose.msra.mxu0 0.0
        %1042 = vmatpush.xpose.msra.mxu0 0.0
        %1043 = vmatpush.xpose.msra.mxu0 0.0
        %1044 = vmatpush.xpose.msra.mxu0 0.0
        %1045 = vmatpush.xpose.msra.mxu0 %v1028
        %1046 = vmatmul.f32.gmra.mxu0 %v1025
        %v1047 = vpop.f32.mrf.mxu0
        %v1048 = vadd.f32 0.0, %v1047
        %1049 = vdwg.mxu0
        %v1051 = vsel %vm1023, %v1020, 0
        %v1054 = vsel %vm1023, %v885, 0
        %1056 = vmatpush.xpose.msra.mxu0 0.0
        %1057 = vmatpush.xpose.msra.mxu0 0.0
        %1058 = vmatpush.xpose.msra.mxu0 0.0
        %1059 = vmatpush.xpose.msra.mxu0 0.0
        %1060 = vmatpush.xpose.msra.mxu0 0.0
        %1061 = vmatpush.xpose.msra.mxu0 0.0
        %1062 = vmatpush.xpose.msra.mxu0 0.0
        %1063 = vmatpush.xpose.msra.mxu0 0.0
        %1064 = vmatpush.xpose.msra.mxu0 0.0
        %1065 = vmatpush.xpose.msra.mxu0 0.0
        %1066 = vmatpush.xpose.msra.mxu0 0.0
        %1067 = vmatpush.xpose.msra.mxu0 0.0
        %1068 = vmatpush.xpose.msra.mxu0 0.0
        %1069 = vmatpush.xpose.msra.mxu0 0.0
        %1070 = vmatpush.xpose.msra.mxu0 0.0
        %1071 = vmatpush.xpose.msra.mxu0 %v1054
        %1072 = vmatmul.f32.gmra.mxu0 %v1051
        %v1073 = vpop.f32.mrf.mxu0
        %v1074 = vadd.f32 0.0, %v1073
        %1075 = vdwg.mxu0
        %v1077 = vsel %vm1023, %v1021, 0
        %v1080 = vsel %vm1023, %v905, 0
        %1082 = vmatpush.xpose.msra.mxu0 0.0
        %1083 = vmatpush.xpose.msra.mxu0 0.0
        %1084 = vmatpush.xpose.msra.mxu0 0.0
        %1085 = vmatpush.xpose.msra.mxu0 0.0
        %1086 = vmatpush.xpose.msra.mxu0 0.0
        %1087 = vmatpush.xpose.msra.mxu0 0.0
        %1088 = vmatpush.xpose.msra.mxu0 0.0
        %1089 = vmatpush.xpose.msra.mxu0 0.0
        %1090 = vmatpush.xpose.msra.mxu0 0.0
        %1091 = vmatpush.xpose.msra.mxu0 0.0
        %1092 = vmatpush.xpose.msra.mxu0 0.0
        %1093 = vmatpush.xpose.msra.mxu0 0.0
        %1094 = vmatpush.xpose.msra.mxu0 0.0
        %1095 = vmatpush.xpose.msra.mxu0 0.0
        %1096 = vmatpush.xpose.msra.mxu0 0.0
        %1097 = vmatpush.xpose.msra.mxu0 %v1080
        %1098 = vmatmul.f32.gmra.mxu0 %v1077
        %v1099 = vpop.f32.mrf.mxu0
        %v1100 = vadd.f32 0.0, %v1099
        %1101 = vdwg.mxu0
        %v1103 = vsel %vm1023, %v1022, 0
        %v1106 = vsel %vm1023, %v925, 0
        %1108 = vmatpush.xpose.msra.mxu0 0.0
        %1109 = vmatpush.xpose.msra.mxu0 0.0
        %1110 = vmatpush.xpose.msra.mxu0 0.0
        %1111 = vmatpush.xpose.msra.mxu0 0.0
        %1112 = vmatpush.xpose.msra.mxu0 0.0
        %1113 = vmatpush.xpose.msra.mxu0 0.0
        %1114 = vmatpush.xpose.msra.mxu0 0.0
        %1115 = vmatpush.xpose.msra.mxu0 0.0
        %1116 = vmatpush.xpose.msra.mxu0 0.0
        %1117 = vmatpush.xpose.msra.mxu0 0.0
        %1118 = vmatpush.xpose.msra.mxu0 0.0
        %1119 = vmatpush.xpose.msra.mxu0 0.0
        %1120 = vmatpush.xpose.msra.mxu0 0.0
        %1121 = vmatpush.xpose.msra.mxu0 0.0
        %1122 = vmatpush.xpose.msra.mxu0 0.0
        %1123 = vmatpush.xpose.msra.mxu0 %v1106
        %1124 = vmatmul.f32.gmra.mxu0 %v1103
        %v1125 = vpop.f32.mrf.mxu0
        %v1126 = vadd.f32 0.0, %v1125
        %1127 = vdwg.mxu0
        %v1128 = vsel %vm1023, %v1048, -inf
        %1129 = vmax.xlane.f32.xlu0 %v1128
        %v1130 = vpop.xlane.xlu0 %1129
        %v1131 = vsel %vm1023, %v1074, -inf
        %1132 = vmax.xlane.f32.xlu0 %v1131
        %v1133 = vpop.xlane.xlu0 %1132
        %v1134 = vsel %vm1023, %v1100, -inf
        %1135 = vmax.xlane.f32.xlu0 %v1134
        %v1136 = vpop.xlane.xlu0 %1135
        %v1137 = vsel %vm1023, %v1126, -inf
        %1138 = vmax.xlane.f32.xlu0 %v1137
        %v1139 = vpop.xlane.xlu0 %1138
        %v1140 = vsub.f32 %v1048, %v1130
        %v1141 = vsub.f32 %v1074, %v1133
        %v1142 = vsub.f32 %v1100, %v1136
        %v1143 = vsub.f32 %v1126, %v1139
        %v1144 = vmul.f32 %v1140, 1.442695
        %v1145 = vpow.pop %v1144
        %v1146 = vmul.f32 %v1141, 1.442695
        %v1147 = vpow.pop %v1146
        %v1148 = vmul.f32 %v1142, 1.442695
        %v1149 = vpow.pop %v1148
        %v1150 = vmul.f32 %v1143, 1.442695
        %v1151 = vpow.pop %v1150
        %v1152 = vsel %vm1023, %v1145, 0.0
        %1153 = vadd.xlane.f32.xlu0 %v1152
        %v1154 = vpop.xlane.xlu0 %1153
        %v1155 = vsel %vm1023, %v1147, 0.0
        %1156 = vadd.xlane.f32.xlu0 %v1155
        %v1157 = vpop.xlane.xlu0 %1156
        %v1158 = vsel %vm1023, %v1149, 0.0
        %1159 = vadd.xlane.f32.xlu0 %v1158
        %v1160 = vpop.xlane.xlu0 %1159
        %v1161 = vsel %vm1023, %v1151, 0.0
        %1162 = vadd.xlane.f32.xlu0 %v1161
        %v1163 = vpop.xlane.xlu0 %1162
        %v1164 = vrcp.pop %v1154
        %v1165 = vrcp.pop %v1157
        %v1166 = vrcp.pop %v1160
        %v1167 = vrcp.pop %v1163
        %v1168 = vmul.f32 %v1145, %v1164
        %v1169 = vmul.f32 %v1147, %v1165
        %v1170 = vmul.f32 %v1149, %v1166
        %v1171 = vmul.f32 %v1151, %v1167
        %v1173 = vsel %vm1023, %v1168, 0
        %1175 = vmatpush.msra.mxu0 0.0
        %1176 = vmatpush.msra.mxu0 0.0
        %1177 = vmatpush.msra.mxu0 0.0
        %1178 = vmatpush.msra.mxu0 0.0
        %1179 = vmatpush.msra.mxu0 0.0
        %1180 = vmatpush.msra.mxu0 0.0
        %1181 = vmatpush.msra.mxu0 0.0
        %1182 = vmatpush.msra.mxu0 0.0
        %1183 = vmatpush.msra.mxu0 0.0
        %1184 = vmatpush.msra.mxu0 0.0
        %1185 = vmatpush.msra.mxu0 0.0
        %1186 = vmatpush.msra.mxu0 0.0
        %1187 = vmatpush.msra.mxu0 0.0
        %1188 = vmatpush.msra.mxu0 0.0
        %1189 = vmatpush.msra.mxu0 0.0
        %1190 = vmatpush.msra.mxu0 %v957
        %1191 = vmatmul.f32.gmra.mxu0 %v1173
        %v1192 = vpop.f32.mrf.mxu0
        %v1193 = vadd.f32 0.0, %v1192
        %1194 = vdwg.mxu0
        %v1196 = vsel %vm1023, %v1169, 0
        %1198 = vmatpush.msra.mxu0 0.0
        %1199 = vmatpush.msra.mxu0 0.0
        %1200 = vmatpush.msra.mxu0 0.0
        %1201 = vmatpush.msra.mxu0 0.0
        %1202 = vmatpush.msra.mxu0 0.0
        %1203 = vmatpush.msra.mxu0 0.0
        %1204 = vmatpush.msra.mxu0 0.0
        %1205 = vmatpush.msra.mxu0 0.0
        %1206 = vmatpush.msra.mxu0 0.0
        %1207 = vmatpush.msra.mxu0 0.0
        %1208 = vmatpush.msra.mxu0 0.0
        %1209 = vmatpush.msra.mxu0 0.0
        %1210 = vmatpush.msra.mxu0 0.0
        %1211 = vmatpush.msra.mxu0 0.0
        %1212 = vmatpush.msra.mxu0 0.0
        %1213 = vmatpush.msra.mxu0 %v977
        %1214 = vmatmul.f32.gmra.mxu0 %v1196
        %v1215 = vpop.f32.mrf.mxu0
        %v1216 = vadd.f32 0.0, %v1215
        %1217 = vdwg.mxu0
        %v1219 = vsel %vm1023, %v1170, 0
        %1221 = vmatpush.msra.mxu0 0.0
        %1222 = vmatpush.msra.mxu0 0.0
        %1223 = vmatpush.msra.mxu0 0.0
        %1224 = vmatpush.msra.mxu0 0.0
        %1225 = vmatpush.msra.mxu0 0.0
        %1226 = vmatpush.msra.mxu0 0.0
        %1227 = vmatpush.msra.mxu0 0.0
        %1228 = vmatpush.msra.mxu0 0.0
        %1229 = vmatpush.msra.mxu0 0.0
        %1230 = vmatpush.msra.mxu0 0.0
        %1231 = vmatpush.msra.mxu0 0.0
        %1232 = vmatpush.msra.mxu0 0.0
        %1233 = vmatpush.msra.mxu0 0.0
        %1234 = vmatpush.msra.mxu0 0.0
        %1235 = vmatpush.msra.mxu0 0.0
        %1236 = vmatpush.msra.mxu0 %v997
        %1237 = vmatmul.f32.gmra.mxu0 %v1219
        %v1238 = vpop.f32.mrf.mxu0
        %v1239 = vadd.f32 0.0, %v1238
        %1240 = vdwg.mxu0
        %v1242 = vsel %vm1023, %v1171, 0
        %1244 = vmatpush.msra.mxu0 0.0
        %1245 = vmatpush.msra.mxu0 0.0
        %1246 = vmatpush.msra.mxu0 0.0
        %1247 = vmatpush.msra.mxu0 0.0
        %1248 = vmatpush.msra.mxu0 0.0
        %1249 = vmatpush.msra.mxu0 0.0
        %1250 = vmatpush.msra.mxu0 0.0
        %1251 = vmatpush.msra.mxu0 0.0
        %1252 = vmatpush.msra.mxu0 0.0
        %1253 = vmatpush.msra.mxu0 0.0
        %1254 = vmatpush.msra.mxu0 0.0
        %1255 = vmatpush.msra.mxu0 0.0
        %1256 = vmatpush.msra.mxu0 0.0
        %1257 = vmatpush.msra.mxu0 0.0
        %1258 = vmatpush.msra.mxu0 0.0
        %1259 = vmatpush.msra.mxu0 %v1017
        %1260 = vmatmul.f32.gmra.mxu0 %v1242
        %v1261 = vpop.f32.mrf.mxu0
        %v1262 = vadd.f32 0.0, %v1261
        %1263 = vdwg.mxu0
        %v1265 = vsel %vm1023, %v1193, 0
        %1267 = vmatpush.msra.mxu0 0.0
        %1268 = vmatpush.msra.mxu0 0.0
        %1269 = vmatpush.msra.mxu0 0.0
        %1270 = vmatpush.msra.mxu0 0.0
        %1271 = vmatpush.msra.mxu0 0.0
        %1272 = vmatpush.msra.mxu0 0.0
        %1273 = vmatpush.msra.mxu0 0.0
        %1274 = vmatpush.msra.mxu0 0.0
        %1275 = vmatpush.msra.mxu0 0.0
        %1276 = vmatpush.msra.mxu0 0.0
        %1277 = vmatpush.msra.mxu0 0.0
        %1278 = vmatpush.msra.mxu0 0.0
        %1279 = vmatpush.msra.mxu0 0.0
        %1280 = vmatpush.msra.mxu0 0.0
        %1281 = vmatpush.msra.mxu0 0.0
        %1282 = vmatpush.msra.mxu0 %v707
        %1283 = vmatmul.f32.gmra.mxu0 %v1265
        %v1284 = vpop.f32.mrf.mxu0
        %v1285 = vadd.f32 0.0, %v1284
        %1286 = vdwg.mxu0
        %v1288 = vsel %vm1023, %v1216, 0
        %1290 = vmatpush.msra.mxu0 0.0
        %1291 = vmatpush.msra.mxu0 0.0
        %1292 = vmatpush.msra.mxu0 0.0
        %1293 = vmatpush.msra.mxu0 0.0
        %1294 = vmatpush.msra.mxu0 0.0
        %1295 = vmatpush.msra.mxu0 0.0
        %1296 = vmatpush.msra.mxu0 0.0
        %1297 = vmatpush.msra.mxu0 0.0
        %1298 = vmatpush.msra.mxu0 0.0
        %1299 = vmatpush.msra.mxu0 0.0
        %1300 = vmatpush.msra.mxu0 0.0
        %1301 = vmatpush.msra.mxu0 0.0
        %1302 = vmatpush.msra.mxu0 0.0
        %1303 = vmatpush.msra.mxu0 0.0
        %1304 = vmatpush.msra.mxu0 0.0
        %1305 = vmatpush.msra.mxu0 %v708
        %1306 = vmatmul.f32.gmra.mxu0 %v1288
        %v1307 = vpop.f32.mrf.mxu0
        %v1308 = vadd.f32 0.0, %v1307
        %1309 = vdwg.mxu0
        %v1311 = vsel %vm1023, %v1239, 0
        %1313 = vmatpush.msra.mxu0 0.0
        %1314 = vmatpush.msra.mxu0 0.0
        %1315 = vmatpush.msra.mxu0 0.0
        %1316 = vmatpush.msra.mxu0 0.0
        %1317 = vmatpush.msra.mxu0 0.0
        %1318 = vmatpush.msra.mxu0 0.0
        %1319 = vmatpush.msra.mxu0 0.0
        %1320 = vmatpush.msra.mxu0 0.0
        %1321 = vmatpush.msra.mxu0 0.0
        %1322 = vmatpush.msra.mxu0 0.0
        %1323 = vmatpush.msra.mxu0 0.0
        %1324 = vmatpush.msra.mxu0 0.0
        %1325 = vmatpush.msra.mxu0 0.0
        %1326 = vmatpush.msra.mxu0 0.0
        %1327 = vmatpush.msra.mxu0 0.0
        %1328 = vmatpush.msra.mxu0 %v709
        %1329 = vmatmul.f32.gmra.mxu0 %v1311
        %v1330 = vpop.f32.mrf.mxu0
        %v1331 = vadd.f32 0.0, %v1330
        %1332 = vdwg.mxu0
        %v1334 = vsel %vm1023, %v1262, 0
        %1336 = vmatpush.msra.mxu0 0.0
        %1337 = vmatpush.msra.mxu0 0.0
        %1338 = vmatpush.msra.mxu0 0.0
        %1339 = vmatpush.msra.mxu0 0.0
        %1340 = vmatpush.msra.mxu0 0.0
        %1341 = vmatpush.msra.mxu0 0.0
        %1342 = vmatpush.msra.mxu0 0.0
        %1343 = vmatpush.msra.mxu0 0.0
        %1344 = vmatpush.msra.mxu0 0.0
        %1345 = vmatpush.msra.mxu0 0.0
        %1346 = vmatpush.msra.mxu0 0.0
        %1347 = vmatpush.msra.mxu0 0.0
        %1348 = vmatpush.msra.mxu0 0.0
        %1349 = vmatpush.msra.mxu0 0.0
        %1350 = vmatpush.msra.mxu0 0.0
        %1351 = vmatpush.msra.mxu0 %v710
        %1352 = vmatmul.f32.gmra.mxu0 %v1334
        %v1353 = vpop.f32.mrf.mxu0
        %v1354 = vadd.f32 0.0, %v1353
        %1355 = vdwg.mxu0
        %v1356 = vsel %vm751, %v1285, 0.0
        %v1357 = vsel %vm751, %v1308, 0.0
        %v1358 = vadd.f32 %v1356, %v1357
        %v1359 = vsel %vm751, %v1331, 0.0
        %v1360 = vadd.f32 %v1358, %v1359
        %v1361 = vsel %vm751, %v1354, 0.0
        %v1362 = vadd.f32 %v1360, %v1361
        %v1364 = vperm.slane %v711, 0
        %v1366 = vadd.f32 %v1362, %v1364
        %v1367 = vadd.f32 %v643, %v1366
        %v1369 = vsel %vm1023, %v646, 0
        %1371 = vmatpush.msra.mxu0 0.0
        %1372 = vmatpush.msra.mxu0 0.0
        %1373 = vmatpush.msra.mxu0 0.0
        %1374 = vmatpush.msra.mxu0 0.0
        %1375 = vmatpush.msra.mxu0 0.0
        %1376 = vmatpush.msra.mxu0 0.0
        %1377 = vmatpush.msra.mxu0 0.0
        %1378 = vmatpush.msra.mxu0 0.0
        %1379 = vmatpush.msra.mxu0 0.0
        %1380 = vmatpush.msra.mxu0 0.0
        %1381 = vmatpush.msra.mxu0 0.0
        %1382 = vmatpush.msra.mxu0 0.0
        %1383 = vmatpush.msra.mxu0 0.0
        %1384 = vmatpush.msra.mxu0 0.0
        %1385 = vmatpush.msra.mxu0 0.0
        %1386 = vmatpush.msra.mxu0 %v1367
        %1387 = vmatmul.f32.gmra.mxu0 %v1369
        %v1388 = vpop.f32.mrf.mxu0
        %v1389 = vadd.f32 0.0, %v1388
        %1390 = vdwg.mxu0
        %v1391 = vsub.f32 %v1367, %v1389
        %v1393 = vsel %vm751, %v1391, 0
        %1395 = vmatpush.msra.mxu0 0.0
        %1396 = vmatpush.msra.mxu0 0.0
        %1397 = vmatpush.msra.mxu0 0.0
        %1398 = vmatpush.msra.mxu0 0.0
        %1399 = vmatpush.msra.mxu0 0.0
        %1400 = vmatpush.msra.mxu0 0.0
        %1401 = vmatpush.msra.mxu0 0.0
        %1402 = vmatpush.msra.mxu0 0.0
        %1403 = vmatpush.msra.mxu0 0.0
        %1404 = vmatpush.msra.mxu0 0.0
        %1405 = vmatpush.msra.mxu0 0.0
        %1406 = vmatpush.msra.mxu0 0.0
        %1407 = vmatpush.msra.mxu0 %v650
        %1408 = vmatpush.msra.mxu0 %v649
        %1409 = vmatpush.msra.mxu0 %v648
        %1410 = vmatpush.msra.mxu0 %v647
        %1411 = vmatmul.f32.gmra.mxu0 %v1393
        %v1412 = vpop.f32.mrf.mxu0
        %v1413 = vadd.f32 %v743, %v1412
        %1414 = vdwg.mxu0
        %1415 = vmatpush.msra.mxu0 0.0
        %1416 = vmatpush.msra.mxu0 0.0
        %1417 = vmatpush.msra.mxu0 0.0
        %1418 = vmatpush.msra.mxu0 0.0
        %1419 = vmatpush.msra.mxu0 0.0
        %1420 = vmatpush.msra.mxu0 0.0
        %1421 = vmatpush.msra.mxu0 0.0
        %1422 = vmatpush.msra.mxu0 0.0
        %1423 = vmatpush.msra.mxu0 0.0
        %1424 = vmatpush.msra.mxu0 0.0
        %1425 = vmatpush.msra.mxu0 0.0
        %1426 = vmatpush.msra.mxu0 0.0
        %1427 = vmatpush.msra.mxu0 %v654
        %1428 = vmatpush.msra.mxu0 %v653
        %1429 = vmatpush.msra.mxu0 %v652
        %1430 = vmatpush.msra.mxu0 %v651
        %1431 = vmatmul.f32.gmra.mxu0 %v1393
        %v1432 = vpop.f32.mrf.mxu0
        %v1433 = vadd.f32 %v744, %v1432
        %1434 = vdwg.mxu0
        %1435 = vmatpush.msra.mxu0 0.0
        %1436 = vmatpush.msra.mxu0 0.0
        %1437 = vmatpush.msra.mxu0 0.0
        %1438 = vmatpush.msra.mxu0 0.0
        %1439 = vmatpush.msra.mxu0 0.0
        %1440 = vmatpush.msra.mxu0 0.0
        %1441 = vmatpush.msra.mxu0 0.0
        %1442 = vmatpush.msra.mxu0 0.0
        %1443 = vmatpush.msra.mxu0 0.0
        %1444 = vmatpush.msra.mxu0 0.0
        %1445 = vmatpush.msra.mxu0 0.0
        %1446 = vmatpush.msra.mxu0 0.0
        %1447 = vmatpush.msra.mxu0 %v658
        %1448 = vmatpush.msra.mxu0 %v657
        %1449 = vmatpush.msra.mxu0 %v656
        %1450 = vmatpush.msra.mxu0 %v655
        %1451 = vmatmul.f32.gmra.mxu0 %v1393
        %v1452 = vpop.f32.mrf.mxu0
        %v1453 = vadd.f32 %v745, %v1452
        %1454 = vdwg.mxu0
        %1455 = vmatpush.msra.mxu0 0.0
        %1456 = vmatpush.msra.mxu0 0.0
        %1457 = vmatpush.msra.mxu0 0.0
        %1458 = vmatpush.msra.mxu0 0.0
        %1459 = vmatpush.msra.mxu0 0.0
        %1460 = vmatpush.msra.mxu0 0.0
        %1461 = vmatpush.msra.mxu0 0.0
        %1462 = vmatpush.msra.mxu0 0.0
        %1463 = vmatpush.msra.mxu0 0.0
        %1464 = vmatpush.msra.mxu0 0.0
        %1465 = vmatpush.msra.mxu0 0.0
        %1466 = vmatpush.msra.mxu0 0.0
        %1467 = vmatpush.msra.mxu0 %v662
        %1468 = vmatpush.msra.mxu0 %v661
        %1469 = vmatpush.msra.mxu0 %v660
        %1470 = vmatpush.msra.mxu0 %v659
        %1471 = vmatmul.f32.gmra.mxu0 %v1393
        %v1472 = vpop.f32.mrf.mxu0
        %v1473 = vadd.f32 %v746, %v1472
        %1474 = vdwg.mxu0
        %v1476 = vsel %vm751, %v645, 0
        %1478 = vmatpush.msra.mxu0 0.0
        %1479 = vmatpush.msra.mxu0 0.0
        %1480 = vmatpush.msra.mxu0 0.0
        %1481 = vmatpush.msra.mxu0 0.0
        %1482 = vmatpush.msra.mxu0 0.0
        %1483 = vmatpush.msra.mxu0 0.0
        %1484 = vmatpush.msra.mxu0 0.0
        %1485 = vmatpush.msra.mxu0 0.0
        %1486 = vmatpush.msra.mxu0 0.0
        %1487 = vmatpush.msra.mxu0 0.0
        %1488 = vmatpush.msra.mxu0 0.0
        %1489 = vmatpush.msra.mxu0 0.0
        %1490 = vmatpush.msra.mxu0 %v670
        %1491 = vmatpush.msra.mxu0 %v669
        %1492 = vmatpush.msra.mxu0 %v668
        %1493 = vmatpush.msra.mxu0 %v667
        %1494 = vmatmul.f32.gmra.mxu0 %v1476
        %v1495 = vpop.f32.mrf.mxu0
        %v1496 = vadd.f32 %v839, %v1495
        %1497 = vdwg.mxu0
        %1498 = vmatpush.msra.mxu0 0.0
        %1499 = vmatpush.msra.mxu0 0.0
        %1500 = vmatpush.msra.mxu0 0.0
        %1501 = vmatpush.msra.mxu0 0.0
        %1502 = vmatpush.msra.mxu0 0.0
        %1503 = vmatpush.msra.mxu0 0.0
        %1504 = vmatpush.msra.mxu0 0.0
        %1505 = vmatpush.msra.mxu0 0.0
        %1506 = vmatpush.msra.mxu0 0.0
        %1507 = vmatpush.msra.mxu0 0.0
        %1508 = vmatpush.msra.mxu0 0.0
        %1509 = vmatpush.msra.mxu0 0.0
        %1510 = vmatpush.msra.mxu0 %v674
        %1511 = vmatpush.msra.mxu0 %v673
        %1512 = vmatpush.msra.mxu0 %v672
        %1513 = vmatpush.msra.mxu0 %v671
        %1514 = vmatmul.f32.gmra.mxu0 %v1476
        %v1515 = vpop.f32.mrf.mxu0
        %v1516 = vadd.f32 %v840, %v1515
        %1517 = vdwg.mxu0
        %1518 = vmatpush.msra.mxu0 0.0
        %1519 = vmatpush.msra.mxu0 0.0
        %1520 = vmatpush.msra.mxu0 0.0
        %1521 = vmatpush.msra.mxu0 0.0
        %1522 = vmatpush.msra.mxu0 0.0
        %1523 = vmatpush.msra.mxu0 0.0
        %1524 = vmatpush.msra.mxu0 0.0
        %1525 = vmatpush.msra.mxu0 0.0
        %1526 = vmatpush.msra.mxu0 0.0
        %1527 = vmatpush.msra.mxu0 0.0
        %1528 = vmatpush.msra.mxu0 0.0
        %1529 = vmatpush.msra.mxu0 0.0
        %1530 = vmatpush.msra.mxu0 %v678
        %1531 = vmatpush.msra.mxu0 %v677
        %1532 = vmatpush.msra.mxu0 %v676
        %1533 = vmatpush.msra.mxu0 %v675
        %1534 = vmatmul.f32.gmra.mxu0 %v1476
        %v1535 = vpop.f32.mrf.mxu0
        %v1536 = vadd.f32 %v841, %v1535
        %1537 = vdwg.mxu0
        %1538 = vmatpush.msra.mxu0 0.0
        %1539 = vmatpush.msra.mxu0 0.0
        %1540 = vmatpush.msra.mxu0 0.0
        %1541 = vmatpush.msra.mxu0 0.0
        %1542 = vmatpush.msra.mxu0 0.0
        %1543 = vmatpush.msra.mxu0 0.0
        %1544 = vmatpush.msra.mxu0 0.0
        %1545 = vmatpush.msra.mxu0 0.0
        %1546 = vmatpush.msra.mxu0 0.0
        %1547 = vmatpush.msra.mxu0 0.0
        %1548 = vmatpush.msra.mxu0 0.0
        %1549 = vmatpush.msra.mxu0 0.0
        %1550 = vmatpush.msra.mxu0 %v682
        %1551 = vmatpush.msra.mxu0 %v681
        %1552 = vmatpush.msra.mxu0 %v680
        %1553 = vmatpush.msra.mxu0 %v679
        %1554 = vmatmul.f32.gmra.mxu0 %v1476
        %v1555 = vpop.f32.mrf.mxu0
        %v1556 = vadd.f32 %v842, %v1555
        %1557 = vdwg.mxu0
        %1558 = vmatpush.msra.mxu0 0.0
        %1559 = vmatpush.msra.mxu0 0.0
        %1560 = vmatpush.msra.mxu0 0.0
        %1561 = vmatpush.msra.mxu0 0.0
        %1562 = vmatpush.msra.mxu0 0.0
        %1563 = vmatpush.msra.mxu0 0.0
        %1564 = vmatpush.msra.mxu0 0.0
        %1565 = vmatpush.msra.mxu0 0.0
        %1566 = vmatpush.msra.mxu0 0.0
        %1567 = vmatpush.msra.mxu0 0.0
        %1568 = vmatpush.msra.mxu0 0.0
        %1569 = vmatpush.msra.mxu0 0.0
        %1570 = vmatpush.msra.mxu0 %v690
        %1571 = vmatpush.msra.mxu0 %v689
        %1572 = vmatpush.msra.mxu0 %v688
        %1573 = vmatpush.msra.mxu0 %v687
        %1574 = vmatmul.f32.gmra.mxu0 %v1476
        %v1575 = vpop.f32.mrf.mxu0
        %v1576 = vadd.f32 %v931, %v1575
        %1577 = vdwg.mxu0
        %1578 = vmatpush.msra.mxu0 0.0
        %1579 = vmatpush.msra.mxu0 0.0
        %1580 = vmatpush.msra.mxu0 0.0
        %1581 = vmatpush.msra.mxu0 0.0
        %1582 = vmatpush.msra.mxu0 0.0
        %1583 = vmatpush.msra.mxu0 0.0
        %1584 = vmatpush.msra.mxu0 0.0
        %1585 = vmatpush.msra.mxu0 0.0
        %1586 = vmatpush.msra.mxu0 0.0
        %1587 = vmatpush.msra.mxu0 0.0
        %1588 = vmatpush.msra.mxu0 0.0
        %1589 = vmatpush.msra.mxu0 0.0
        %1590 = vmatpush.msra.mxu0 %v694
        %1591 = vmatpush.msra.mxu0 %v693
        %1592 = vmatpush.msra.mxu0 %v692
        %1593 = vmatpush.msra.mxu0 %v691
        %1594 = vmatmul.f32.gmra.mxu0 %v1476
        %v1595 = vpop.f32.mrf.mxu0
        %v1596 = vadd.f32 %v932, %v1595
        %1597 = vdwg.mxu0
        %1598 = vmatpush.msra.mxu0 0.0
        %1599 = vmatpush.msra.mxu0 0.0
        %1600 = vmatpush.msra.mxu0 0.0
        %1601 = vmatpush.msra.mxu0 0.0
        %1602 = vmatpush.msra.mxu0 0.0
        %1603 = vmatpush.msra.mxu0 0.0
        %1604 = vmatpush.msra.mxu0 0.0
        %1605 = vmatpush.msra.mxu0 0.0
        %1606 = vmatpush.msra.mxu0 0.0
        %1607 = vmatpush.msra.mxu0 0.0
        %1608 = vmatpush.msra.mxu0 0.0
        %1609 = vmatpush.msra.mxu0 0.0
        %1610 = vmatpush.msra.mxu0 %v698
        %1611 = vmatpush.msra.mxu0 %v697
        %1612 = vmatpush.msra.mxu0 %v696
        %1613 = vmatpush.msra.mxu0 %v695
        %1614 = vmatmul.f32.gmra.mxu0 %v1476
        %v1615 = vpop.f32.mrf.mxu0
        %v1616 = vadd.f32 %v933, %v1615
        %1617 = vdwg.mxu0
        %1618 = vmatpush.msra.mxu0 0.0
        %1619 = vmatpush.msra.mxu0 0.0
        %1620 = vmatpush.msra.mxu0 0.0
        %1621 = vmatpush.msra.mxu0 0.0
        %1622 = vmatpush.msra.mxu0 0.0
        %1623 = vmatpush.msra.mxu0 0.0
        %1624 = vmatpush.msra.mxu0 0.0
        %1625 = vmatpush.msra.mxu0 0.0
        %1626 = vmatpush.msra.mxu0 0.0
        %1627 = vmatpush.msra.mxu0 0.0
        %1628 = vmatpush.msra.mxu0 0.0
        %1629 = vmatpush.msra.mxu0 0.0
        %1630 = vmatpush.msra.mxu0 %v702
        %1631 = vmatpush.msra.mxu0 %v701
        %1632 = vmatpush.msra.mxu0 %v700
        %1633 = vmatpush.msra.mxu0 %v699
        %1634 = vmatmul.f32.gmra.mxu0 %v1476
        %v1635 = vpop.f32.mrf.mxu0
        %v1636 = vadd.f32 %v934, %v1635
        %1637 = vdwg.mxu0
        %v1638 = vmul.f32 %v1413, 0.35355338
        %v1639 = vmul.f32 %v1433, 0.35355338
        %v1640 = vmul.f32 %v1453, 0.35355338
        %v1641 = vmul.f32 %v1473, 0.35355338
        %v1643 = vsel %vm1023, %v1638, 0
        %v1646 = vsel %vm1023, %v1496, 0
        %1648 = vmatpush.xpose.msra.mxu0 0.0
        %1649 = vmatpush.xpose.msra.mxu0 0.0
        %1650 = vmatpush.xpose.msra.mxu0 0.0
        %1651 = vmatpush.xpose.msra.mxu0 0.0
        %1652 = vmatpush.xpose.msra.mxu0 0.0
        %1653 = vmatpush.xpose.msra.mxu0 0.0
        %1654 = vmatpush.xpose.msra.mxu0 0.0
        %1655 = vmatpush.xpose.msra.mxu0 0.0
        %1656 = vmatpush.xpose.msra.mxu0 0.0
        %1657 = vmatpush.xpose.msra.mxu0 0.0
        %1658 = vmatpush.xpose.msra.mxu0 0.0
        %1659 = vmatpush.xpose.msra.mxu0 0.0
        %1660 = vmatpush.xpose.msra.mxu0 0.0
        %1661 = vmatpush.xpose.msra.mxu0 0.0
        %1662 = vmatpush.xpose.msra.mxu0 0.0
        %1663 = vmatpush.xpose.msra.mxu0 %v1646
        %1664 = vmatmul.f32.gmra.mxu0 %v1643
        %v1665 = vpop.f32.mrf.mxu0
        %v1666 = vadd.f32 0.0, %v1665
        %1667 = vdwg.mxu0
        %v1669 = vsel %vm1023, %v1639, 0
        %v1672 = vsel %vm1023, %v1516, 0
        %1674 = vmatpush.xpose.msra.mxu0 0.0
        %1675 = vmatpush.xpose.msra.mxu0 0.0
        %1676 = vmatpush.xpose.msra.mxu0 0.0
        %1677 = vmatpush.xpose.msra.mxu0 0.0
        %1678 = vmatpush.xpose.msra.mxu0 0.0
        %1679 = vmatpush.xpose.msra.mxu0 0.0
        %1680 = vmatpush.xpose.msra.mxu0 0.0
        %1681 = vmatpush.xpose.msra.mxu0 0.0
        %1682 = vmatpush.xpose.msra.mxu0 0.0
        %1683 = vmatpush.xpose.msra.mxu0 0.0
        %1684 = vmatpush.xpose.msra.mxu0 0.0
        %1685 = vmatpush.xpose.msra.mxu0 0.0
        %1686 = vmatpush.xpose.msra.mxu0 0.0
        %1687 = vmatpush.xpose.msra.mxu0 0.0
        %1688 = vmatpush.xpose.msra.mxu0 0.0
        %1689 = vmatpush.xpose.msra.mxu0 %v1672
        %1690 = vmatmul.f32.gmra.mxu0 %v1669
        %v1691 = vpop.f32.mrf.mxu0
        %v1692 = vadd.f32 0.0, %v1691
        %1693 = vdwg.mxu0
        %v1695 = vsel %vm1023, %v1640, 0
        %v1698 = vsel %vm1023, %v1536, 0
        %1700 = vmatpush.xpose.msra.mxu0 0.0
        %1701 = vmatpush.xpose.msra.mxu0 0.0
        %1702 = vmatpush.xpose.msra.mxu0 0.0
        %1703 = vmatpush.xpose.msra.mxu0 0.0
        %1704 = vmatpush.xpose.msra.mxu0 0.0
        %1705 = vmatpush.xpose.msra.mxu0 0.0
        %1706 = vmatpush.xpose.msra.mxu0 0.0
        %1707 = vmatpush.xpose.msra.mxu0 0.0
        %1708 = vmatpush.xpose.msra.mxu0 0.0
        %1709 = vmatpush.xpose.msra.mxu0 0.0
        %1710 = vmatpush.xpose.msra.mxu0 0.0
        %1711 = vmatpush.xpose.msra.mxu0 0.0
        %1712 = vmatpush.xpose.msra.mxu0 0.0
        %1713 = vmatpush.xpose.msra.mxu0 0.0
        %1714 = vmatpush.xpose.msra.mxu0 0.0
        %1715 = vmatpush.xpose.msra.mxu0 %v1698
        %1716 = vmatmul.f32.gmra.mxu0 %v1695
        %v1717 = vpop.f32.mrf.mxu0
        %v1718 = vadd.f32 0.0, %v1717
        %1719 = vdwg.mxu0
        %v1721 = vsel %vm1023, %v1641, 0
        %v1724 = vsel %vm1023, %v1556, 0
        %1726 = vmatpush.xpose.msra.mxu0 0.0
        %1727 = vmatpush.xpose.msra.mxu0 0.0
        %1728 = vmatpush.xpose.msra.mxu0 0.0
        %1729 = vmatpush.xpose.msra.mxu0 0.0
        %1730 = vmatpush.xpose.msra.mxu0 0.0
        %1731 = vmatpush.xpose.msra.mxu0 0.0
        %1732 = vmatpush.xpose.msra.mxu0 0.0
        %1733 = vmatpush.xpose.msra.mxu0 0.0
        %1734 = vmatpush.xpose.msra.mxu0 0.0
        %1735 = vmatpush.xpose.msra.mxu0 0.0
        %1736 = vmatpush.xpose.msra.mxu0 0.0
        %1737 = vmatpush.xpose.msra.mxu0 0.0
        %1738 = vmatpush.xpose.msra.mxu0 0.0
        %1739 = vmatpush.xpose.msra.mxu0 0.0
        %1740 = vmatpush.xpose.msra.mxu0 0.0
        %1741 = vmatpush.xpose.msra.mxu0 %v1724
        %1742 = vmatmul.f32.gmra.mxu0 %v1721
        %v1743 = vpop.f32.mrf.mxu0
        %v1744 = vadd.f32 0.0, %v1743
        %1745 = vdwg.mxu0
        %v1746 = vsel %vm1023, %v1666, -inf
        %1747 = vmax.xlane.f32.xlu0 %v1746
        %v1748 = vpop.xlane.xlu0 %1747
        %v1749 = vsel %vm1023, %v1692, -inf
        %1750 = vmax.xlane.f32.xlu0 %v1749
        %v1751 = vpop.xlane.xlu0 %1750
        %v1752 = vsel %vm1023, %v1718, -inf
        %1753 = vmax.xlane.f32.xlu0 %v1752
        %v1754 = vpop.xlane.xlu0 %1753
        %v1755 = vsel %vm1023, %v1744, -inf
        %1756 = vmax.xlane.f32.xlu0 %v1755
        %v1757 = vpop.xlane.xlu0 %1756
        %v1758 = vsub.f32 %v1666, %v1748
        %v1759 = vsub.f32 %v1692, %v1751
        %v1760 = vsub.f32 %v1718, %v1754
        %v1761 = vsub.f32 %v1744, %v1757
        %v1762 = vmul.f32 %v1758, 1.442695
        %v1763 = vpow.pop %v1762
        %v1764 = vmul.f32 %v1759, 1.442695
        %v1765 = vpow.pop %v1764
        %v1766 = vmul.f32 %v1760, 1.442695
        %v1767 = vpow.pop %v1766
        %v1768 = vmul.f32 %v1761, 1.442695
        %v1769 = vpow.pop %v1768
        %v1770 = vsel %vm1023, %v1763, 0.0
        %1771 = vadd.xlane.f32.xlu0 %v1770
        %v1772 = vpop.xlane.xlu0 %1771
        %v1773 = vsel %vm1023, %v1765, 0.0
        %1774 = vadd.xlane.f32.xlu0 %v1773
        %v1775 = vpop.xlane.xlu0 %1774
        %v1776 = vsel %vm1023, %v1767, 0.0
        %1777 = vadd.xlane.f32.xlu0 %v1776
        %v1778 = vpop.xlane.xlu0 %1777
        %v1779 = vsel %vm1023, %v1769, 0.0
        %1780 = vadd.xlane.f32.xlu0 %v1779
        %v1781 = vpop.xlane.xlu0 %1780
        %v1782 = vrcp.pop %v1772
        %v1783 = vrcp.pop %v1775
        %v1784 = vrcp.pop %v1778
        %v1785 = vrcp.pop %v1781
        %v1786 = vmul.f32 %v1763, %v1782
        %v1787 = vmul.f32 %v1765, %v1783
        %v1788 = vmul.f32 %v1767, %v1784
        %v1789 = vmul.f32 %v1769, %v1785
        %v1791 = vsel %vm1023, %v1786, 0
        %1793 = vmatpush.msra.mxu0 0.0
        %1794 = vmatpush.msra.mxu0 0.0
        %1795 = vmatpush.msra.mxu0 0.0
        %1796 = vmatpush.msra.mxu0 0.0
        %1797 = vmatpush.msra.mxu0 0.0
        %1798 = vmatpush.msra.mxu0 0.0
        %1799 = vmatpush.msra.mxu0 0.0
        %1800 = vmatpush.msra.mxu0 0.0
        %1801 = vmatpush.msra.mxu0 0.0
        %1802 = vmatpush.msra.mxu0 0.0
        %1803 = vmatpush.msra.mxu0 0.0
        %1804 = vmatpush.msra.mxu0 0.0
        %1805 = vmatpush.msra.mxu0 0.0
        %1806 = vmatpush.msra.mxu0 0.0
        %1807 = vmatpush.msra.mxu0 0.0
        %1808 = vmatpush.msra.mxu0 %v1576
        %1809 = vmatmul.f32.gmra.mxu0 %v1791
        %v1810 = vpop.f32.mrf.mxu0
        %v1811 = vadd.f32 0.0, %v1810
        %1812 = vdwg.mxu0
        %v1814 = vsel %vm1023, %v1787, 0
        %1816 = vmatpush.msra.mxu0 0.0
        %1817 = vmatpush.msra.mxu0 0.0
        %1818 = vmatpush.msra.mxu0 0.0
        %1819 = vmatpush.msra.mxu0 0.0
        %1820 = vmatpush.msra.mxu0 0.0
        %1821 = vmatpush.msra.mxu0 0.0
        %1822 = vmatpush.msra.mxu0 0.0
        %1823 = vmatpush.msra.mxu0 0.0
        %1824 = vmatpush.msra.mxu0 0.0
        %1825 = vmatpush.msra.mxu0 0.0
        %1826 = vmatpush.msra.mxu0 0.0
        %1827 = vmatpush.msra.mxu0 0.0
        %1828 = vmatpush.msra.mxu0 0.0
        %1829 = vmatpush.msra.mxu0 0.0
        %1830 = vmatpush.msra.mxu0 0.0
        %1831 = vmatpush.msra.mxu0 %v1596
        %1832 = vmatmul.f32.gmra.mxu0 %v1814
        %v1833 = vpop.f32.mrf.mxu0
        %v1834 = vadd.f32 0.0, %v1833
        %1835 = vdwg.mxu0
        %v1837 = vsel %vm1023, %v1788, 0
        %1839 = vmatpush.msra.mxu0 0.0
        %1840 = vmatpush.msra.mxu0 0.0
        %1841 = vmatpush.msra.mxu0 0.0
        %1842 = vmatpush.msra.mxu0 0.0
        %1843 = vmatpush.msra.mxu0 0.0
        %1844 = vmatpush.msra.mxu0 0.0
        %1845 = vmatpush.msra.mxu0 0.0
        %1846 = vmatpush.msra.mxu0 0.0
        %1847 = vmatpush.msra.mxu0 0.0
        %1848 = vmatpush.msra.mxu0 0.0
        %1849 = vmatpush.msra.mxu0 0.0
        %1850 = vmatpush.msra.mxu0 0.0
        %1851 = vmatpush.msra.mxu0 0.0
        %1852 = vmatpush.msra.mxu0 0.0
        %1853 = vmatpush.msra.mxu0 0.0
        %1854 = vmatpush.msra.mxu0 %v1616
        %1855 = vmatmul.f32.gmra.mxu0 %v1837
        %v1856 = vpop.f32.mrf.mxu0
        %v1857 = vadd.f32 0.0, %v1856
        %1858 = vdwg.mxu0
        %v1860 = vsel %vm1023, %v1789, 0
        %1862 = vmatpush.msra.mxu0 0.0
        %1863 = vmatpush.msra.mxu0 0.0
        %1864 = vmatpush.msra.mxu0 0.0
        %1865 = vmatpush.msra.mxu0 0.0
        %1866 = vmatpush.msra.mxu0 0.0
        %1867 = vmatpush.msra.mxu0 0.0
        %1868 = vmatpush.msra.mxu0 0.0
        %1869 = vmatpush.msra.mxu0 0.0
        %1870 = vmatpush.msra.mxu0 0.0
        %1871 = vmatpush.msra.mxu0 0.0
        %1872 = vmatpush.msra.mxu0 0.0
        %1873 = vmatpush.msra.mxu0 0.0
        %1874 = vmatpush.msra.mxu0 0.0
        %1875 = vmatpush.msra.mxu0 0.0
        %1876 = vmatpush.msra.mxu0 0.0
        %1877 = vmatpush.msra.mxu0 %v1636
        %1878 = vmatmul.f32.gmra.mxu0 %v1860
        %v1879 = vpop.f32.mrf.mxu0
        %v1880 = vadd.f32 0.0, %v1879
        %1881 = vdwg.mxu0
        %v1883 = vsel %vm1023, %v1811, 0
        %1885 = vmatpush.msra.mxu0 0.0
        %1886 = vmatpush.msra.mxu0 0.0
        %1887 = vmatpush.msra.mxu0 0.0
        %1888 = vmatpush.msra.mxu0 0.0
        %1889 = vmatpush.msra.mxu0 0.0
        %1890 = vmatpush.msra.mxu0 0.0
        %1891 = vmatpush.msra.mxu0 0.0
        %1892 = vmatpush.msra.mxu0 0.0
        %1893 = vmatpush.msra.mxu0 0.0
        %1894 = vmatpush.msra.mxu0 0.0
        %1895 = vmatpush.msra.mxu0 0.0
        %1896 = vmatpush.msra.mxu0 0.0
        %1897 = vmatpush.msra.mxu0 0.0
        %1898 = vmatpush.msra.mxu0 0.0
        %1899 = vmatpush.msra.mxu0 0.0
        %1900 = vmatpush.msra.mxu0 %v707
        %1901 = vmatmul.f32.gmra.mxu0 %v1883
        %v1902 = vpop.f32.mrf.mxu0
        %v1903 = vadd.f32 0.0, %v1902
        %1904 = vdwg.mxu0
        %v1906 = vsel %vm1023, %v1834, 0
        %1908 = vmatpush.msra.mxu0 0.0
        %1909 = vmatpush.msra.mxu0 0.0
        %1910 = vmatpush.msra.mxu0 0.0
        %1911 = vmatpush.msra.mxu0 0.0
        %1912 = vmatpush.msra.mxu0 0.0
        %1913 = vmatpush.msra.mxu0 0.0
        %1914 = vmatpush.msra.mxu0 0.0
        %1915 = vmatpush.msra.mxu0 0.0
        %1916 = vmatpush.msra.mxu0 0.0
        %1917 = vmatpush.msra.mxu0 0.0
        %1918 = vmatpush.msra.mxu0 0.0
        %1919 = vmatpush.msra.mxu0 0.0
        %1920 = vmatpush.msra.mxu0 0.0
        %1921 = vmatpush.msra.mxu0 0.0
        %1922 = vmatpush.msra.mxu0 0.0
        %1923 = vmatpush.msra.mxu0 %v708
        %1924 = vmatmul.f32.gmra.mxu0 %v1906
        %v1925 = vpop.f32.mrf.mxu0
        %v1926 = vadd.f32 0.0, %v1925
        %1927 = vdwg.mxu0
        %v1929 = vsel %vm1023, %v1857, 0
        %1931 = vmatpush.msra.mxu0 0.0
        %1932 = vmatpush.msra.mxu0 0.0
        %1933 = vmatpush.msra.mxu0 0.0
        %1934 = vmatpush.msra.mxu0 0.0
        %1935 = vmatpush.msra.mxu0 0.0
        %1936 = vmatpush.msra.mxu0 0.0
        %1937 = vmatpush.msra.mxu0 0.0
        %1938 = vmatpush.msra.mxu0 0.0
        %1939 = vmatpush.msra.mxu0 0.0
        %1940 = vmatpush.msra.mxu0 0.0
        %1941 = vmatpush.msra.mxu0 0.0
        %1942 = vmatpush.msra.mxu0 0.0
        %1943 = vmatpush.msra.mxu0 0.0
        %1944 = vmatpush.msra.mxu0 0.0
        %1945 = vmatpush.msra.mxu0 0.0
        %1946 = vmatpush.msra.mxu0 %v709
        %1947 = vmatmul.f32.gmra.mxu0 %v1929
        %v1948 = vpop.f32.mrf.mxu0
        %v1949 = vadd.f32 0.0, %v1948
        %1950 = vdwg.mxu0
        %v1952 = vsel %vm1023, %v1880, 0
        %1954 = vmatpush.msra.mxu0 0.0
        %1955 = vmatpush.msra.mxu0 0.0
        %1956 = vmatpush.msra.mxu0 0.0
        %1957 = vmatpush.msra.mxu0 0.0
        %1958 = vmatpush.msra.mxu0 0.0
        %1959 = vmatpush.msra.mxu0 0.0
        %1960 = vmatpush.msra.mxu0 0.0
        %1961 = vmatpush.msra.mxu0 0.0
        %1962 = vmatpush.msra.mxu0 0.0
        %1963 = vmatpush.msra.mxu0 0.0
        %1964 = vmatpush.msra.mxu0 0.0
        %1965 = vmatpush.msra.mxu0 0.0
        %1966 = vmatpush.msra.mxu0 0.0
        %1967 = vmatpush.msra.mxu0 0.0
        %1968 = vmatpush.msra.mxu0 0.0
        %1969 = vmatpush.msra.mxu0 %v710
        %1970 = vmatmul.f32.gmra.mxu0 %v1952
        %v1971 = vpop.f32.mrf.mxu0
        %v1972 = vadd.f32 0.0, %v1971
        %1973 = vdwg.mxu0
        %v1974 = vsel %vm751, %v1903, 0.0
        %v1975 = vsel %vm751, %v1926, 0.0
        %v1976 = vadd.f32 %v1974, %v1975
        %v1977 = vsel %vm751, %v1949, 0.0
        %v1978 = vadd.f32 %v1976, %v1977
        %v1979 = vsel %vm751, %v1972, 0.0
        %v1980 = vadd.f32 %v1978, %v1979
        %v1981 = vadd.f32 %v1980, %v1364
        %v1982 = vadd.f32 %v1391, %v1981
        %1983 = vmatpush.msra.mxu0 0.0
        %1984 = vmatpush.msra.mxu0 0.0
        %1985 = vmatpush.msra.mxu0 0.0
        %1986 = vmatpush.msra.mxu0 0.0
        %1987 = vmatpush.msra.mxu0 0.0
        %1988 = vmatpush.msra.mxu0 0.0
        %1989 = vmatpush.msra.mxu0 0.0
        %1990 = vmatpush.msra.mxu0 0.0
        %1991 = vmatpush.msra.mxu0 0.0
        %1992 = vmatpush.msra.mxu0 0.0
        %1993 = vmatpush.msra.mxu0 0.0
        %1994 = vmatpush.msra.mxu0 0.0
        %1995 = vmatpush.msra.mxu0 0.0
        %1996 = vmatpush.msra.mxu0 0.0
        %1997 = vmatpush.msra.mxu0 0.0
        %1998 = vmatpush.msra.mxu0 %v1982
        %1999 = vmatmul.f32.gmra.mxu0 %v1369
        %v2000 = vpop.f32.mrf.mxu0
        %v2001 = vadd.f32 0.0, %v2000
        %2002 = vdwg.mxu0
        %v2003 = vsub.f32 %v1982, %v2001
        %v2005 = vperm.slane %v716, 0
        %v2008 = vsel %vm751, %v2003, 0
        %2010 = vmatpush.msra.mxu0 0.0
        %2011 = vmatpush.msra.mxu0 0.0
        %2012 = vmatpush.msra.mxu0 0.0
        %2013 = vmatpush.msra.mxu0 0.0
        %2014 = vmatpush.msra.mxu0 0.0
        %2015 = vmatpush.msra.mxu0 0.0
        %2016 = vmatpush.msra.mxu0 0.0
        %2017 = vmatpush.msra.mxu0 0.0
        %2018 = vmatpush.msra.mxu0 0.0
        %2019 = vmatpush.msra.mxu0 0.0
        %2020 = vmatpush.msra.mxu0 0.0
        %2021 = vmatpush.msra.mxu0 0.0
        %2022 = vmatpush.msra.mxu0 %v715
        %2023 = vmatpush.msra.mxu0 %v714
        %2024 = vmatpush.msra.mxu0 %v713
        %2025 = vmatpush.msra.mxu0 %v712
        %2026 = vmatmul.f32.gmra.mxu0 %v2008
        %v2027 = vpop.f32.mrf.mxu0
        %v2028 = vadd.f32 %v2005, %v2027
        %2029 = vdwg.mxu0
        %v2030 = vmul.f32 %v2028, 0.5
        %v2031 = vmul.f32 %v2028, 0.044715
        %v2032 = vmul.f32 %v2031, %v2028
        %v2033 = vmul.f32 %v2032, %v2028
        %v2034 = vadd.f32 %v2028, %v2033
        %v2035 = vmul.f32 %v2034, 0.7978846
        %v2036 = vtanh.pop %v2035
        %v2037 = vadd.f32 %v2036, 1.0
        %v2038 = vmul.f32 %v2030, %v2037
        %vm2039 = vcmask 523264
        %v2041 = vsel %vm2039, %v2038, 0
        %2043 = vmatpush.msra.mxu0 0.0
        %2044 = vmatpush.msra.mxu0 0.0
        %2045 = vmatpush.msra.mxu0 0.0
        %2046 = vmatpush.msra.mxu0 0.0
        %2047 = vmatpush.msra.mxu0 0.0
        %2048 = vmatpush.msra.mxu0 0.0
        %2049 = vmatpush.msra.mxu0 0.0
        %2050 = vmatpush.msra.mxu0 0.0
        %2051 = vmatpush.msra.mxu0 %v724
        %2052 = vmatpush.msra.mxu0 %v723
        %2053 = vmatpush.msra.mxu0 %v722
        %2054 = vmatpush.msra.mxu0 %v721
        %2055 = vmatpush.msra.mxu0 %v720
        %2056 = vmatpush.msra.mxu0 %v719
        %2057 = vmatpush.msra.mxu0 %v718
        %2058 = vmatpush.msra.mxu0 %v717
        %2059 = vmatmul.f32.gmra.mxu0 %v2041
        %v2060 = vpop.f32.mrf.mxu0
        %v2061 = vadd.f32 0.0, %v2060
        %2062 = vdwg.mxu0
        %v2063 = vadd.f32 %v2003, %v2061
        %v2065 = vperm.slane %v725, 0
        %v2067 = vadd.f32 %v2063, %v2065
        %2068 = vmatpush.msra.mxu0 0.0
        %2069 = vmatpush.msra.mxu0 0.0
        %2070 = vmatpush.msra.mxu0 0.0
        %2071 = vmatpush.msra.mxu0 0.0
        %2072 = vmatpush.msra.mxu0 0.0
        %2073 = vmatpush.msra.mxu0 0.0
        %2074 = vmatpush.msra.mxu0 0.0
        %2075 = vmatpush.msra.mxu0 0.0
        %2076 = vmatpush.msra.mxu0 0.0
        %2077 = vmatpush.msra.mxu0 0.0
        %2078 = vmatpush.msra.mxu0 0.0
        %2079 = vmatpush.msra.mxu0 0.0
        %2080 = vmatpush.msra.mxu0 0.0
        %2081 = vmatpush.msra.mxu0 0.0
        %2082 = vmatpush.msra.mxu0 0.0
        %2083 = vmatpush.msra.mxu0 %v2067
        %2084 = vmatmul.f32.gmra.mxu0 %v1369
        %v2085 = vpop.f32.mrf.mxu0
        %v2086 = vadd.f32 0.0, %v2085
        %2087 = vdwg.mxu0
        %v2088 = vsub.f32 %v2067, %v2086
        %v2089 = vadd.f32 %v1389, %v2001
        %v2090 = vadd.f32 %v2089, %v2086
        %v2092 = vrot.slane %v2090, 7
        %vm2094 = vcmask 1040384
        %v2095 = vsel %vm2094, 0.0, %v2092
        %v2096 = vrot.slane %v2090, 1
        %vm2098 = vcmask 1046528
        %v2099 = vsel %vm2098, %v2096, 0.0
        %2100 = vrot.lane.b32.xlu0 %v2090, 32
        %v2101 = vpop.permute.xlu0 %2100
        %2104 = vrot.lane.b32.xlu0 %v2099, 64
        %v2105 = vpop.permute.xlu0 %2104
        %v2107 = vsel %vm751, %v2095, %v2101
        %v2108 = vsel %vm2039, %v2107, %v2105
        %vm2109 = vcmask 785408
        %v2111 = vsel %vm2109, %v2108, 0
        %2113 = vmatpush.msra.mxu0 0.0
        %2114 = vmatpush.msra.mxu0 0.0
        %2115 = vmatpush.msra.mxu0 0.0
        %2116 = vmatpush.msra.mxu0 0.0
        %2117 = vmatpush.msra.mxu0 %v737
        %2118 = vmatpush.msra.mxu0 %v736
        %2119 = vmatpush.msra.mxu0 %v735
        %2120 = vmatpush.msra.mxu0 %v734
        %2121 = vmatpush.msra.mxu0 %v733
        %2122 = vmatpush.msra.mxu0 %v732
        %2123 = vmatpush.msra.mxu0 %v731
        %2124 = vmatpush.msra.mxu0 %v730
        %2125 = vmatpush.msra.mxu0 %v729
        %2126 = vmatpush.msra.mxu0 %v728
        %2127 = vmatpush.msra.mxu0 %v727
        %2128 = vmatpush.msra.mxu0 %v726
        %2129 = vmatmul.f32.gmra.mxu0 %v2111
        %v2130 = vpop.f32.mrf.mxu0
        %v2131 = vadd.f32 0.0, %v2130
        %2132 = vdwg.mxu0
        %v2133 = vadd.f32 %v644, %v2131
        %v2135 = vperm.slane %v738, 0
        %v2137 = vadd.f32 %v2133, %v2135
        %s2138 = scalar_lea.vmem %s4, 128
        %v2139 = vld [vmem:[%s2138] sm:$0xff]
        %v2140 = vld [vmem:[%s2138 + $0x8] sm:$0xff]
        %v2141 = vld [vmem:[%s2138 + $0x10] sm:$0xff]
        %v2142 = vld [vmem:[%s2138 + $0x18] sm:$0xff]
        %v2143 = vld [vmem:[%s2138 + $0x20] sm:$0xff]
        %v2144 = vld [vmem:[%s2138 + $0x28] sm:$0xff]
        %v2145 = vld [vmem:[%s2138 + $0x30] sm:$0xff]
        %v2146 = vld [vmem:[%s2138 + $0x38] sm:$0xff]
        %v2147 = vld [vmem:[%s2138 + $0x40] sm:$0xff]
        %v2148 = vld [vmem:[%s2138 + $0x48] sm:$0xff]
        %v2149 = vld [vmem:[%s2138 + $0x50] sm:$0xff]
        %v2150 = vld [vmem:[%s2138 + $0x58] sm:$0xff]
        %v2151 = vld [vmem:[%s2138 + $0x60] sm:$0xff]
        %v2152 = vld [vmem:[%s2138 + $0x68] sm:$0xff]
        %v2153 = vld [vmem:[%s2138 + $0x70] sm:$0xff]
        %v2154 = vld [vmem:[%s2138 + $0x78] sm:$0xff]
        %s2155 = scalar_lea.vmem %s5, 4
        %v2156 = vld [vmem:[%s2155] sm:$0x1]
        %v2157 = vld [vmem:[%s2155 + $0x1] sm:$0x1]
        %v2158 = vld [vmem:[%s2155 + $0x2] sm:$0x1]
        %v2159 = vld [vmem:[%s2155 + $0x3] sm:$0x1]
        %s2160 = scalar_lea.vmem %s6, 128
        %v2161 = vld [vmem:[%s2160] sm:$0xff]
        %v2162 = vld [vmem:[%s2160 + $0x8] sm:$0xff]
        %v2163 = vld [vmem:[%s2160 + $0x10] sm:$0xff]
        %v2164 = vld [vmem:[%s2160 + $0x18] sm:$0xff]
        %v2165 = vld [vmem:[%s2160 + $0x20] sm:$0xff]
        %v2166 = vld [vmem:[%s2160 + $0x28] sm:$0xff]
        %v2167 = vld [vmem:[%s2160 + $0x30] sm:$0xff]
        %v2168 = vld [vmem:[%s2160 + $0x38] sm:$0xff]
        %v2169 = vld [vmem:[%s2160 + $0x40] sm:$0xff]
        %v2170 = vld [vmem:[%s2160 + $0x48] sm:$0xff]
        %v2171 = vld [vmem:[%s2160 + $0x50] sm:$0xff]
        %v2172 = vld [vmem:[%s2160 + $0x58] sm:$0xff]
        %v2173 = vld [vmem:[%s2160 + $0x60] sm:$0xff]
        %v2174 = vld [vmem:[%s2160 + $0x68] sm:$0xff]
        %v2175 = vld [vmem:[%s2160 + $0x70] sm:$0xff]
        %v2176 = vld [vmem:[%s2160 + $0x78] sm:$0xff]
        %s2177 = scalar_lea.vmem %s7, 4
        %v2178 = vld [vmem:[%s2177] sm:$0x1]
        %v2179 = vld [vmem:[%s2177 + $0x1] sm:$0x1]
        %v2180 = vld [vmem:[%s2177 + $0x2] sm:$0x1]
        %v2181 = vld [vmem:[%s2177 + $0x3] sm:$0x1]
        %s2182 = scalar_lea.vmem %s8, 128
        %v2183 = vld [vmem:[%s2182] sm:$0xff]
        %v2184 = vld [vmem:[%s2182 + $0x8] sm:$0xff]
        %v2185 = vld [vmem:[%s2182 + $0x10] sm:$0xff]
        %v2186 = vld [vmem:[%s2182 + $0x18] sm:$0xff]
        %v2187 = vld [vmem:[%s2182 + $0x20] sm:$0xff]
        %v2188 = vld [vmem:[%s2182 + $0x28] sm:$0xff]
        %v2189 = vld [vmem:[%s2182 + $0x30] sm:$0xff]
        %v2190 = vld [vmem:[%s2182 + $0x38] sm:$0xff]
        %v2191 = vld [vmem:[%s2182 + $0x40] sm:$0xff]
        %v2192 = vld [vmem:[%s2182 + $0x48] sm:$0xff]
        %v2193 = vld [vmem:[%s2182 + $0x50] sm:$0xff]
        %v2194 = vld [vmem:[%s2182 + $0x58] sm:$0xff]
        %v2195 = vld [vmem:[%s2182 + $0x60] sm:$0xff]
        %v2196 = vld [vmem:[%s2182 + $0x68] sm:$0xff]
        %v2197 = vld [vmem:[%s2182 + $0x70] sm:$0xff]
        %v2198 = vld [vmem:[%s2182 + $0x78] sm:$0xff]
        %s2199 = scalar_lea.vmem %s9, 4
        %v2200 = vld [vmem:[%s2199] sm:$0x1]
        %v2201 = vld [vmem:[%s2199 + $0x1] sm:$0x1]
        %v2202 = vld [vmem:[%s2199 + $0x2] sm:$0x1]
        %v2203 = vld [vmem:[%s2199 + $0x3] sm:$0x1]
        %s2204 = scalar_lea.vmem %s10, 32
        %v2205 = vld [vmem:[%s2204] sm:$0xff]
        %v2206 = vld [vmem:[%s2204 + $0x8] sm:$0xff]
        %v2207 = vld [vmem:[%s2204 + $0x10] sm:$0xff]
        %v2208 = vld [vmem:[%s2204 + $0x18] sm:$0xff]
        %s2209 = scalar_lea.vmem %s11, 1
        %v2210 = vld [vmem:[%s2209] sm:$0x1]
        %s2211 = scalar_lea.vmem %s12, 32
        %v2212 = vld [vmem:[%s2211] sm:$0xff]
        %v2213 = vld [vmem:[%s2211 + $0x8] sm:$0xff]
        %v2214 = vld [vmem:[%s2211 + $0x10] sm:$0xff]
        %v2215 = vld [vmem:[%s2211 + $0x18] sm:$0xff]
        %s2216 = scalar_lea.vmem %s13, 1
        %v2217 = vld [vmem:[%s2216] sm:$0x1]
        %s2218 = scalar_lea.vmem %s14, 64
        %v2219 = vld [vmem:[%s2218] sm:$0xff]
        %v2220 = vld [vmem:[%s2218 + $0x8] sm:$0xff]
        %v2221 = vld [vmem:[%s2218 + $0x10] sm:$0xff]
        %v2222 = vld [vmem:[%s2218 + $0x18] sm:$0xff]
        %v2223 = vld [vmem:[%s2218 + $0x20] sm:$0xff]
        %v2224 = vld [vmem:[%s2218 + $0x28] sm:$0xff]
        %v2225 = vld [vmem:[%s2218 + $0x30] sm:$0xff]
        %v2226 = vld [vmem:[%s2218 + $0x38] sm:$0xff]
        %s2227 = scalar_lea.vmem %s15, 1
        %v2228 = vld [vmem:[%s2227] sm:$0x1]
        %s2229 = scalar_lea.vmem %s16, 96
        %v2230 = vld [vmem:[%s2229] sm:$0xff]
        %v2231 = vld [vmem:[%s2229 + $0x8] sm:$0xff]
        %v2232 = vld [vmem:[%s2229 + $0x10] sm:$0xff]
        %v2233 = vld [vmem:[%s2229 + $0x18] sm:$0xff]
        %v2234 = vld [vmem:[%s2229 + $0x20] sm:$0xff]
        %v2235 = vld [vmem:[%s2229 + $0x28] sm:$0xff]
        %v2236 = vld [vmem:[%s2229 + $0x30] sm:$0xff]
        %v2237 = vld [vmem:[%s2229 + $0x38] sm:$0xff]
        %v2238 = vld [vmem:[%s2229 + $0x40] sm:$0xff]
        %v2239 = vld [vmem:[%s2229 + $0x48] sm:$0xff]
        %v2240 = vld [vmem:[%s2229 + $0x50] sm:$0xff]
        %v2241 = vld [vmem:[%s2229 + $0x58] sm:$0xff]
        %s2242 = scalar_lea.vmem %s17, 1
        %v2243 = vld [vmem:[%s2242] sm:$0x1]
        %v2248 = vperm.slane %v2156, 0
        %v2249 = vperm.slane %v2157, 0
        %v2250 = vperm.slane %v2158, 0
        %v2251 = vperm.slane %v2159, 0
        %v2257 = vsel %vm751, %v2088, 0
        %2259 = vmatpush.msra.mxu0 0.0
        %2260 = vmatpush.msra.mxu0 0.0
        %2261 = vmatpush.msra.mxu0 0.0
        %2262 = vmatpush.msra.mxu0 0.0
        %2263 = vmatpush.msra.mxu0 0.0
        %2264 = vmatpush.msra.mxu0 0.0
        %2265 = vmatpush.msra.mxu0 0.0
        %2266 = vmatpush.msra.mxu0 0.0
        %2267 = vmatpush.msra.mxu0 0.0
        %2268 = vmatpush.msra.mxu0 0.0
        %2269 = vmatpush.msra.mxu0 0.0
        %2270 = vmatpush.msra.mxu0 0.0
        %2271 = vmatpush.msra.mxu0 %v2142
        %2272 = vmatpush.msra.mxu0 %v2141
        %2273 = vmatpush.msra.mxu0 %v2140
        %2274 = vmatpush.msra.mxu0 %v2139
        %2275 = vmatmul.f32.gmra.mxu0 %v2257
        %v2276 = vpop.f32.mrf.mxu0
        %v2277 = vadd.f32 %v2248, %v2276
        %2278 = vdwg.mxu0
        %2279 = vmatpush.msra.mxu0 0.0
        %2280 = vmatpush.msra.mxu0 0.0
        %2281 = vmatpush.msra.mxu0 0.0
        %2282 = vmatpush.msra.mxu0 0.0
        %2283 = vmatpush.msra.mxu0 0.0
        %2284 = vmatpush.msra.mxu0 0.0
        %2285 = vmatpush.msra.mxu0 0.0
        %2286 = vmatpush.msra.mxu0 0.0
        %2287 = vmatpush.msra.mxu0 0.0
        %2288 = vmatpush.msra.mxu0 0.0
        %2289 = vmatpush.msra.mxu0 0.0
        %2290 = vmatpush.msra.mxu0 0.0
        %2291 = vmatpush.msra.mxu0 %v2146
        %2292 = vmatpush.msra.mxu0 %v2145
        %2293 = vmatpush.msra.mxu0 %v2144
        %2294 = vmatpush.msra.mxu0 %v2143
        %2295 = vmatmul.f32.gmra.mxu0 %v2257
        %v2296 = vpop.f32.mrf.mxu0
        %v2297 = vadd.f32 %v2249, %v2296
        %2298 = vdwg.mxu0
        %2299 = vmatpush.msra.mxu0 0.0
        %2300 = vmatpush.msra.mxu0 0.0
        %2301 = vmatpush.msra.mxu0 0.0
        %2302 = vmatpush.msra.mxu0 0.0
        %2303 = vmatpush.msra.mxu0 0.0
        %2304 = vmatpush.msra.mxu0 0.0
        %2305 = vmatpush.msra.mxu0 0.0
        %2306 = vmatpush.msra.mxu0 0.0
        %2307 = vmatpush.msra.mxu0 0.0
        %2308 = vmatpush.msra.mxu0 0.0
        %2309 = vmatpush.msra.mxu0 0.0
        %2310 = vmatpush.msra.mxu0 0.0
        %2311 = vmatpush.msra.mxu0 %v2150
        %2312 = vmatpush.msra.mxu0 %v2149
        %2313 = vmatpush.msra.mxu0 %v2148
        %2314 = vmatpush.msra.mxu0 %v2147
        %2315 = vmatmul.f32.gmra.mxu0 %v2257
        %v2316 = vpop.f32.mrf.mxu0
        %v2317 = vadd.f32 %v2250, %v2316
        %2318 = vdwg.mxu0
        %2319 = vmatpush.msra.mxu0 0.0
        %2320 = vmatpush.msra.mxu0 0.0
        %2321 = vmatpush.msra.mxu0 0.0
        %2322 = vmatpush.msra.mxu0 0.0
        %2323 = vmatpush.msra.mxu0 0.0
        %2324 = vmatpush.msra.mxu0 0.0
        %2325 = vmatpush.msra.mxu0 0.0
        %2326 = vmatpush.msra.mxu0 0.0
        %2327 = vmatpush.msra.mxu0 0.0
        %2328 = vmatpush.msra.mxu0 0.0
        %2329 = vmatpush.msra.mxu0 0.0
        %2330 = vmatpush.msra.mxu0 0.0
        %2331 = vmatpush.msra.mxu0 %v2154
        %2332 = vmatpush.msra.mxu0 %v2153
        %2333 = vmatpush.msra.mxu0 %v2152
        %2334 = vmatpush.msra.mxu0 %v2151
        %2335 = vmatmul.f32.gmra.mxu0 %v2257
        %v2336 = vpop.f32.mrf.mxu0
        %v2337 = vadd.f32 %v2251, %v2336
        %2338 = vdwg.mxu0
        %v2343 = vperm.slane %v2178, 0
        %v2344 = vperm.slane %v2179, 0
        %v2345 = vperm.slane %v2180, 0
        %v2346 = vperm.slane %v2181, 0
        %2351 = vmatpush.msra.mxu0 0.0
        %2352 = vmatpush.msra.mxu0 0.0
        %2353 = vmatpush.msra.mxu0 0.0
        %2354 = vmatpush.msra.mxu0 0.0
        %2355 = vmatpush.msra.mxu0 0.0
        %2356 = vmatpush.msra.mxu0 0.0
        %2357 = vmatpush.msra.mxu0 0.0
        %2358 = vmatpush.msra.mxu0 0.0
        %2359 = vmatpush.msra.mxu0 0.0
        %2360 = vmatpush.msra.mxu0 0.0
        %2361 = vmatpush.msra.mxu0 0.0
        %2362 = vmatpush.msra.mxu0 0.0
        %2363 = vmatpush.msra.mxu0 %v2164
        %2364 = vmatpush.msra.mxu0 %v2163
        %2365 = vmatpush.msra.mxu0 %v2162
        %2366 = vmatpush.msra.mxu0 %v2161
        %2367 = vmatmul.f32.gmra.mxu0 %v2257
        %v2368 = vpop.f32.mrf.mxu0
        %v2369 = vadd.f32 %v2343, %v2368
        %2370 = vdwg.mxu0
        %2371 = vmatpush.msra.mxu0 0.0
        %2372 = vmatpush.msra.mxu0 0.0
        %2373 = vmatpush.msra.mxu0 0.0
        %2374 = vmatpush.msra.mxu0 0.0
        %2375 = vmatpush.msra.mxu0 0.0
        %2376 = vmatpush.msra.mxu0 0.0
        %2377 = vmatpush.msra.mxu0 0.0
        %2378 = vmatpush.msra.mxu0 0.0
        %2379 = vmatpush.msra.mxu0 0.0
        %2380 = vmatpush.msra.mxu0 0.0
        %2381 = vmatpush.msra.mxu0 0.0
        %2382 = vmatpush.msra.mxu0 0.0
        %2383 = vmatpush.msra.mxu0 %v2168
        %2384 = vmatpush.msra.mxu0 %v2167
        %2385 = vmatpush.msra.mxu0 %v2166
        %2386 = vmatpush.msra.mxu0 %v2165
        %2387 = vmatmul.f32.gmra.mxu0 %v2257
        %v2388 = vpop.f32.mrf.mxu0
        %v2389 = vadd.f32 %v2344, %v2388
        %2390 = vdwg.mxu0
        %2391 = vmatpush.msra.mxu0 0.0
        %2392 = vmatpush.msra.mxu0 0.0
        %2393 = vmatpush.msra.mxu0 0.0
        %2394 = vmatpush.msra.mxu0 0.0
        %2395 = vmatpush.msra.mxu0 0.0
        %2396 = vmatpush.msra.mxu0 0.0
        %2397 = vmatpush.msra.mxu0 0.0
        %2398 = vmatpush.msra.mxu0 0.0
        %2399 = vmatpush.msra.mxu0 0.0
        %2400 = vmatpush.msra.mxu0 0.0
        %2401 = vmatpush.msra.mxu0 0.0
        %2402 = vmatpush.msra.mxu0 0.0
        %2403 = vmatpush.msra.mxu0 %v2172
        %2404 = vmatpush.msra.mxu0 %v2171
        %2405 = vmatpush.msra.mxu0 %v2170
        %2406 = vmatpush.msra.mxu0 %v2169
        %2407 = vmatmul.f32.gmra.mxu0 %v2257
        %v2408 = vpop.f32.mrf.mxu0
        %v2409 = vadd.f32 %v2345, %v2408
        %2410 = vdwg.mxu0
        %2411 = vmatpush.msra.mxu0 0.0
        %2412 = vmatpush.msra.mxu0 0.0
        %2413 = vmatpush.msra.mxu0 0.0
        %2414 = vmatpush.msra.mxu0 0.0
        %2415 = vmatpush.msra.mxu0 0.0
        %2416 = vmatpush.msra.mxu0 0.0
        %2417 = vmatpush.msra.mxu0 0.0
        %2418 = vmatpush.msra.mxu0 0.0
        %2419 = vmatpush.msra.mxu0 0.0
        %2420 = vmatpush.msra.mxu0 0.0
        %2421 = vmatpush.msra.mxu0 0.0
        %2422 = vmatpush.msra.mxu0 0.0
        %2423 = vmatpush.msra.mxu0 %v2176
        %2424 = vmatpush.msra.mxu0 %v2175
        %2425 = vmatpush.msra.mxu0 %v2174
        %2426 = vmatpush.msra.mxu0 %v2173
        %2427 = vmatmul.f32.gmra.mxu0 %v2257
        %v2428 = vpop.f32.mrf.mxu0
        %v2429 = vadd.f32 %v2346, %v2428
        %2430 = vdwg.mxu0
        %v2435 = vperm.slane %v2200, 0
        %v2436 = vperm.slane %v2201, 0
        %v2437 = vperm.slane %v2202, 0
        %v2438 = vperm.slane %v2203, 0
        %2443 = vmatpush.msra.mxu0 0.0
        %2444 = vmatpush.msra.mxu0 0.0
        %2445 = vmatpush.msra.mxu0 0.0
        %2446 = vmatpush.msra.mxu0 0.0
        %2447 = vmatpush.msra.mxu0 0.0
        %2448 = vmatpush.msra.mxu0 0.0
        %2449 = vmatpush.msra.mxu0 0.0
        %2450 = vmatpush.msra.mxu0 0.0
        %2451 = vmatpush.msra.mxu0 0.0
        %2452 = vmatpush.msra.mxu0 0.0
        %2453 = vmatpush.msra.mxu0 0.0
        %2454 = vmatpush.msra.mxu0 0.0
        %2455 = vmatpush.msra.mxu0 %v2186
        %2456 = vmatpush.msra.mxu0 %v2185
        %2457 = vmatpush.msra.mxu0 %v2184
        %2458 = vmatpush.msra.mxu0 %v2183
        %2459 = vmatmul.f32.gmra.mxu0 %v2257
        %v2460 = vpop.f32.mrf.mxu0
        %v2461 = vadd.f32 %v2435, %v2460
        %2462 = vdwg.mxu0
        %2463 = vmatpush.msra.mxu0 0.0
        %2464 = vmatpush.msra.mxu0 0.0
        %2465 = vmatpush.msra.mxu0 0.0
        %2466 = vmatpush.msra.mxu0 0.0
        %2467 = vmatpush.msra.mxu0 0.0
        %2468 = vmatpush.msra.mxu0 0.0
        %2469 = vmatpush.msra.mxu0 0.0
        %2470 = vmatpush.msra.mxu0 0.0
        %2471 = vmatpush.msra.mxu0 0.0
        %2472 = vmatpush.msra.mxu0 0.0
        %2473 = vmatpush.msra.mxu0 0.0
        %2474 = vmatpush.msra.mxu0 0.0
        %2475 = vmatpush.msra.mxu0 %v2190
        %2476 = vmatpush.msra.mxu0 %v2189
        %2477 = vmatpush.msra.mxu0 %v2188
        %2478 = vmatpush.msra.mxu0 %v2187
        %2479 = vmatmul.f32.gmra.mxu0 %v2257
        %v2480 = vpop.f32.mrf.mxu0
        %v2481 = vadd.f32 %v2436, %v2480
        %2482 = vdwg.mxu0
        %2483 = vmatpush.msra.mxu0 0.0
        %2484 = vmatpush.msra.mxu0 0.0
        %2485 = vmatpush.msra.mxu0 0.0
        %2486 = vmatpush.msra.mxu0 0.0
        %2487 = vmatpush.msra.mxu0 0.0
        %2488 = vmatpush.msra.mxu0 0.0
        %2489 = vmatpush.msra.mxu0 0.0
        %2490 = vmatpush.msra.mxu0 0.0
        %2491 = vmatpush.msra.mxu0 0.0
        %2492 = vmatpush.msra.mxu0 0.0
        %2493 = vmatpush.msra.mxu0 0.0
        %2494 = vmatpush.msra.mxu0 0.0
        %2495 = vmatpush.msra.mxu0 %v2194
        %2496 = vmatpush.msra.mxu0 %v2193
        %2497 = vmatpush.msra.mxu0 %v2192
        %2498 = vmatpush.msra.mxu0 %v2191
        %2499 = vmatmul.f32.gmra.mxu0 %v2257
        %v2500 = vpop.f32.mrf.mxu0
        %v2501 = vadd.f32 %v2437, %v2500
        %2502 = vdwg.mxu0
        %2503 = vmatpush.msra.mxu0 0.0
        %2504 = vmatpush.msra.mxu0 0.0
        %2505 = vmatpush.msra.mxu0 0.0
        %2506 = vmatpush.msra.mxu0 0.0
        %2507 = vmatpush.msra.mxu0 0.0
        %2508 = vmatpush.msra.mxu0 0.0
        %2509 = vmatpush.msra.mxu0 0.0
        %2510 = vmatpush.msra.mxu0 0.0
        %2511 = vmatpush.msra.mxu0 0.0
        %2512 = vmatpush.msra.mxu0 0.0
        %2513 = vmatpush.msra.mxu0 0.0
        %2514 = vmatpush.msra.mxu0 0.0
        %2515 = vmatpush.msra.mxu0 %v2198
        %2516 = vmatpush.msra.mxu0 %v2197
        %2517 = vmatpush.msra.mxu0 %v2196
        %2518 = vmatpush.msra.mxu0 %v2195
        %2519 = vmatmul.f32.gmra.mxu0 %v2257
        %v2520 = vpop.f32.mrf.mxu0
        %v2521 = vadd.f32 %v2438, %v2520
        %2522 = vdwg.mxu0
        %v2523 = vmul.f32 %v2277, 0.35355338
        %v2524 = vmul.f32 %v2297, 0.35355338
        %v2525 = vmul.f32 %v2317, 0.35355338
        %v2526 = vmul.f32 %v2337, 0.35355338
        %v2528 = vsel %vm1023, %v2523, 0
        %v2531 = vsel %vm1023, %v2369, 0
        %2533 = vmatpush.xpose.msra.mxu0 0.0
        %2534 = vmatpush.xpose.msra.mxu0 0.0
        %2535 = vmatpush.xpose.msra.mxu0 0.0
        %2536 = vmatpush.xpose.msra.mxu0 0.0
        %2537 = vmatpush.xpose.msra.mxu0 0.0
        %2538 = vmatpush.xpose.msra.mxu0 0.0
        %2539 = vmatpush.xpose.msra.mxu0 0.0
        %2540 = vmatpush.xpose.msra.mxu0 0.0
        %2541 = vmatpush.xpose.msra.mxu0 0.0
        %2542 = vmatpush.xpose.msra.mxu0 0.0
        %2543 = vmatpush.xpose.msra.mxu0 0.0
        %2544 = vmatpush.xpose.msra.mxu0 0.0
        %2545 = vmatpush.xpose.msra.mxu0 0.0
        %2546 = vmatpush.xpose.msra.mxu0 0.0
        %2547 = vmatpush.xpose.msra.mxu0 0.0
        %2548 = vmatpush.xpose.msra.mxu0 %v2531
        %2549 = vmatmul.f32.gmra.mxu0 %v2528
        %v2550 = vpop.f32.mrf.mxu0
        %v2551 = vadd.f32 0.0, %v2550
        %2552 = vdwg.mxu0
        %v2554 = vsel %vm1023, %v2524, 0
        %v2557 = vsel %vm1023, %v2389, 0
        %2559 = vmatpush.xpose.msra.mxu0 0.0
        %2560 = vmatpush.xpose.msra.mxu0 0.0
        %2561 = vmatpush.xpose.msra.mxu0 0.0
        %2562 = vmatpush.xpose.msra.mxu0 0.0
        %2563 = vmatpush.xpose.msra.mxu0 0.0
        %2564 = vmatpush.xpose.msra.mxu0 0.0
        %2565 = vmatpush.xpose.msra.mxu0 0.0
        %2566 = vmatpush.xpose.msra.mxu0 0.0
        %2567 = vmatpush.xpose.msra.mxu0 0.0
        %2568 = vmatpush.xpose.msra.mxu0 0.0
        %2569 = vmatpush.xpose.msra.mxu0 0.0
        %2570 = vmatpush.xpose.msra.mxu0 0.0
        %2571 = vmatpush.xpose.msra.mxu0 0.0
        %2572 = vmatpush.xpose.msra.mxu0 0.0
        %2573 = vmatpush.xpose.msra.mxu0 0.0
        %2574 = vmatpush.xpose.msra.mxu0 %v2557
        %2575 = vmatmul.f32.gmra.mxu0 %v2554
        %v2576 = vpop.f32.mrf.mxu0
        %v2577 = vadd.f32 0.0, %v2576
        %2578 = vdwg.mxu0
        %v2580 = vsel %vm1023, %v2525, 0
        %v2583 = vsel %vm1023, %v2409, 0
        %2585 = vmatpush.xpose.msra.mxu0 0.0
        %2586 = vmatpush.xpose.msra.mxu0 0.0
        %2587 = vmatpush.xpose.msra.mxu0 0.0
        %2588 = vmatpush.xpose.msra.mxu0 0.0
        %2589 = vmatpush.xpose.msra.mxu0 0.0
        %2590 = vmatpush.xpose.msra.mxu0 0.0
        %2591 = vmatpush.xpose.msra.mxu0 0.0
        %2592 = vmatpush.xpose.msra.mxu0 0.0
        %2593 = vmatpush.xpose.msra.mxu0 0.0
        %2594 = vmatpush.xpose.msra.mxu0 0.0
        %2595 = vmatpush.xpose.msra.mxu0 0.0
        %2596 = vmatpush.xpose.msra.mxu0 0.0
        %2597 = vmatpush.xpose.msra.mxu0 0.0
        %2598 = vmatpush.xpose.msra.mxu0 0.0
        %2599 = vmatpush.xpose.msra.mxu0 0.0
        %2600 = vmatpush.xpose.msra.mxu0 %v2583
        %2601 = vmatmul.f32.gmra.mxu0 %v2580
        %v2602 = vpop.f32.mrf.mxu0
        %v2603 = vadd.f32 0.0, %v2602
        %2604 = vdwg.mxu0
        %v2606 = vsel %vm1023, %v2526, 0
        %v2609 = vsel %vm1023, %v2429, 0
        %2611 = vmatpush.xpose.msra.mxu0 0.0
        %2612 = vmatpush.xpose.msra.mxu0 0.0
        %2613 = vmatpush.xpose.msra.mxu0 0.0
        %2614 = vmatpush.xpose.msra.mxu0 0.0
        %2615 = vmatpush.xpose.msra.mxu0 0.0
        %2616 = vmatpush.xpose.msra.mxu0 0.0
        %2617 = vmatpush.xpose.msra.mxu0 0.0
        %2618 = vmatpush.xpose.msra.mxu0 0.0
        %2619 = vmatpush.xpose.msra.mxu0 0.0
        %2620 = vmatpush.xpose.msra.mxu0 0.0
        %2621 = vmatpush.xpose.msra.mxu0 0.0
        %2622 = vmatpush.xpose.msra.mxu0 0.0
        %2623 = vmatpush.xpose.msra.mxu0 0.0
        %2624 = vmatpush.xpose.msra.mxu0 0.0
        %2625 = vmatpush.xpose.msra.mxu0 0.0
        %2626 = vmatpush.xpose.msra.mxu0 %v2609
        %2627 = vmatmul.f32.gmra.mxu0 %v2606
        %v2628 = vpop.f32.mrf.mxu0
        %v2629 = vadd.f32 0.0, %v2628
        %2630 = vdwg.mxu0
        %v2631 = vsel %vm1023, %v2551, -inf
        %2632 = vmax.xlane.f32.xlu0 %v2631
        %v2633 = vpop.xlane.xlu0 %2632
        %v2634 = vsel %vm1023, %v2577, -inf
        %2635 = vmax.xlane.f32.xlu0 %v2634
        %v2636 = vpop.xlane.xlu0 %2635
        %v2637 = vsel %vm1023, %v2603, -inf
        %2638 = vmax.xlane.f32.xlu0 %v2637
        %v2639 = vpop.xlane.xlu0 %2638
        %v2640 = vsel %vm1023, %v2629, -inf
        %2641 = vmax.xlane.f32.xlu0 %v2640
        %v2642 = vpop.xlane.xlu0 %2641
        %v2643 = vsub.f32 %v2551, %v2633
        %v2644 = vsub.f32 %v2577, %v2636
        %v2645 = vsub.f32 %v2603, %v2639
        %v2646 = vsub.f32 %v2629, %v2642
        %v2647 = vmul.f32 %v2643, 1.442695
        %v2648 = vpow.pop %v2647
        %v2649 = vmul.f32 %v2644, 1.442695
        %v2650 = vpow.pop %v2649
        %v2651 = vmul.f32 %v2645, 1.442695
        %v2652 = vpow.pop %v2651
        %v2653 = vmul.f32 %v2646, 1.442695
        %v2654 = vpow.pop %v2653
        %v2655 = vsel %vm1023, %v2648, 0.0
        %2656 = vadd.xlane.f32.xlu0 %v2655
        %v2657 = vpop.xlane.xlu0 %2656
        %v2658 = vsel %vm1023, %v2650, 0.0
        %2659 = vadd.xlane.f32.xlu0 %v2658
        %v2660 = vpop.xlane.xlu0 %2659
        %v2661 = vsel %vm1023, %v2652, 0.0
        %2662 = vadd.xlane.f32.xlu0 %v2661
        %v2663 = vpop.xlane.xlu0 %2662
        %v2664 = vsel %vm1023, %v2654, 0.0
        %2665 = vadd.xlane.f32.xlu0 %v2664
        %v2666 = vpop.xlane.xlu0 %2665
        %v2667 = vrcp.pop %v2657
        %v2668 = vrcp.pop %v2660
        %v2669 = vrcp.pop %v2663
        %v2670 = vrcp.pop %v2666
        %v2671 = vmul.f32 %v2648, %v2667
        %v2672 = vmul.f32 %v2650, %v2668
        %v2673 = vmul.f32 %v2652, %v2669
        %v2674 = vmul.f32 %v2654, %v2670
        %v2676 = vsel %vm1023, %v2671, 0
        %2678 = vmatpush.msra.mxu0 0.0
        %2679 = vmatpush.msra.mxu0 0.0
        %2680 = vmatpush.msra.mxu0 0.0
        %2681 = vmatpush.msra.mxu0 0.0
        %2682 = vmatpush.msra.mxu0 0.0
        %2683 = vmatpush.msra.mxu0 0.0
        %2684 = vmatpush.msra.mxu0 0.0
        %2685 = vmatpush.msra.mxu0 0.0
        %2686 = vmatpush.msra.mxu0 0.0
        %2687 = vmatpush.msra.mxu0 0.0
        %2688 = vmatpush.msra.mxu0 0.0
        %2689 = vmatpush.msra.mxu0 0.0
        %2690 = vmatpush.msra.mxu0 0.0
        %2691 = vmatpush.msra.mxu0 0.0
        %2692 = vmatpush.msra.mxu0 0.0
        %2693 = vmatpush.msra.mxu0 %v2461
        %2694 = vmatmul.f32.gmra.mxu0 %v2676
        %v2695 = vpop.f32.mrf.mxu0
        %v2696 = vadd.f32 0.0, %v2695
        %2697 = vdwg.mxu0
        %v2699 = vsel %vm1023, %v2672, 0
        %2701 = vmatpush.msra.mxu0 0.0
        %2702 = vmatpush.msra.mxu0 0.0
        %2703 = vmatpush.msra.mxu0 0.0
        %2704 = vmatpush.msra.mxu0 0.0
        %2705 = vmatpush.msra.mxu0 0.0
        %2706 = vmatpush.msra.mxu0 0.0
        %2707 = vmatpush.msra.mxu0 0.0
        %2708 = vmatpush.msra.mxu0 0.0
        %2709 = vmatpush.msra.mxu0 0.0
        %2710 = vmatpush.msra.mxu0 0.0
        %2711 = vmatpush.msra.mxu0 0.0
        %2712 = vmatpush.msra.mxu0 0.0
        %2713 = vmatpush.msra.mxu0 0.0
        %2714 = vmatpush.msra.mxu0 0.0
        %2715 = vmatpush.msra.mxu0 0.0
        %2716 = vmatpush.msra.mxu0 %v2481
        %2717 = vmatmul.f32.gmra.mxu0 %v2699
        %v2718 = vpop.f32.mrf.mxu0
        %v2719 = vadd.f32 0.0, %v2718
        %2720 = vdwg.mxu0
        %v2722 = vsel %vm1023, %v2673, 0
        %2724 = vmatpush.msra.mxu0 0.0
        %2725 = vmatpush.msra.mxu0 0.0
        %2726 = vmatpush.msra.mxu0 0.0
        %2727 = vmatpush.msra.mxu0 0.0
        %2728 = vmatpush.msra.mxu0 0.0
        %2729 = vmatpush.msra.mxu0 0.0
        %2730 = vmatpush.msra.mxu0 0.0
        %2731 = vmatpush.msra.mxu0 0.0
        %2732 = vmatpush.msra.mxu0 0.0
        %2733 = vmatpush.msra.mxu0 0.0
        %2734 = vmatpush.msra.mxu0 0.0
        %2735 = vmatpush.msra.mxu0 0.0
        %2736 = vmatpush.msra.mxu0 0.0
        %2737 = vmatpush.msra.mxu0 0.0
        %2738 = vmatpush.msra.mxu0 0.0
        %2739 = vmatpush.msra.mxu0 %v2501
        %2740 = vmatmul.f32.gmra.mxu0 %v2722
        %v2741 = vpop.f32.mrf.mxu0
        %v2742 = vadd.f32 0.0, %v2741
        %2743 = vdwg.mxu0
        %v2745 = vsel %vm1023, %v2674, 0
        %2747 = vmatpush.msra.mxu0 0.0
        %2748 = vmatpush.msra.mxu0 0.0
        %2749 = vmatpush.msra.mxu0 0.0
        %2750 = vmatpush.msra.mxu0 0.0
        %2751 = vmatpush.msra.mxu0 0.0
        %2752 = vmatpush.msra.mxu0 0.0
        %2753 = vmatpush.msra.mxu0 0.0
        %2754 = vmatpush.msra.mxu0 0.0
        %2755 = vmatpush.msra.mxu0 0.0
        %2756 = vmatpush.msra.mxu0 0.0
        %2757 = vmatpush.msra.mxu0 0.0
        %2758 = vmatpush.msra.mxu0 0.0
        %2759 = vmatpush.msra.mxu0 0.0
        %2760 = vmatpush.msra.mxu0 0.0
        %2761 = vmatpush.msra.mxu0 0.0
        %2762 = vmatpush.msra.mxu0 %v2521
        %2763 = vmatmul.f32.gmra.mxu0 %v2745
        %v2764 = vpop.f32.mrf.mxu0
        %v2765 = vadd.f32 0.0, %v2764
        %2766 = vdwg.mxu0
        %v2768 = vsel %vm1023, %v2696, 0
        %2770 = vmatpush.msra.mxu0 0.0
        %2771 = vmatpush.msra.mxu0 0.0
        %2772 = vmatpush.msra.mxu0 0.0
        %2773 = vmatpush.msra.mxu0 0.0
        %2774 = vmatpush.msra.mxu0 0.0
        %2775 = vmatpush.msra.mxu0 0.0
        %2776 = vmatpush.msra.mxu0 0.0
        %2777 = vmatpush.msra.mxu0 0.0
        %2778 = vmatpush.msra.mxu0 0.0
        %2779 = vmatpush.msra.mxu0 0.0
        %2780 = vmatpush.msra.mxu0 0.0
        %2781 = vmatpush.msra.mxu0 0.0
        %2782 = vmatpush.msra.mxu0 0.0
        %2783 = vmatpush.msra.mxu0 0.0
        %2784 = vmatpush.msra.mxu0 0.0
        %2785 = vmatpush.msra.mxu0 %v2205
        %2786 = vmatmul.f32.gmra.mxu0 %v2768
        %v2787 = vpop.f32.mrf.mxu0
        %v2788 = vadd.f32 0.0, %v2787
        %2789 = vdwg.mxu0
        %v2791 = vsel %vm1023, %v2719, 0
        %2793 = vmatpush.msra.mxu0 0.0
        %2794 = vmatpush.msra.mxu0 0.0
        %2795 = vmatpush.msra.mxu0 0.0
        %2796 = vmatpush.msra.mxu0 0.0
        %2797 = vmatpush.msra.mxu0 0.0
        %2798 = vmatpush.msra.mxu0 0.0
        %2799 = vmatpush.msra.mxu0 0.0
        %2800 = vmatpush.msra.mxu0 0.0
        %2801 = vmatpush.msra.mxu0 0.0
        %2802 = vmatpush.msra.mxu0 0.0
        %2803 = vmatpush.msra.mxu0 0.0
        %2804 = vmatpush.msra.mxu0 0.0
        %2805 = vmatpush.msra.mxu0 0.0
        %2806 = vmatpush.msra.mxu0 0.0
        %2807 = vmatpush.msra.mxu0 0.0
        %2808 = vmatpush.msra.mxu0 %v2206
        %2809 = vmatmul.f32.gmra.mxu0 %v2791
        %v2810 = vpop.f32.mrf.mxu0
        %v2811 = vadd.f32 0.0, %v2810
        %2812 = vdwg.mxu0
        %v2814 = vsel %vm1023, %v2742, 0
        %2816 = vmatpush.msra.mxu0 0.0
        %2817 = vmatpush.msra.mxu0 0.0
        %2818 = vmatpush.msra.mxu0 0.0
        %2819 = vmatpush.msra.mxu0 0.0
        %2820 = vmatpush.msra.mxu0 0.0
        %2821 = vmatpush.msra.mxu0 0.0
        %2822 = vmatpush.msra.mxu0 0.0
        %2823 = vmatpush.msra.mxu0 0.0
        %2824 = vmatpush.msra.mxu0 0.0
        %2825 = vmatpush.msra.mxu0 0.0
        %2826 = vmatpush.msra.mxu0 0.0
        %2827 = vmatpush.msra.mxu0 0.0
        %2828 = vmatpush.msra.mxu0 0.0
        %2829 = vmatpush.msra.mxu0 0.0
        %2830 = vmatpush.msra.mxu0 0.0
        %2831 = vmatpush.msra.mxu0 %v2207
        %2832 = vmatmul.f32.gmra.mxu0 %v2814
        %v2833 = vpop.f32.mrf.mxu0
        %v2834 = vadd.f32 0.0, %v2833
        %2835 = vdwg.mxu0
        %v2837 = vsel %vm1023, %v2765, 0
        %2839 = vmatpush.msra.mxu0 0.0
        %2840 = vmatpush.msra.mxu0 0.0
        %2841 = vmatpush.msra.mxu0 0.0
        %2842 = vmatpush.msra.mxu0 0.0
        %2843 = vmatpush.msra.mxu0 0.0
        %2844 = vmatpush.msra.mxu0 0.0
        %2845 = vmatpush.msra.mxu0 0.0
        %2846 = vmatpush.msra.mxu0 0.0
        %2847 = vmatpush.msra.mxu0 0.0
        %2848 = vmatpush.msra.mxu0 0.0
        %2849 = vmatpush.msra.mxu0 0.0
        %2850 = vmatpush.msra.mxu0 0.0
        %2851 = vmatpush.msra.mxu0 0.0
        %2852 = vmatpush.msra.mxu0 0.0
        %2853 = vmatpush.msra.mxu0 0.0
        %2854 = vmatpush.msra.mxu0 %v2208
        %2855 = vmatmul.f32.gmra.mxu0 %v2837
        %v2856 = vpop.f32.mrf.mxu0
        %v2857 = vadd.f32 0.0, %v2856
        %2858 = vdwg.mxu0
        %v2859 = vsel %vm751, %v2788, 0.0
        %v2860 = vsel %vm751, %v2811, 0.0
        %v2861 = vadd.f32 %v2859, %v2860
        %v2862 = vsel %vm751, %v2834, 0.0
        %v2863 = vadd.f32 %v2861, %v2862
        %v2864 = vsel %vm751, %v2857, 0.0
        %v2865 = vadd.f32 %v2863, %v2864
        %v2867 = vperm.slane %v2210, 0
        %v2869 = vadd.f32 %v2865, %v2867
        %v2870 = vadd.f32 %v2088, %v2869
        %2871 = vmatpush.msra.mxu0 0.0
        %2872 = vmatpush.msra.mxu0 0.0
        %2873 = vmatpush.msra.mxu0 0.0
        %2874 = vmatpush.msra.mxu0 0.0
        %2875 = vmatpush.msra.mxu0 0.0
        %2876 = vmatpush.msra.mxu0 0.0
        %2877 = vmatpush.msra.mxu0 0.0
        %2878 = vmatpush.msra.mxu0 0.0
        %2879 = vmatpush.msra.mxu0 0.0
        %2880 = vmatpush.msra.mxu0 0.0
        %2881 = vmatpush.msra.mxu0 0.0
        %2882 = vmatpush.msra.mxu0 0.0
        %2883 = vmatpush.msra.mxu0 0.0
        %2884 = vmatpush.msra.mxu0 0.0
        %2885 = vmatpush.msra.mxu0 0.0
        %2886 = vmatpush.msra.mxu0 %v2870
        %2887 = vmatmul.f32.gmra.mxu0 %v1369
        %v2888 = vpop.f32.mrf.mxu0
        %v2889 = vadd.f32 0.0, %v2888
        %2890 = vdwg.mxu0
        %v2891 = vsub.f32 %v2870, %v2889
        %v2893 = vsel %vm751, %v2891, 0
        %2895 = vmatpush.msra.mxu0 0.0
        %2896 = vmatpush.msra.mxu0 0.0
        %2897 = vmatpush.msra.mxu0 0.0
        %2898 = vmatpush.msra.mxu0 0.0
        %2899 = vmatpush.msra.mxu0 0.0
        %2900 = vmatpush.msra.mxu0 0.0
        %2901 = vmatpush.msra.mxu0 0.0
        %2902 = vmatpush.msra.mxu0 0.0
        %2903 = vmatpush.msra.mxu0 0.0
        %2904 = vmatpush.msra.mxu0 0.0
        %2905 = vmatpush.msra.mxu0 0.0
        %2906 = vmatpush.msra.mxu0 0.0
        %2907 = vmatpush.msra.mxu0 %v2142
        %2908 = vmatpush.msra.mxu0 %v2141
        %2909 = vmatpush.msra.mxu0 %v2140
        %2910 = vmatpush.msra.mxu0 %v2139
        %2911 = vmatmul.f32.gmra.mxu0 %v2893
        %v2912 = vpop.f32.mrf.mxu0
        %v2913 = vadd.f32 %v2248, %v2912
        %2914 = vdwg.mxu0
        %2915 = vmatpush.msra.mxu0 0.0
        %2916 = vmatpush.msra.mxu0 0.0
        %2917 = vmatpush.msra.mxu0 0.0
        %2918 = vmatpush.msra.mxu0 0.0
        %2919 = vmatpush.msra.mxu0 0.0
        %2920 = vmatpush.msra.mxu0 0.0
        %2921 = vmatpush.msra.mxu0 0.0
        %2922 = vmatpush.msra.mxu0 0.0
        %2923 = vmatpush.msra.mxu0 0.0
        %2924 = vmatpush.msra.mxu0 0.0
        %2925 = vmatpush.msra.mxu0 0.0
        %2926 = vmatpush.msra.mxu0 0.0
        %2927 = vmatpush.msra.mxu0 %v2146
        %2928 = vmatpush.msra.mxu0 %v2145
        %2929 = vmatpush.msra.mxu0 %v2144
        %2930 = vmatpush.msra.mxu0 %v2143
        %2931 = vmatmul.f32.gmra.mxu0 %v2893
        %v2932 = vpop.f32.mrf.mxu0
        %v2933 = vadd.f32 %v2249, %v2932
        %2934 = vdwg.mxu0
        %2935 = vmatpush.msra.mxu0 0.0
        %2936 = vmatpush.msra.mxu0 0.0
        %2937 = vmatpush.msra.mxu0 0.0
        %2938 = vmatpush.msra.mxu0 0.0
        %2939 = vmatpush.msra.mxu0 0.0
        %2940 = vmatpush.msra.mxu0 0.0
        %2941 = vmatpush.msra.mxu0 0.0
        %2942 = vmatpush.msra.mxu0 0.0
        %2943 = vmatpush.msra.mxu0 0.0
        %2944 = vmatpush.msra.mxu0 0.0
        %2945 = vmatpush.msra.mxu0 0.0
        %2946 = vmatpush.msra.mxu0 0.0
        %2947 = vmatpush.msra.mxu0 %v2150
        %2948 = vmatpush.msra.mxu0 %v2149
        %2949 = vmatpush.msra.mxu0 %v2148
        %2950 = vmatpush.msra.mxu0 %v2147
        %2951 = vmatmul.f32.gmra.mxu0 %v2893
        %v2952 = vpop.f32.mrf.mxu0
        %v2953 = vadd.f32 %v2250, %v2952
        %2954 = vdwg.mxu0
        %2955 = vmatpush.msra.mxu0 0.0
        %2956 = vmatpush.msra.mxu0 0.0
        %2957 = vmatpush.msra.mxu0 0.0
        %2958 = vmatpush.msra.mxu0 0.0
        %2959 = vmatpush.msra.mxu0 0.0
        %2960 = vmatpush.msra.mxu0 0.0
        %2961 = vmatpush.msra.mxu0 0.0
        %2962 = vmatpush.msra.mxu0 0.0
        %2963 = vmatpush.msra.mxu0 0.0
        %2964 = vmatpush.msra.mxu0 0.0
        %2965 = vmatpush.msra.mxu0 0.0
        %2966 = vmatpush.msra.mxu0 0.0
        %2967 = vmatpush.msra.mxu0 %v2154
        %2968 = vmatpush.msra.mxu0 %v2153
        %2969 = vmatpush.msra.mxu0 %v2152
        %2970 = vmatpush.msra.mxu0 %v2151
        %2971 = vmatmul.f32.gmra.mxu0 %v2893
        %v2972 = vpop.f32.mrf.mxu0
        %v2973 = vadd.f32 %v2251, %v2972
        %2974 = vdwg.mxu0
        %2975 = vmatpush.msra.mxu0 0.0
        %2976 = vmatpush.msra.mxu0 0.0
        %2977 = vmatpush.msra.mxu0 0.0
        %2978 = vmatpush.msra.mxu0 0.0
        %2979 = vmatpush.msra.mxu0 0.0
        %2980 = vmatpush.msra.mxu0 0.0
        %2981 = vmatpush.msra.mxu0 0.0
        %2982 = vmatpush.msra.mxu0 0.0
        %2983 = vmatpush.msra.mxu0 0.0
        %2984 = vmatpush.msra.mxu0 0.0
        %2985 = vmatpush.msra.mxu0 0.0
        %2986 = vmatpush.msra.mxu0 0.0
        %2987 = vmatpush.msra.mxu0 %v2164
        %2988 = vmatpush.msra.mxu0 %v2163
        %2989 = vmatpush.msra.mxu0 %v2162
        %2990 = vmatpush.msra.mxu0 %v2161
        %2991 = vmatmul.f32.gmra.mxu0 %v1476
        %v2992 = vpop.f32.mrf.mxu0
        %v2993 = vadd.f32 %v2343, %v2992
        %2994 = vdwg.mxu0
        %2995 = vmatpush.msra.mxu0 0.0
        %2996 = vmatpush.msra.mxu0 0.0
        %2997 = vmatpush.msra.mxu0 0.0
        %2998 = vmatpush.msra.mxu0 0.0
        %2999 = vmatpush.msra.mxu0 0.0
        %3000 = vmatpush.msra.mxu0 0.0
        %3001 = vmatpush.msra.mxu0 0.0
        %3002 = vmatpush.msra.mxu0 0.0
        %3003 = vmatpush.msra.mxu0 0.0
        %3004 = vmatpush.msra.mxu0 0.0
        %3005 = vmatpush.msra.mxu0 0.0
        %3006 = vmatpush.msra.mxu0 0.0
        %3007 = vmatpush.msra.mxu0 %v2168
        %3008 = vmatpush.msra.mxu0 %v2167
        %3009 = vmatpush.msra.mxu0 %v2166
        %3010 = vmatpush.msra.mxu0 %v2165
        %3011 = vmatmul.f32.gmra.mxu0 %v1476
        %v3012 = vpop.f32.mrf.mxu0
        %v3013 = vadd.f32 %v2344, %v3012
        %3014 = vdwg.mxu0
        %3015 = vmatpush.msra.mxu0 0.0
        %3016 = vmatpush.msra.mxu0 0.0
        %3017 = vmatpush.msra.mxu0 0.0
        %3018 = vmatpush.msra.mxu0 0.0
        %3019 = vmatpush.msra.mxu0 0.0
        %3020 = vmatpush.msra.mxu0 0.0
        %3021 = vmatpush.msra.mxu0 0.0
        %3022 = vmatpush.msra.mxu0 0.0
        %3023 = vmatpush.msra.mxu0 0.0
        %3024 = vmatpush.msra.mxu0 0.0
        %3025 = vmatpush.msra.mxu0 0.0
        %3026 = vmatpush.msra.mxu0 0.0
        %3027 = vmatpush.msra.mxu0 %v2172
        %3028 = vmatpush.msra.mxu0 %v2171
        %3029 = vmatpush.msra.mxu0 %v2170
        %3030 = vmatpush.msra.mxu0 %v2169
        %3031 = vmatmul.f32.gmra.mxu0 %v1476
        %v3032 = vpop.f32.mrf.mxu0
        %v3033 = vadd.f32 %v2345, %v3032
        %3034 = vdwg.mxu0
        %3035 = vmatpush.msra.mxu0 0.0
        %3036 = vmatpush.msra.mxu0 0.0
        %3037 = vmatpush.msra.mxu0 0.0
        %3038 = vmatpush.msra.mxu0 0.0
        %3039 = vmatpush.msra.mxu0 0.0
        %3040 = vmatpush.msra.mxu0 0.0
        %3041 = vmatpush.msra.mxu0 0.0
        %3042 = vmatpush.msra.mxu0 0.0
        %3043 = vmatpush.msra.mxu0 0.0
        %3044 = vmatpush.msra.mxu0 0.0
        %3045 = vmatpush.msra.mxu0 0.0
        %3046 = vmatpush.msra.mxu0 0.0
        %3047 = vmatpush.msra.mxu0 %v2176
        %3048 = vmatpush.msra.mxu0 %v2175
        %3049 = vmatpush.msra.mxu0 %v2174
        %3050 = vmatpush.msra.mxu0 %v2173
        %3051 = vmatmul.f32.gmra.mxu0 %v1476
        %v3052 = vpop.f32.mrf.mxu0
        %v3053 = vadd.f32 %v2346, %v3052
        %3054 = vdwg.mxu0
        %3055 = vmatpush.msra.mxu0 0.0
        %3056 = vmatpush.msra.mxu0 0.0
        %3057 = vmatpush.msra.mxu0 0.0
        %3058 = vmatpush.msra.mxu0 0.0
        %3059 = vmatpush.msra.mxu0 0.0
        %3060 = vmatpush.msra.mxu0 0.0
        %3061 = vmatpush.msra.mxu0 0.0
        %3062 = vmatpush.msra.mxu0 0.0
        %3063 = vmatpush.msra.mxu0 0.0
        %3064 = vmatpush.msra.mxu0 0.0
        %3065 = vmatpush.msra.mxu0 0.0
        %3066 = vmatpush.msra.mxu0 0.0
        %3067 = vmatpush.msra.mxu0 %v2186
        %3068 = vmatpush.msra.mxu0 %v2185
        %3069 = vmatpush.msra.mxu0 %v2184
        %3070 = vmatpush.msra.mxu0 %v2183
        %3071 = vmatmul.f32.gmra.mxu0 %v1476
        %v3072 = vpop.f32.mrf.mxu0
        %v3073 = vadd.f32 %v2435, %v3072
        %3074 = vdwg.mxu0
        %3075 = vmatpush.msra.mxu0 0.0
        %3076 = vmatpush.msra.mxu0 0.0
        %3077 = vmatpush.msra.mxu0 0.0
        %3078 = vmatpush.msra.mxu0 0.0
        %3079 = vmatpush.msra.mxu0 0.0
        %3080 = vmatpush.msra.mxu0 0.0
        %3081 = vmatpush.msra.mxu0 0.0
        %3082 = vmatpush.msra.mxu0 0.0
        %3083 = vmatpush.msra.mxu0 0.0
        %3084 = vmatpush.msra.mxu0 0.0
        %3085 = vmatpush.msra.mxu0 0.0
        %3086 = vmatpush.msra.mxu0 0.0
        %3087 = vmatpush.msra.mxu0 %v2190
        %3088 = vmatpush.msra.mxu0 %v2189
        %3089 = vmatpush.msra.mxu0 %v2188
        %3090 = vmatpush.msra.mxu0 %v2187
        %3091 = vmatmul.f32.gmra.mxu0 %v1476
        %v3092 = vpop.f32.mrf.mxu0
        %v3093 = vadd.f32 %v2436, %v3092
        %3094 = vdwg.mxu0
        %3095 = vmatpush.msra.mxu0 0.0
        %3096 = vmatpush.msra.mxu0 0.0
        %3097 = vmatpush.msra.mxu0 0.0
        %3098 = vmatpush.msra.mxu0 0.0
        %3099 = vmatpush.msra.mxu0 0.0
        %3100 = vmatpush.msra.mxu0 0.0
        %3101 = vmatpush.msra.mxu0 0.0
        %3102 = vmatpush.msra.mxu0 0.0
        %3103 = vmatpush.msra.mxu0 0.0
        %3104 = vmatpush.msra.mxu0 0.0
        %3105 = vmatpush.msra.mxu0 0.0
        %3106 = vmatpush.msra.mxu0 0.0
        %3107 = vmatpush.msra.mxu0 %v2194
        %3108 = vmatpush.msra.mxu0 %v2193
        %3109 = vmatpush.msra.mxu0 %v2192
        %3110 = vmatpush.msra.mxu0 %v2191
        %3111 = vmatmul.f32.gmra.mxu0 %v1476
        %v3112 = vpop.f32.mrf.mxu0
        %v3113 = vadd.f32 %v2437, %v3112
        %3114 = vdwg.mxu0
        %3115 = vmatpush.msra.mxu0 0.0
        %3116 = vmatpush.msra.mxu0 0.0
        %3117 = vmatpush.msra.mxu0 0.0
        %3118 = vmatpush.msra.mxu0 0.0
        %3119 = vmatpush.msra.mxu0 0.0
        %3120 = vmatpush.msra.mxu0 0.0
        %3121 = vmatpush.msra.mxu0 0.0
        %3122 = vmatpush.msra.mxu0 0.0
        %3123 = vmatpush.msra.mxu0 0.0
        %3124 = vmatpush.msra.mxu0 0.0
        %3125 = vmatpush.msra.mxu0 0.0
        %3126 = vmatpush.msra.mxu0 0.0
        %3127 = vmatpush.msra.mxu0 %v2198
        %3128 = vmatpush.msra.mxu0 %v2197
        %3129 = vmatpush.msra.mxu0 %v2196
        %3130 = vmatpush.msra.mxu0 %v2195
        %3131 = vmatmul.f32.gmra.mxu0 %v1476
        %v3132 = vpop.f32.mrf.mxu0
        %v3133 = vadd.f32 %v2438, %v3132
        %3134 = vdwg.mxu0
        %v3135 = vmul.f32 %v2913, 0.35355338
        %v3136 = vmul.f32 %v2933, 0.35355338
        %v3137 = vmul.f32 %v2953, 0.35355338
        %v3138 = vmul.f32 %v2973, 0.35355338
        %v3140 = vsel %vm1023, %v3135, 0
        %v3143 = vsel %vm1023, %v2993, 0
        %3145 = vmatpush.xpose.msra.mxu0 0.0
        %3146 = vmatpush.xpose.msra.mxu0 0.0
        %3147 = vmatpush.xpose.msra.mxu0 0.0
        %3148 = vmatpush.xpose.msra.mxu0 0.0
        %3149 = vmatpush.xpose.msra.mxu0 0.0
        %3150 = vmatpush.xpose.msra.mxu0 0.0
        %3151 = vmatpush.xpose.msra.mxu0 0.0
        %3152 = vmatpush.xpose.msra.mxu0 0.0
        %3153 = vmatpush.xpose.msra.mxu0 0.0
        %3154 = vmatpush.xpose.msra.mxu0 0.0
        %3155 = vmatpush.xpose.msra.mxu0 0.0
        %3156 = vmatpush.xpose.msra.mxu0 0.0
        %3157 = vmatpush.xpose.msra.mxu0 0.0
        %3158 = vmatpush.xpose.msra.mxu0 0.0
        %3159 = vmatpush.xpose.msra.mxu0 0.0
        %3160 = vmatpush.xpose.msra.mxu0 %v3143
        %3161 = vmatmul.f32.gmra.mxu0 %v3140
        %v3162 = vpop.f32.mrf.mxu0
        %v3163 = vadd.f32 0.0, %v3162
        %3164 = vdwg.mxu0
        %v3166 = vsel %vm1023, %v3136, 0
        %v3169 = vsel %vm1023, %v3013, 0
        %3171 = vmatpush.xpose.msra.mxu0 0.0
        %3172 = vmatpush.xpose.msra.mxu0 0.0
        %3173 = vmatpush.xpose.msra.mxu0 0.0
        %3174 = vmatpush.xpose.msra.mxu0 0.0
        %3175 = vmatpush.xpose.msra.mxu0 0.0
        %3176 = vmatpush.xpose.msra.mxu0 0.0
        %3177 = vmatpush.xpose.msra.mxu0 0.0
        %3178 = vmatpush.xpose.msra.mxu0 0.0
        %3179 = vmatpush.xpose.msra.mxu0 0.0
        %3180 = vmatpush.xpose.msra.mxu0 0.0
        %3181 = vmatpush.xpose.msra.mxu0 0.0
        %3182 = vmatpush.xpose.msra.mxu0 0.0
        %3183 = vmatpush.xpose.msra.mxu0 0.0
        %3184 = vmatpush.xpose.msra.mxu0 0.0
        %3185 = vmatpush.xpose.msra.mxu0 0.0
        %3186 = vmatpush.xpose.msra.mxu0 %v3169
        %3187 = vmatmul.f32.gmra.mxu0 %v3166
        %v3188 = vpop.f32.mrf.mxu0
        %v3189 = vadd.f32 0.0, %v3188
        %3190 = vdwg.mxu0
        %v3192 = vsel %vm1023, %v3137, 0
        %v3195 = vsel %vm1023, %v3033, 0
        %3197 = vmatpush.xpose.msra.mxu0 0.0
        %3198 = vmatpush.xpose.msra.mxu0 0.0
        %3199 = vmatpush.xpose.msra.mxu0 0.0
        %3200 = vmatpush.xpose.msra.mxu0 0.0
        %3201 = vmatpush.xpose.msra.mxu0 0.0
        %3202 = vmatpush.xpose.msra.mxu0 0.0
        %3203 = vmatpush.xpose.msra.mxu0 0.0
        %3204 = vmatpush.xpose.msra.mxu0 0.0
        %3205 = vmatpush.xpose.msra.mxu0 0.0
        %3206 = vmatpush.xpose.msra.mxu0 0.0
        %3207 = vmatpush.xpose.msra.mxu0 0.0
        %3208 = vmatpush.xpose.msra.mxu0 0.0
        %3209 = vmatpush.xpose.msra.mxu0 0.0
        %3210 = vmatpush.xpose.msra.mxu0 0.0
        %3211 = vmatpush.xpose.msra.mxu0 0.0
        %3212 = vmatpush.xpose.msra.mxu0 %v3195
        %3213 = vmatmul.f32.gmra.mxu0 %v3192
        %v3214 = vpop.f32.mrf.mxu0
        %v3215 = vadd.f32 0.0, %v3214
        %3216 = vdwg.mxu0
        %v3218 = vsel %vm1023, %v3138, 0
        %v3221 = vsel %vm1023, %v3053, 0
        %3223 = vmatpush.xpose.msra.mxu0 0.0
        %3224 = vmatpush.xpose.msra.mxu0 0.0
        %3225 = vmatpush.xpose.msra.mxu0 0.0
        %3226 = vmatpush.xpose.msra.mxu0 0.0
        %3227 = vmatpush.xpose.msra.mxu0 0.0
        %3228 = vmatpush.xpose.msra.mxu0 0.0
        %3229 = vmatpush.xpose.msra.mxu0 0.0
        %3230 = vmatpush.xpose.msra.mxu0 0.0
        %3231 = vmatpush.xpose.msra.mxu0 0.0
        %3232 = vmatpush.xpose.msra.mxu0 0.0
        %3233 = vmatpush.xpose.msra.mxu0 0.0
        %3234 = vmatpush.xpose.msra.mxu0 0.0
        %3235 = vmatpush.xpose.msra.mxu0 0.0
        %3236 = vmatpush.xpose.msra.mxu0 0.0
        %3237 = vmatpush.xpose.msra.mxu0 0.0
        %3238 = vmatpush.xpose.msra.mxu0 %v3221
        %3239 = vmatmul.f32.gmra.mxu0 %v3218
        %v3240 = vpop.f32.mrf.mxu0
        %v3241 = vadd.f32 0.0, %v3240
        %3242 = vdwg.mxu0
        %v3243 = vsel %vm1023, %v3163, -inf
        %3244 = vmax.xlane.f32.xlu0 %v3243
        %v3245 = vpop.xlane.xlu0 %3244
        %v3246 = vsel %vm1023, %v3189, -inf
        %3247 = vmax.xlane.f32.xlu0 %v3246
        %v3248 = vpop.xlane.xlu0 %3247
        %v3249 = vsel %vm1023, %v3215, -inf
        %3250 = vmax.xlane.f32.xlu0 %v3249
        %v3251 = vpop.xlane.xlu0 %3250
        %v3252 = vsel %vm1023, %v3241, -inf
        %3253 = vmax.xlane.f32.xlu0 %v3252
        %v3254 = vpop.xlane.xlu0 %3253
        %v3255 = vsub.f32 %v3163, %v3245
        %v3256 = vsub.f32 %v3189, %v3248
        %v3257 = vsub.f32 %v3215, %v3251
        %v3258 = vsub.f32 %v3241, %v3254
        %v3259 = vmul.f32 %v3255, 1.442695
        %v3260 = vpow.pop %v3259
        %v3261 = vmul.f32 %v3256, 1.442695
        %v3262 = vpow.pop %v3261
        %v3263 = vmul.f32 %v3257, 1.442695
        %v3264 = vpow.pop %v3263
        %v3265 = vmul.f32 %v3258, 1.442695
        %v3266 = vpow.pop %v3265
        %v3267 = vsel %vm1023, %v3260, 0.0
        %3268 = vadd.xlane.f32.xlu0 %v3267
        %v3269 = vpop.xlane.xlu0 %3268
        %v3270 = vsel %vm1023, %v3262, 0.0
        %3271 = vadd.xlane.f32.xlu0 %v3270
        %v3272 = vpop.xlane.xlu0 %3271
        %v3273 = vsel %vm1023, %v3264, 0.0
        %3274 = vadd.xlane.f32.xlu0 %v3273
        %v3275 = vpop.xlane.xlu0 %3274
        %v3276 = vsel %vm1023, %v3266, 0.0
        %3277 = vadd.xlane.f32.xlu0 %v3276
        %v3278 = vpop.xlane.xlu0 %3277
        %v3279 = vrcp.pop %v3269
        %v3280 = vrcp.pop %v3272
        %v3281 = vrcp.pop %v3275
        %v3282 = vrcp.pop %v3278
        %v3283 = vmul.f32 %v3260, %v3279
        %v3284 = vmul.f32 %v3262, %v3280
        %v3285 = vmul.f32 %v3264, %v3281
        %v3286 = vmul.f32 %v3266, %v3282
        %v3288 = vsel %vm1023, %v3283, 0
        %3290 = vmatpush.msra.mxu0 0.0
        %3291 = vmatpush.msra.mxu0 0.0
        %3292 = vmatpush.msra.mxu0 0.0
        %3293 = vmatpush.msra.mxu0 0.0
        %3294 = vmatpush.msra.mxu0 0.0
        %3295 = vmatpush.msra.mxu0 0.0
        %3296 = vmatpush.msra.mxu0 0.0
        %3297 = vmatpush.msra.mxu0 0.0
        %3298 = vmatpush.msra.mxu0 0.0
        %3299 = vmatpush.msra.mxu0 0.0
        %3300 = vmatpush.msra.mxu0 0.0
        %3301 = vmatpush.msra.mxu0 0.0
        %3302 = vmatpush.msra.mxu0 0.0
        %3303 = vmatpush.msra.mxu0 0.0
        %3304 = vmatpush.msra.mxu0 0.0
        %3305 = vmatpush.msra.mxu0 %v3073
        %3306 = vmatmul.f32.gmra.mxu0 %v3288
        %v3307 = vpop.f32.mrf.mxu0
        %v3308 = vadd.f32 0.0, %v3307
        %3309 = vdwg.mxu0
        %v3311 = vsel %vm1023, %v3284, 0
        %3313 = vmatpush.msra.mxu0 0.0
        %3314 = vmatpush.msra.mxu0 0.0
        %3315 = vmatpush.msra.mxu0 0.0
        %3316 = vmatpush.msra.mxu0 0.0
        %3317 = vmatpush.msra.mxu0 0.0
        %3318 = vmatpush.msra.mxu0 0.0
        %3319 = vmatpush.msra.mxu0 0.0
        %3320 = vmatpush.msra.mxu0 0.0
        %3321 = vmatpush.msra.mxu0 0.0
        %3322 = vmatpush.msra.mxu0 0.0
        %3323 = vmatpush.msra.mxu0 0.0
        %3324 = vmatpush.msra.mxu0 0.0
        %3325 = vmatpush.msra.mxu0 0.0
        %3326 = vmatpush.msra.mxu0 0.0
        %3327 = vmatpush.msra.mxu0 0.0
        %3328 = vmatpush.msra.mxu0 %v3093
        %3329 = vmatmul.f32.gmra.mxu0 %v3311
        %v3330 = vpop.f32.mrf.mxu0
        %v3331 = vadd.f32 0.0, %v3330
        %3332 = vdwg.mxu0
        %v3334 = vsel %vm1023, %v3285, 0
        %3336 = vmatpush.msra.mxu0 0.0
        %3337 = vmatpush.msra.mxu0 0.0
        %3338 = vmatpush.msra.mxu0 0.0
        %3339 = vmatpush.msra.mxu0 0.0
        %3340 = vmatpush.msra.mxu0 0.0
        %3341 = vmatpush.msra.mxu0 0.0
        %3342 = vmatpush.msra.mxu0 0.0
        %3343 = vmatpush.msra.mxu0 0.0
        %3344 = vmatpush.msra.mxu0 0.0
        %3345 = vmatpush.msra.mxu0 0.0
        %3346 = vmatpush.msra.mxu0 0.0
        %3347 = vmatpush.msra.mxu0 0.0
        %3348 = vmatpush.msra.mxu0 0.0
        %3349 = vmatpush.msra.mxu0 0.0
        %3350 = vmatpush.msra.mxu0 0.0
        %3351 = vmatpush.msra.mxu0 %v3113
        %3352 = vmatmul.f32.gmra.mxu0 %v3334
        %v3353 = vpop.f32.mrf.mxu0
        %v3354 = vadd.f32 0.0, %v3353
        %3355 = vdwg.mxu0
        %v3357 = vsel %vm1023, %v3286, 0
        %3359 = vmatpush.msra.mxu0 0.0
        %3360 = vmatpush.msra.mxu0 0.0
        %3361 = vmatpush.msra.mxu0 0.0
        %3362 = vmatpush.msra.mxu0 0.0
        %3363 = vmatpush.msra.mxu0 0.0
        %3364 = vmatpush.msra.mxu0 0.0
        %3365 = vmatpush.msra.mxu0 0.0
        %3366 = vmatpush.msra.mxu0 0.0
        %3367 = vmatpush.msra.mxu0 0.0
        %3368 = vmatpush.msra.mxu0 0.0
        %3369 = vmatpush.msra.mxu0 0.0
        %3370 = vmatpush.msra.mxu0 0.0
        %3371 = vmatpush.msra.mxu0 0.0
        %3372 = vmatpush.msra.mxu0 0.0
        %3373 = vmatpush.msra.mxu0 0.0
        %3374 = vmatpush.msra.mxu0 %v3133
        %3375 = vmatmul.f32.gmra.mxu0 %v3357
        %v3376 = vpop.f32.mrf.mxu0
        %v3377 = vadd.f32 0.0, %v3376
        %3378 = vdwg.mxu0
        %v3380 = vsel %vm1023, %v3308, 0
        %3382 = vmatpush.msra.mxu0 0.0
        %3383 = vmatpush.msra.mxu0 0.0
        %3384 = vmatpush.msra.mxu0 0.0
        %3385 = vmatpush.msra.mxu0 0.0
        %3386 = vmatpush.msra.mxu0 0.0
        %3387 = vmatpush.msra.mxu0 0.0
        %3388 = vmatpush.msra.mxu0 0.0
        %3389 = vmatpush.msra.mxu0 0.0
        %3390 = vmatpush.msra.mxu0 0.0
        %3391 = vmatpush.msra.mxu0 0.0
        %3392 = vmatpush.msra.mxu0 0.0
        %3393 = vmatpush.msra.mxu0 0.0
        %3394 = vmatpush.msra.mxu0 0.0
        %3395 = vmatpush.msra.mxu0 0.0
        %3396 = vmatpush.msra.mxu0 0.0
        %3397 = vmatpush.msra.mxu0 %v2205
        %3398 = vmatmul.f32.gmra.mxu0 %v3380
        %v3399 = vpop.f32.mrf.mxu0
        %v3400 = vadd.f32 0.0, %v3399
        %3401 = vdwg.mxu0
        %v3403 = vsel %vm1023, %v3331, 0
        %3405 = vmatpush.msra.mxu0 0.0
        %3406 = vmatpush.msra.mxu0 0.0
        %3407 = vmatpush.msra.mxu0 0.0
        %3408 = vmatpush.msra.mxu0 0.0
        %3409 = vmatpush.msra.mxu0 0.0
        %3410 = vmatpush.msra.mxu0 0.0
        %3411 = vmatpush.msra.mxu0 0.0
        %3412 = vmatpush.msra.mxu0 0.0
        %3413 = vmatpush.msra.mxu0 0.0
        %3414 = vmatpush.msra.mxu0 0.0
        %3415 = vmatpush.msra.mxu0 0.0
        %3416 = vmatpush.msra.mxu0 0.0
        %3417 = vmatpush.msra.mxu0 0.0
        %3418 = vmatpush.msra.mxu0 0.0
        %3419 = vmatpush.msra.mxu0 0.0
        %3420 = vmatpush.msra.mxu0 %v2206
        %3421 = vmatmul.f32.gmra.mxu0 %v3403
        %v3422 = vpop.f32.mrf.mxu0
        %v3423 = vadd.f32 0.0, %v3422
        %3424 = vdwg.mxu0
        %v3426 = vsel %vm1023, %v3354, 0
        %3428 = vmatpush.msra.mxu0 0.0
        %3429 = vmatpush.msra.mxu0 0.0
        %3430 = vmatpush.msra.mxu0 0.0
        %3431 = vmatpush.msra.mxu0 0.0
        %3432 = vmatpush.msra.mxu0 0.0
        %3433 = vmatpush.msra.mxu0 0.0
        %3434 = vmatpush.msra.mxu0 0.0
        %3435 = vmatpush.msra.mxu0 0.0
        %3436 = vmatpush.msra.mxu0 0.0
        %3437 = vmatpush.msra.mxu0 0.0
        %3438 = vmatpush.msra.mxu0 0.0
        %3439 = vmatpush.msra.mxu0 0.0
        %3440 = vmatpush.msra.mxu0 0.0
        %3441 = vmatpush.msra.mxu0 0.0
        %3442 = vmatpush.msra.mxu0 0.0
        %3443 = vmatpush.msra.mxu0 %v2207
        %3444 = vmatmul.f32.gmra.mxu0 %v3426
        %v3445 = vpop.f32.mrf.mxu0
        %v3446 = vadd.f32 0.0, %v3445
        %3447 = vdwg.mxu0
        %v3449 = vsel %vm1023, %v3377, 0
        %3451 = vmatpush.msra.mxu0 0.0
        %3452 = vmatpush.msra.mxu0 0.0
        %3453 = vmatpush.msra.mxu0 0.0
        %3454 = vmatpush.msra.mxu0 0.0
        %3455 = vmatpush.msra.mxu0 0.0
        %3456 = vmatpush.msra.mxu0 0.0
        %3457 = vmatpush.msra.mxu0 0.0
        %3458 = vmatpush.msra.mxu0 0.0
        %3459 = vmatpush.msra.mxu0 0.0
        %3460 = vmatpush.msra.mxu0 0.0
        %3461 = vmatpush.msra.mxu0 0.0
        %3462 = vmatpush.msra.mxu0 0.0
        %3463 = vmatpush.msra.mxu0 0.0
        %3464 = vmatpush.msra.mxu0 0.0
        %3465 = vmatpush.msra.mxu0 0.0
        %3466 = vmatpush.msra.mxu0 %v2208
        %3467 = vmatmul.f32.gmra.mxu0 %v3449
        %v3468 = vpop.f32.mrf.mxu0
        %v3469 = vadd.f32 0.0, %v3468
        %3470 = vdwg.mxu0
        %v3471 = vsel %vm751, %v3400, 0.0
        %v3472 = vsel %vm751, %v3423, 0.0
        %v3473 = vadd.f32 %v3471, %v3472
        %v3474 = vsel %vm751, %v3446, 0.0
        %v3475 = vadd.f32 %v3473, %v3474
        %v3476 = vsel %vm751, %v3469, 0.0
        %v3477 = vadd.f32 %v3475, %v3476
        %v3478 = vadd.f32 %v3477, %v2867
        %v3479 = vadd.f32 %v2891, %v3478
        %3480 = vmatpush.msra.mxu0 0.0
        %3481 = vmatpush.msra.mxu0 0.0
        %3482 = vmatpush.msra.mxu0 0.0
        %3483 = vmatpush.msra.mxu0 0.0
        %3484 = vmatpush.msra.mxu0 0.0
        %3485 = vmatpush.msra.mxu0 0.0
        %3486 = vmatpush.msra.mxu0 0.0
        %3487 = vmatpush.msra.mxu0 0.0
        %3488 = vmatpush.msra.mxu0 0.0
        %3489 = vmatpush.msra.mxu0 0.0
        %3490 = vmatpush.msra.mxu0 0.0
        %3491 = vmatpush.msra.mxu0 0.0
        %3492 = vmatpush.msra.mxu0 0.0
        %3493 = vmatpush.msra.mxu0 0.0
        %3494 = vmatpush.msra.mxu0 0.0
        %3495 = vmatpush.msra.mxu0 %v3479
        %3496 = vmatmul.f32.gmra.mxu0 %v1369
        %v3497 = vpop.f32.mrf.mxu0
        %v3498 = vadd.f32 0.0, %v3497
        %3499 = vdwg.mxu0
        %v3500 = vsub.f32 %v3479, %v3498
        %v3502 = vperm.slane %v2217, 0
        %v3505 = vsel %vm751, %v3500, 0
        %3507 = vmatpush.msra.mxu0 0.0
        %3508 = vmatpush.msra.mxu0 0.0
        %3509 = vmatpush.msra.mxu0 0.0
        %3510 = vmatpush.msra.mxu0 0.0
        %3511 = vmatpush.msra.mxu0 0.0
        %3512 = vmatpush.msra.mxu0 0.0
        %3513 = vmatpush.msra.mxu0 0.0
        %3514 = vmatpush.msra.mxu0 0.0
        %3515 = vmatpush.msra.mxu0 0.0
        %3516 = vmatpush.msra.mxu0 0.0
        %3517 = vmatpush.msra.mxu0 0.0
        %3518 = vmatpush.msra.mxu0 0.0
        %3519 = vmatpush.msra.mxu0 %v2215
        %3520 = vmatpush.msra.mxu0 %v2214
        %3521 = vmatpush.msra.mxu0 %v2213
        %3522 = vmatpush.msra.mxu0 %v2212
        %3523 = vmatmul.f32.gmra.mxu0 %v3505
        %v3524 = vpop.f32.mrf.mxu0
        %v3525 = vadd.f32 %v3502, %v3524
        %3526 = vdwg.mxu0
        %v3527 = vmul.f32 %v3525, 0.5
        %v3528 = vmul.f32 %v3525, 0.044715
        %v3529 = vmul.f32 %v3528, %v3525
        %v3530 = vmul.f32 %v3529, %v3525
        %v3531 = vadd.f32 %v3525, %v3530
        %v3532 = vmul.f32 %v3531, 0.7978846
        %v3533 = vtanh.pop %v3532
        %v3534 = vadd.f32 %v3533, 1.0
        %v3535 = vmul.f32 %v3527, %v3534
        %v3537 = vsel %vm2039, %v3535, 0
        %3539 = vmatpush.msra.mxu0 0.0
        %3540 = vmatpush.msra.mxu0 0.0
        %3541 = vmatpush.msra.mxu0 0.0
        %3542 = vmatpush.msra.mxu0 0.0
        %3543 = vmatpush.msra.mxu0 0.0
        %3544 = vmatpush.msra.mxu0 0.0
        %3545 = vmatpush.msra.mxu0 0.0
        %3546 = vmatpush.msra.mxu0 0.0
        %3547 = vmatpush.msra.mxu0 %v2226
        %3548 = vmatpush.msra.mxu0 %v2225
        %3549 = vmatpush.msra.mxu0 %v2224
        %3550 = vmatpush.msra.mxu0 %v2223
        %3551 = vmatpush.msra.mxu0 %v2222
        %3552 = vmatpush.msra.mxu0 %v2221
        %3553 = vmatpush.msra.mxu0 %v2220
        %3554 = vmatpush.msra.mxu0 %v2219
        %3555 = vmatmul.f32.gmra.mxu0 %v3537
        %v3556 = vpop.f32.mrf.mxu0
        %v3557 = vadd.f32 0.0, %v3556
        %3558 = vdwg.mxu0
        %v3559 = vadd.f32 %v3500, %v3557
        %v3561 = vperm.slane %v2228, 0
        %v3563 = vadd.f32 %v3559, %v3561
        %3564 = vmatpush.msra.mxu0 0.0
        %3565 = vmatpush.msra.mxu0 0.0
        %3566 = vmatpush.msra.mxu0 0.0
        %3567 = vmatpush.msra.mxu0 0.0
        %3568 = vmatpush.msra.mxu0 0.0
        %3569 = vmatpush.msra.mxu0 0.0
        %3570 = vmatpush.msra.mxu0 0.0
        %3571 = vmatpush.msra.mxu0 0.0
        %3572 = vmatpush.msra.mxu0 0.0
        %3573 = vmatpush.msra.mxu0 0.0
        %3574 = vmatpush.msra.mxu0 0.0
        %3575 = vmatpush.msra.mxu0 0.0
        %3576 = vmatpush.msra.mxu0 0.0
        %3577 = vmatpush.msra.mxu0 0.0
        %3578 = vmatpush.msra.mxu0 0.0
        %3579 = vmatpush.msra.mxu0 %v3563
        %3580 = vmatmul.f32.gmra.mxu0 %v1369
        %v3581 = vpop.f32.mrf.mxu0
        %v3582 = vadd.f32 0.0, %v3581
        %3583 = vdwg.mxu0
        %v3584 = vsub.f32 %v3563, %v3582
        %v3585 = vadd.f32 %v2889, %v3498
        %v3586 = vadd.f32 %v3585, %v3582
        %v3588 = vrot.slane %v3586, 7
        %v3590 = vsel %vm2094, 0.0, %v3588
        %v3591 = vrot.slane %v3586, 1
        %v3593 = vsel %vm2098, %v3591, 0.0
        %3594 = vrot.lane.b32.xlu0 %v3586, 32
        %v3595 = vpop.permute.xlu0 %3594
        %3598 = vrot.lane.b32.xlu0 %v3593, 64
        %v3599 = vpop.permute.xlu0 %3598
        %v3601 = vsel %vm751, %v3590, %v3595
        %v3602 = vsel %vm2039, %v3601, %v3599
        %v3604 = vsel %vm2109, %v3602, 0
        %3606 = vmatpush.msra.mxu0 0.0
        %3607 = vmatpush.msra.mxu0 0.0
        %3608 = vmatpush.msra.mxu0 0.0
        %3609 = vmatpush.msra.mxu0 0.0
        %3610 = vmatpush.msra.mxu0 %v2241
        %3611 = vmatpush.msra.mxu0 %v2240
        %3612 = vmatpush.msra.mxu0 %v2239
        %3613 = vmatpush.msra.mxu0 %v2238
        %3614 = vmatpush.msra.mxu0 %v2237
        %3615 = vmatpush.msra.mxu0 %v2236
        %3616 = vmatpush.msra.mxu0 %v2235
        %3617 = vmatpush.msra.mxu0 %v2234
        %3618 = vmatpush.msra.mxu0 %v2233
        %3619 = vmatpush.msra.mxu0 %v2232
        %3620 = vmatpush.msra.mxu0 %v2231
        %3621 = vmatpush.msra.mxu0 %v2230
        %3622 = vmatmul.f32.gmra.mxu0 %v3604
        %v3623 = vpop.f32.mrf.mxu0
        %v3624 = vadd.f32 0.0, %v3623
        %3625 = vdwg.mxu0
        %v3626 = vadd.f32 %v2137, %v3624
        %v3628 = vperm.slane %v2243, 0
        %v3630 = vadd.f32 %v3626, %v3628
        %3631 = vst.msk [vmem:[%s623] sm:$0xff] %vm751, %v3584
        %vm3632 = vcmask 130048
        %3633 = vst.msk [vmem:[%s630] sm:$0xff] %vm3632, %v3630
        %s3634 = sand.u32 %s438, 1
        %s3635 = scalar_lea.sflag [#allocation3], %s3634
        %s3636 = sand.u32 %s438, 1
        %s3637 = smul.addr %s3636, 8
        %s3638 = scalar_lea.vmem [#allocation2], %s3637
        %s3639 = sand.u32 %s464, 1
        %s3640 = scalar_lea.sflag [#allocation5], %s3639
        %s3641 = sand.u32 %s464, 1
        %s3642 = smul.addr %s3641, 8
        %s3643 = scalar_lea.vmem [#allocation4], %s3642
        // Predicated region
        $region93: #{tpu_custom_call.1} parent=91 // pred_check
          %p3644 = pneg %p448
        $region94: #{tpu_custom_call.1} parent=91 // pred_check_branch
          %3646 = sbr.rel (%p3644) target = $region96
        $region95: #{tpu_custom_call.1} parent=91 // pred_region
          %3648 = vsyncadd %s3635, 0
          %s3649 = smul.addr %s37, 8
          %s3650 = scalar_lea.hbm %s18, %s3649
          %s3652 = sshll.u32 %s3638, 4
          %s3653 = int_to_ptr.vmem [resolvable:$true] %s3652
          %s3654 = sshll.u32 %s3650, 4
          %s3655 = int_to_ptr.hbm [resolvable:$true] %s3654
          %3657 = dma.vmem_to_hbm [thread:$0]  %s3653, 128, %s3655, %s3635
        $region96: #{tpu_custom_call.1} parent=91 // pred_fallthru
          _
        // Predicated region
        $region97: #{tpu_custom_call.1} parent=91 // pred_check
          %p3658 = pneg %p474
        $region98: #{tpu_custom_call.1} parent=91 // pred_check_branch
          %3660 = sbr.rel (%p3658) target = $region100
        $region99: #{tpu_custom_call.1} parent=91 // pred_region
          %3662 = vsyncadd %s3640, 0
          %s3663 = smul.addr %s37, 8
          %s3664 = scalar_lea.hbm %s19, %s3663
          %s3666 = sshll.u32 %s3643, 4
          %s3667 = int_to_ptr.vmem [resolvable:$true] %s3666
          %s3668 = sshll.u32 %s3664, 4
          %s3669 = int_to_ptr.hbm [resolvable:$true] %s3668
          %3671 = dma.vmem_to_hbm [thread:$0]  %s3667, 128, %s3669, %s3640
        $region100: #{tpu_custom_call.1} parent=91 // pred_fallthru
          _
      $region92: #{tpu_custom_call.1} parent=5 // pred_fallthru
        _
      %p3672 = scmp.le.s32.totalorder 2, %s32
      // Predicated region
      $region101: #{tpu_custom_call.1} parent=5 // pred_check
        %p3673 = pneg %p3672
      $region102: #{tpu_custom_call.1} parent=5 // pred_check_branch
        %3675 = sbr.rel (%p3673) target = $region104
      $region103: #{tpu_custom_call.1} parent=5 // pred_region
        %s3676 = ssub.s32 %s32, 2
        // Predicated region
        $region105: #{tpu_custom_call.1} parent=103 // pred_check
          %p3677 = pneg %p454
        $region106: #{tpu_custom_call.1} parent=103 // pred_check_branch
          %3679 = sbr.rel (%p3677) target = $region108
        $region107: #{tpu_custom_call.1} parent=103 // pred_region
          %s3680 = sand.u32 %s439, 1
          %s3681 = scalar_lea.sflag [#allocation3], %s3680
          %s3682 = sand.u32 %s439, 1
          %s3683 = smul.addr %s3682, 8
          %s3684 = scalar_lea.vmem [#allocation2], %s3683
          %3686 = dma.done %s3681, 128
        $region108: #{tpu_custom_call.1} parent=103 // pred_fallthru
          _
        // Predicated region
        $region109: #{tpu_custom_call.1} parent=103 // pred_check
          %p3687 = pneg %p480
        $region110: #{tpu_custom_call.1} parent=103 // pred_check_branch
          %3689 = sbr.rel (%p3687) target = $region112
        $region111: #{tpu_custom_call.1} parent=103 // pred_region
          %s3690 = sand.u32 %s465, 1
          %s3691 = scalar_lea.sflag [#allocation5], %s3690
          %s3692 = sand.u32 %s465, 1
          %s3693 = smul.addr %s3692, 8
          %s3694 = scalar_lea.vmem [#allocation4], %s3693
          %3696 = dma.done %s3691, 128
        $region112: #{tpu_custom_call.1} parent=103 // pred_fallthru
          _
      $region104: #{tpu_custom_call.1} parent=5 // pred_fallthru
        _
    $region6: #{tpu_custom_call.1} parent=1 // loop_footer
      %s36 = sadd.s32 1, %s32
    $region7: #{tpu_custom_call.1} parent=1 // loop_footer_branch
      %31 = sbr.rel target = $region3
    $region8: #{tpu_custom_call.1} parent=1 // loop_exit
      _
    %3697 = vsyncpa [#allocation3], 1
    %s3698 = scalar_lea.sflag [#allocation3], 1
    %3699 = vsyncpa %s3698, 1
    %3700 = vsyncpa [#allocation5], 1
    %s3701 = scalar_lea.sflag [#allocation5], 1
    %3702 = vsyncpa %s3701, 1

</llo_original>
